<compile_context>
chip_gen: v5e
topology: v5e:2x2
jax: 0.10.0
libtpu: 0.0.40
codegen_flags: <defaults>
</compile_context>

<pallas_src>
import functools

import numpy as np

import jax
import jax.numpy as jnp
from jax import lax
from jax.experimental import pallas as pl
from jax.experimental.pallas import tpu as pltpu


# Use the XLU rotate primitive only when the kernel is compiled by Mosaic on a
# real TPU backend; fall back to a two-slice concat on interpret/CPU backends.
_USE_TPU_ROLL = jax.default_backend() == "tpu"


# ----------------------------- static glue (numpy) -------------------------- #

def _bilinear_matrix_np(in_size, out_size):
    """PyTorch bilinear (align_corners=False) 1-D interpolation matrix."""
    scale = in_size / out_size
    i = np.arange(out_size, dtype=np.float64)
    src = np.maximum((i + 0.5) * scale - 0.5, 0.0)
    i0 = np.minimum(np.floor(src).astype(np.int64), in_size - 1)
    i1 = np.minimum(i0 + 1, in_size - 1)
    l1 = src - i0
    l0 = 1.0 - l1
    a = np.zeros((out_size, in_size), np.float64)
    a[np.arange(out_size), i0] += l0
    a[np.arange(out_size), i1] += l1
    return a.astype(np.float32)


def _dilation_matrix_np(hi, wi):
    """(hi*wi, 2hi*2wi) placement matrix: input (ih,iw) -> output (2ih,2iw)."""
    ho, wo = 2 * hi, 2 * wi
    d = np.zeros((hi * wi, ho * wo), np.float32)
    for ih in range(hi):
        for iw in range(wi):
            d[ih * wi + iw, (2 * ih) * wo + 2 * iw] = 1.0
    return d


def _ohow_rows_np(batch, h, w):
    """(2, batch*h*w) int32: per-lane (oh, ow) coordinates, batch-tiled."""
    oh = np.repeat(np.arange(h, dtype=np.int32), w)
    ow = np.tile(np.arange(w, dtype=np.int32), h)
    return np.stack([np.tile(oh, batch), np.tile(ow, batch)], axis=0)


# ------------------------------ Pallas kernel ------------------------------- #

def _roll_lanes(v, shift):
    """jnp.roll semantics on the lane axis: out[:, i] = v[:, (i - shift) % L]."""
    length = v.shape[-1]
    s = shift % length
    if s == 0:
        return v
    if _USE_TPU_ROLL:
        return pltpu.roll(v, shift=s, axis=1)          # XLU rotate slot
    return jnp.concatenate([v[:, length - s:], v[:, :length - s]], axis=-1)


def _make_fused_kernel(batch, n_ch, h1, w1, h2, w2):
    q1 = batch * h1 * w1
    q2 = batch * h2 * w2
    deconv_offs = [(2 - kh, 2 - kw) for kh in range(5) for kw in range(5)]
    conv_offs = [(kh - 1, kw - 1) for kh in range(3) for kw in range(3)]

    def kernel(x_ref,
               d1_ref, idx1_ref, w1_ref, b1_ref,
               d2_ref, idx2_ref, w2_ref, b2_ref,
               w3_ref, b3_ref,
               r_ref, o_ref, xcols_ref):

        def conv_taps(u, idx_ref, offsets, hh, ww, width, w_ref, b_ref):
            """u: (Cin, width) activations on an (hh, ww) grid, batch in lanes.
            Returns relu(W @ xcols + b): (Cout, width)."""
            ci = u.shape[0]
            oh = idx_ref[0:1, :]                       # (1, width) int32
            ow = idx_ref[1:2, :]
            for t, (sh, sw) in enumerate(offsets):
                if sh == 0 and sw == 0:
                    piece = u                          # identity tap: no roll/mask
                else:
                    piece = _roll_lanes(u, -(sh * ww + sw))
                    conds = []
                    if sh > 0:
                        conds.append(oh < hh - sh)
                    elif sh < 0:
                        conds.append(oh >= -sh)
                    if sw > 0:
                        conds.append(ow < ww - sw)
                    elif sw < 0:
                        conds.append(ow >= -sw)
                    m = conds[0]
                    for c in conds[1:]:
                        m = m & c
                    piece = jnp.where(m, piece, 0.0)
                # scatter tap directly into the staging scratch (bounds liveness)
                xcols_ref[t * ci:(t + 1) * ci, 0:width] = piece
            k = len(offsets) * ci
            acc = jnp.dot(w_ref[...], xcols_ref[0:k, 0:width],
                          preferred_element_type=jnp.float32)
            return jnp.maximum(acc + b_ref[...], 0.0)

        act = x_ref[...]                                              # (N, B*h0*w0)
        # deconv1: stride-2 zero-dilation as a tiny placement matmul, then 5x5 taps
        u = jnp.dot(act, d1_ref[...], preferred_element_type=jnp.float32)
        act = conv_taps(u, idx1_ref, deconv_offs, h1, w1, q1, w1_ref, b1_ref)
        # deconv2
        u = jnp.dot(act, d2_ref[...], preferred_element_type=jnp.float32)
        act = conv_taps(u, idx2_ref, deconv_offs, h2, w2, q2, w2_ref, b2_ref)
        # conv 3x3 stride 1
        act = conv_taps(act, idx2_ref, conv_offs, h2, w2, q2, w3_ref, b3_ref)
        # bilinear resize: one lane-dense right-matmul (per-image lane-padded)
        o_ref[...] = jnp.dot(act, r_ref[...], preferred_element_type=jnp.float32)

    return kernel


# --------------------------------- wrapper ---------------------------------- #

def hyperpriori_decoder_forward(x_nchw, params, feather_shape):
    batch, n_ch, h0, w0 = x_nchw.shape
    m_ch = params["w3"].shape[0]
    h1, w1 = 2 * h0, 2 * w0
    h2, w2 = 2 * h1, 2 * w1
    ho, wo = int(feather_shape[1]), int(feather_shape[2])
    q_out = ho * wo
    q_pad = ((q_out + 127) // 128) * 128       # lane-dense per-image output width
    f32 = jnp.float32
    eye_b = np.eye(batch, dtype=np.float32)

    # static spatial operators (numpy -> constants folded at trace time)
    d1 = np.kron(eye_b, _dilation_matrix_np(h0, w0))       # (B*h0*w0, B*h1*w1)
    d2 = np.kron(eye_b, _dilation_matrix_np(h1, w1))       # (B*h1*w1, B*h2*w2)
    idx1 = _ohow_rows_np(batch, h1, w1)
    idx2 = _ohow_rows_np(batch, h2, w2)
    r_img = np.kron(_bilinear_matrix_np(h2, ho), _bilinear_matrix_np(w2, wo)).T
    r_img = np.pad(r_img, ((0, 0), (0, q_pad - q_out)))     # (h2*w2, q_pad)
    rmat = np.kron(eye_b, r_img).astype(np.float32)         # (B*h2*w2, B*q_pad)

    # weights as (Cout, taps*Cin) f32 matmul operands; biases (Cout, 1) f32
    wm1 = jnp.transpose(params["w1"], (2, 3, 0, 1)).reshape(25 * n_ch, n_ch).T.astype(f32)
    wm2 = jnp.transpose(params["w2"], (2, 3, 0, 1)).reshape(25 * n_ch, n_ch).T.astype(f32)
    wm3 = jnp.transpose(params["w3"], (2, 3, 1, 0)).reshape(9 * n_ch, m_ch).T.astype(f32)
    bb1 = params["b1"].reshape(n_ch, 1).astype(f32)
    bb2 = params["b2"].reshape(n_ch, 1).astype(f32)
    bb3 = params["b3"].reshape(m_ch, 1).astype(f32)

    # rows = channels (sublanes), lanes = batch*H*W (lane-dense, batch folded in)
    x2d = jnp.transpose(x_nchw, (1, 0, 2, 3)).reshape(n_ch, batch * h0 * w0).astype(f32)

    kernel = _make_fused_kernel(batch, n_ch, h1, w1, h2, w2)
    vmem = pl.BlockSpec(memory_space=pltpu.MemorySpace.VMEM)
    # TODO(synk): add a leading parallel grid axis (batch/channel group) for
    #             v7x's second TensorCore once per-core work exceeds grid overhead.
    out = pl.pallas_call(
        kernel,
        out_shape=jax.ShapeDtypeStruct((m_ch, batch * q_pad), f32),
        in_specs=[vmem] * 12,
        out_specs=vmem,
        scratch_shapes=[pltpu.VMEM((25 * n_ch, batch * h2 * w2), f32)],
    )(x2d,
      jnp.asarray(d1), jnp.asarray(idx1), wm1, bb1,
      jnp.asarray(d2), jnp.asarray(idx2), wm2, bb2,
      wm3, bb3,
      jnp.asarray(rmat))

    out = out.reshape(m_ch, batch, q_pad)[:, :, :q_out].reshape(m_ch, batch, ho, wo)
    return jnp.transpose(out, (1, 0, 2, 3))


# ----------------------------- XLA reference -------------------------------- #

def _reference_forward(x, params, feather_shape):
    hp = lax.Precision.HIGHEST

    def deconv_ref(x, wt, b):
        w = jnp.transpose(wt, (1, 0, 2, 3))[:, :, ::-1, ::-1]
        y = lax.conv_general_dilated(
            x, w, window_strides=(1, 1), padding=((2, 3), (2, 3)),
            lhs_dilation=(2, 2), rhs_dilation=(1, 1),
            dimension_numbers=("NCHW", "OIHW", "NCHW"), precision=hp)
        return jnp.maximum(y + b[None, :, None, None], 0.0)

    def conv_ref(x, w, b):
        y = lax.conv_general_dilated(
            x, w, window_strides=(1, 1), padding=((1, 1), (1, 1)),
            dimension_numbers=("NCHW", "OIHW", "NCHW"), precision=hp)
        return jnp.maximum(y + b[None, :, None, None], 0.0)

    y = deconv_ref(x, params["w1"], params["b1"])
    y = deconv_ref(y, params["w2"], params["b2"])
    y = conv_ref(y, params["w3"], params["b3"])
    ah = jnp.asarray(_bilinear_matrix_np(y.shape[2], int(feather_shape[1])))
    aw = jnp.asarray(_bilinear_matrix_np(y.shape[3], int(feather_shape[2])))
    return jnp.einsum("oh,bchw,pw->bcop", ah, y, aw, precision=hp)


# ----------------------------------- main ------------------------------------ #

if __name__ == "__main__":
    batch = 2
    out_channel_n = 8     # N
    out_channel_m = 16    # M
    h_in = w_in = 4
    feather_shape = (out_channel_m, 20, 20)   # forward uses [1], [2] as target H, W

    key = jax.random.PRNGKey(0)
    kx, k1, k2, k3, k4, k5, k6 = jax.random.split(key, 7)
    params = {
        # ConvTranspose2d weight layout: (Cin, Cout, K, K)
        "w1": jax.random.normal(k1, (out_channel_n, out_channel_n, 5, 5), jnp.float32) * 0.05,
        "b1": jax.random.normal(k2, (out_channel_n,), jnp.float32) * 0.05,
        "w2": jax.random.normal(k3, (out_channel_n, out_channel_n, 5, 5), jnp.float32) * 0.05,
        "b2": jax.random.normal(k4, (out_channel_n,), jnp.float32) * 0.05,
        # Conv2d weight layout: (Cout, Cin, K, K)
        "w3": jax.random.normal(k5, (out_channel_m, out_channel_n, 3, 3), jnp.float32) * 0.05,
        "b3": jax.random.normal(k6, (out_channel_m,), jnp.float32) * 0.05,
    }
    x = jax.random.normal(kx, (batch, out_channel_n, h_in, w_in), jnp.float32)  # NCHW

    fwd = jax.jit(functools.partial(hyperpriori_decoder_forward,
                                    feather_shape=feather_shape))
    y = jax.block_until_ready(fwd(x, params))

    assert y.shape == (batch, out_channel_m, feather_shape[1], feather_shape[2]), y.shape
    assert bool(jnp.all(jnp.isfinite(y)))

    # Numerical check vs. pure-XLA reference; batch=2 exercises the lane-roll
    # batch-seam masking.  Tolerance is loose enough for TPU MXU f32 passes.
    y_ref = jax.block_until_ready(_reference_forward(x, params, feather_shape))
    err = float(jnp.max(jnp.abs(y - y_ref)))
    assert err < 2e-2, f"mismatch vs reference: max abs err = {err}"

    print("KERNEL_OK")
</pallas_src>

<mosaic_0001>
module attributes {stable_mosaic.version = 11 : i64} {
  func.func @kernel(%arg0: memref<8x32xf32, #tpu.memory_space<vmem>>, %arg1: memref<32x128xf32, #tpu.memory_space<vmem>>, %arg2: memref<2x128xi32, #tpu.memory_space<vmem>>, %arg3: memref<8x200xf32, #tpu.memory_space<vmem>>, %arg4: memref<8x1xf32, #tpu.memory_space<vmem>>, %arg5: memref<128x512xf32, #tpu.memory_space<vmem>>, %arg6: memref<2x512xi32, #tpu.memory_space<vmem>>, %arg7: memref<8x200xf32, #tpu.memory_space<vmem>>, %arg8: memref<8x1xf32, #tpu.memory_space<vmem>>, %arg9: memref<16x72xf32, #tpu.memory_space<vmem>>, %arg10: memref<16x1xf32, #tpu.memory_space<vmem>>, %arg11: memref<512x1024xf32, #tpu.memory_space<vmem>>, %arg12: memref<16x1024xf32, #tpu.memory_space<vmem>>, %arg13: memref<200x512xf32, #tpu.memory_space<vmem>>) attributes {dimension_semantics = [], scalar_prefetch = 0 : i64, scratch_operands = 1 : i64, tpu.core_type = #tpu.core_type<tc>} {
    %c0 = arith.constant 0 : index
    %c0_0 = arith.constant 0 : index
    %0 = vector.load %arg0[%c0, %c0_0] : memref<8x32xf32, #tpu.memory_space<vmem>>, vector<8x32xf32>
    %c0_1 = arith.constant 0 : index
    %c0_2 = arith.constant 0 : index
    %1 = vector.load %arg1[%c0_1, %c0_2] : memref<32x128xf32, #tpu.memory_space<vmem>>, vector<32x128xf32>
    %cst = arith.constant dense<0.000000e+00> : vector<8x128xf32>
    %2 = tpu.matmul %0, %1, %cst {dimension_numbers = #tpu.dot_dimension_numbers<[1], [0], [0], [1], [0, 0, 1, 1], [], []>} : vector<8x32xf32>, vector<32x128xf32>, vector<8x128xf32> -> vector<8x128xf32>
    %c0_3 = arith.constant 0 : index
    %c0_4 = arith.constant 0 : index
    %3 = vector.load %arg2[%c0_3, %c0_4] : memref<2x128xi32, #tpu.memory_space<vmem>>, vector<1x128xi32>
    %c1 = arith.constant 1 : index
    %c0_5 = arith.constant 0 : index
    %4 = vector.load %arg2[%c1, %c0_5] : memref<2x128xi32, #tpu.memory_space<vmem>>, vector<1x128xi32>
    %5 = vector.extract_strided_slice %2 {offsets = [0, 18], sizes = [8, 110], strides = [1, 1]} : vector<8x128xf32> to vector<8x110xf32>
    %6 = vector.extract_strided_slice %2 {offsets = [0, 0], sizes = [8, 18], strides = [1, 1]} : vector<8x128xf32> to vector<8x18xf32>
    %7 = tpu.concatenate %5, %6 in 1 : vector<8x110xf32>, vector<8x18xf32> -> vector<8x128xf32>
    %c6_i32 = arith.constant 6 : i32
    %8 = vector.broadcast %c6_i32 : i32 to vector<1x128xi32>
    %9 = arith.cmpi slt, %3, %8 : vector<1x128xi32>
    %c6_i32_6 = arith.constant 6 : i32
    %10 = vector.broadcast %c6_i32_6 : i32 to vector<1x128xi32>
    %11 = arith.cmpi slt, %4, %10 : vector<1x128xi32>
    %12 = arith.andi %9, %11 : vector<1x128xi1>
    %cst_7 = arith.constant 0.000000e+00 : f32
    %13 = vector.shape_cast %12 : vector<1x128xi1> to vector<1x128xi1>
    %14 = vector.broadcast %13 : vector<1x128xi1> to vector<8x128xi1>
    %15 = vector.broadcast %cst_7 : f32 to vector<8x128xf32>
    %16 = arith.select %14, %7, %15 : vector<8x128xi1>, vector<8x128xf32>
    %c0_8 = arith.constant 0 : index
    %c0_9 = arith.constant 0 : index
    %17 = vector.load %arg13[%c0_8, %c0_9] : memref<200x512xf32, #tpu.memory_space<vmem>>, vector<8x128xf32>
    tpu.vector_store %arg13[%c0_8, %c0_9], %16 {strides = array<i32>} : memref<200x512xf32, #tpu.memory_space<vmem>>, vector<8x128xf32>,
    %18 = vector.extract_strided_slice %2 {offsets = [0, 17], sizes = [8, 111], strides = [1, 1]} : vector<8x128xf32> to vector<8x111xf32>
    %19 = vector.extract_strided_slice %2 {offsets = [0, 0], sizes = [8, 17], strides = [1, 1]} : vector<8x128xf32> to vector<8x17xf32>
    %20 = tpu.concatenate %18, %19 in 1 : vector<8x111xf32>, vector<8x17xf32> -> vector<8x128xf32>
    %c6_i32_10 = arith.constant 6 : i32
    %21 = vector.broadcast %c6_i32_10 : i32 to vector<1x128xi32>
    %22 = arith.cmpi slt, %3, %21 : vector<1x128xi32>
    %c7_i32 = arith.constant 7 : i32
    %23 = vector.broadcast %c7_i32 : i32 to vector<1x128xi32>
    %24 = arith.cmpi slt, %4, %23 : vector<1x128xi32>
    %25 = arith.andi %22, %24 : vector<1x128xi1>
    %cst_11 = arith.constant 0.000000e+00 : f32
    %26 = vector.shape_cast %25 : vector<1x128xi1> to vector<1x128xi1>
    %27 = vector.broadcast %26 : vector<1x128xi1> to vector<8x128xi1>
    %28 = vector.broadcast %cst_11 : f32 to vector<8x128xf32>
    %29 = arith.select %27, %20, %28 : vector<8x128xi1>, vector<8x128xf32>
    %c8 = arith.constant 8 : index
    %c0_12 = arith.constant 0 : index
    %30 = vector.load %arg13[%c8, %c0_12] : memref<200x512xf32, #tpu.memory_space<vmem>>, vector<8x128xf32>
    tpu.vector_store %arg13[%c8, %c0_12], %29 {strides = array<i32>} : memref<200x512xf32, #tpu.memory_space<vmem>>, vector<8x128xf32>,
    %31 = vector.extract_strided_slice %2 {offsets = [0, 16], sizes = [8, 112], strides = [1, 1]} : vector<8x128xf32> to vector<8x112xf32>
    %32 = vector.extract_strided_slice %2 {offsets = [0, 0], sizes = [8, 16], strides = [1, 1]} : vector<8x128xf32> to vector<8x16xf32>
    %33 = tpu.concatenate %31, %32 in 1 : vector<8x112xf32>, vector<8x16xf32> -> vector<8x128xf32>
    %c6_i32_13 = arith.constant 6 : i32
    %34 = vector.broadcast %c6_i32_13 : i32 to vector<1x128xi32>
    %35 = arith.cmpi slt, %3, %34 : vector<1x128xi32>
    %cst_14 = arith.constant 0.000000e+00 : f32
    %36 = vector.shape_cast %35 : vector<1x128xi1> to vector<1x128xi1>
    %37 = vector.broadcast %36 : vector<1x128xi1> to vector<8x128xi1>
    %38 = vector.broadcast %cst_14 : f32 to vector<8x128xf32>
    %39 = arith.select %37, %33, %38 : vector<8x128xi1>, vector<8x128xf32>
    %c16 = arith.constant 16 : index
    %c0_15 = arith.constant 0 : index
    %40 = vector.load %arg13[%c16, %c0_15] : memref<200x512xf32, #tpu.memory_space<vmem>>, vector<8x128xf32>
    tpu.vector_store %arg13[%c16, %c0_15], %39 {strides = array<i32>} : memref<200x512xf32, #tpu.memory_space<vmem>>, vector<8x128xf32>,
    %41 = vector.extract_strided_slice %2 {offsets = [0, 15], sizes = [8, 113], strides = [1, 1]} : vector<8x128xf32> to vector<8x113xf32>
    %42 = vector.extract_strided_slice %2 {offsets = [0, 0], sizes = [8, 15], strides = [1, 1]} : vector<8x128xf32> to vector<8x15xf32>
    %43 = tpu.concatenate %41, %42 in 1 : vector<8x113xf32>, vector<8x15xf32> -> vector<8x128xf32>
    %c6_i32_16 = arith.constant 6 : i32
    %44 = vector.broadcast %c6_i32_16 : i32 to vector<1x128xi32>
    %45 = arith.cmpi slt, %3, %44 : vector<1x128xi32>
    %c1_i32 = arith.constant 1 : i32
    %46 = vector.broadcast %c1_i32 : i32 to vector<1x128xi32>
    %47 = arith.cmpi sge, %4, %46 : vector<1x128xi32>
    %48 = arith.andi %45, %47 : vector<1x128xi1>
    %cst_17 = arith.constant 0.000000e+00 : f32
    %49 = vector.shape_cast %48 : vector<1x128xi1> to vector<1x128xi1>
    %50 = vector.broadcast %49 : vector<1x128xi1> to vector<8x128xi1>
    %51 = vector.broadcast %cst_17 : f32 to vector<8x128xf32>
    %52 = arith.select %50, %43, %51 : vector<8x128xi1>, vector<8x128xf32>
    %c24 = arith.constant 24 : index
    %c0_18 = arith.constant 0 : index
    %53 = vector.load %arg13[%c24, %c0_18] : memref<200x512xf32, #tpu.memory_space<vmem>>, vector<8x128xf32>
    tpu.vector_store %arg13[%c24, %c0_18], %52 {strides = array<i32>} : memref<200x512xf32, #tpu.memory_space<vmem>>, vector<8x128xf32>,
    %54 = vector.extract_strided_slice %2 {offsets = [0, 14], sizes = [8, 114], strides = [1, 1]} : vector<8x128xf32> to vector<8x114xf32>
    %55 = vector.extract_strided_slice %2 {offsets = [0, 0], sizes = [8, 14], strides = [1, 1]} : vector<8x128xf32> to vector<8x14xf32>
    %56 = tpu.concatenate %54, %55 in 1 : vector<8x114xf32>, vector<8x14xf32> -> vector<8x128xf32>
    %c6_i32_19 = arith.constant 6 : i32
    %57 = vector.broadcast %c6_i32_19 : i32 to vector<1x128xi32>
    %58 = arith.cmpi slt, %3, %57 : vector<1x128xi32>
    %c2_i32 = arith.constant 2 : i32
    %59 = vector.broadcast %c2_i32 : i32 to vector<1x128xi32>
    %60 = arith.cmpi sge, %4, %59 : vector<1x128xi32>
    %61 = arith.andi %58, %60 : vector<1x128xi1>
    %cst_20 = arith.constant 0.000000e+00 : f32
    %62 = vector.shape_cast %61 : vector<1x128xi1> to vector<1x128xi1>
    %63 = vector.broadcast %62 : vector<1x128xi1> to vector<8x128xi1>
    %64 = vector.broadcast %cst_20 : f32 to vector<8x128xf32>
    %65 = arith.select %63, %56, %64 : vector<8x128xi1>, vector<8x128xf32>
    %c32 = arith.constant 32 : index
    %c0_21 = arith.constant 0 : index
    %66 = vector.load %arg13[%c32, %c0_21] : memref<200x512xf32, #tpu.memory_space<vmem>>, vector<8x128xf32>
    tpu.vector_store %arg13[%c32, %c0_21], %65 {strides = array<i32>} : memref<200x512xf32, #tpu.memory_space<vmem>>, vector<8x128xf32>,
    %67 = vector.extract_strided_slice %2 {offsets = [0, 10], sizes = [8, 118], strides = [1, 1]} : vector<8x128xf32> to vector<8x118xf32>
    %68 = vector.extract_strided_slice %2 {offsets = [0, 0], sizes = [8, 10], strides = [1, 1]} : vector<8x128xf32> to vector<8x10xf32>
    %69 = tpu.concatenate %67, %68 in 1 : vector<8x118xf32>, vector<8x10xf32> -> vector<8x128xf32>
    %c7_i32_22 = arith.constant 7 : i32
    %70 = vector.broadcast %c7_i32_22 : i32 to vector<1x128xi32>
    %71 = arith.cmpi slt, %3, %70 : vector<1x128xi32>
    %c6_i32_23 = arith.constant 6 : i32
    %72 = vector.broadcast %c6_i32_23 : i32 to vector<1x128xi32>
    %73 = arith.cmpi slt, %4, %72 : vector<1x128xi32>
    %74 = arith.andi %71, %73 : vector<1x128xi1>
    %cst_24 = arith.constant 0.000000e+00 : f32
    %75 = vector.shape_cast %74 : vector<1x128xi1> to vector<1x128xi1>
    %76 = vector.broadcast %75 : vector<1x128xi1> to vector<8x128xi1>
    %77 = vector.broadcast %cst_24 : f32 to vector<8x128xf32>
    %78 = arith.select %76, %69, %77 : vector<8x128xi1>, vector<8x128xf32>
    %c40 = arith.constant 40 : index
    %c0_25 = arith.constant 0 : index
    %79 = vector.load %arg13[%c40, %c0_25] : memref<200x512xf32, #tpu.memory_space<vmem>>, vector<8x128xf32>
    tpu.vector_store %arg13[%c40, %c0_25], %78 {strides = array<i32>} : memref<200x512xf32, #tpu.memory_space<vmem>>, vector<8x128xf32>,
    %80 = vector.extract_strided_slice %2 {offsets = [0, 9], sizes = [8, 119], strides = [1, 1]} : vector<8x128xf32> to vector<8x119xf32>
    %81 = vector.extract_strided_slice %2 {offsets = [0, 0], sizes = [8, 9], strides = [1, 1]} : vector<8x128xf32> to vector<8x9xf32>
    %82 = tpu.concatenate %80, %81 in 1 : vector<8x119xf32>, vector<8x9xf32> -> vector<8x128xf32>
    %c7_i32_26 = arith.constant 7 : i32
    %83 = vector.broadcast %c7_i32_26 : i32 to vector<1x128xi32>
    %84 = arith.cmpi slt, %3, %83 : vector<1x128xi32>
    %c7_i32_27 = arith.constant 7 : i32
    %85 = vector.broadcast %c7_i32_27 : i32 to vector<1x128xi32>
    %86 = arith.cmpi slt, %4, %85 : vector<1x128xi32>
    %87 = arith.andi %84, %86 : vector<1x128xi1>
    %cst_28 = arith.constant 0.000000e+00 : f32
    %88 = vector.shape_cast %87 : vector<1x128xi1> to vector<1x128xi1>
    %89 = vector.broadcast %88 : vector<1x128xi1> to vector<8x128xi1>
    %90 = vector.broadcast %cst_28 : f32 to vector<8x128xf32>
    %91 = arith.select %89, %82, %90 : vector<8x128xi1>, vector<8x128xf32>
    %c48 = arith.constant 48 : index
    %c0_29 = arith.constant 0 : index
    %92 = vector.load %arg13[%c48, %c0_29] : memref<200x512xf32, #tpu.memory_space<vmem>>, vector<8x128xf32>
    tpu.vector_store %arg13[%c48, %c0_29], %91 {strides = array<i32>} : memref<200x512xf32, #tpu.memory_space<vmem>>, vector<8x128xf32>,
    %93 = vector.extract_strided_slice %2 {offsets = [0, 8], sizes = [8, 120], strides = [1, 1]} : vector<8x128xf32> to vector<8x120xf32>
    %94 = vector.extract_strided_slice %2 {offsets = [0, 0], sizes = [8, 8], strides = [1, 1]} : vector<8x128xf32> to vector<8x8xf32>
    %95 = tpu.concatenate %93, %94 in 1 : vector<8x120xf32>, vector<8x8xf32> -> vector<8x128xf32>
    %c7_i32_30 = arith.constant 7 : i32
    %96 = vector.broadcast %c7_i32_30 : i32 to vector<1x128xi32>
    %97 = arith.cmpi slt, %3, %96 : vector<1x128xi32>
    %cst_31 = arith.constant 0.000000e+00 : f32
    %98 = vector.shape_cast %97 : vector<1x128xi1> to vector<1x128xi1>
    %99 = vector.broadcast %98 : vector<1x128xi1> to vector<8x128xi1>
    %100 = vector.broadcast %cst_31 : f32 to vector<8x128xf32>
    %101 = arith.select %99, %95, %100 : vector<8x128xi1>, vector<8x128xf32>
    %c56 = arith.constant 56 : index
    %c0_32 = arith.constant 0 : index
    %102 = vector.load %arg13[%c56, %c0_32] : memref<200x512xf32, #tpu.memory_space<vmem>>, vector<8x128xf32>
    tpu.vector_store %arg13[%c56, %c0_32], %101 {strides = array<i32>} : memref<200x512xf32, #tpu.memory_space<vmem>>, vector<8x128xf32>,
    %103 = vector.extract_strided_slice %2 {offsets = [0, 7], sizes = [8, 121], strides = [1, 1]} : vector<8x128xf32> to vector<8x121xf32>
    %104 = vector.extract_strided_slice %2 {offsets = [0, 0], sizes = [8, 7], strides = [1, 1]} : vector<8x128xf32> to vector<8x7xf32>
    %105 = tpu.concatenate %103, %104 in 1 : vector<8x121xf32>, vector<8x7xf32> -> vector<8x128xf32>
    %c7_i32_33 = arith.constant 7 : i32
    %106 = vector.broadcast %c7_i32_33 : i32 to vector<1x128xi32>
    %107 = arith.cmpi slt, %3, %106 : vector<1x128xi32>
    %c1_i32_34 = arith.constant 1 : i32
    %108 = vector.broadcast %c1_i32_34 : i32 to vector<1x128xi32>
    %109 = arith.cmpi sge, %4, %108 : vector<1x128xi32>
    %110 = arith.andi %107, %109 : vector<1x128xi1>
    %cst_35 = arith.constant 0.000000e+00 : f32
    %111 = vector.shape_cast %110 : vector<1x128xi1> to vector<1x128xi1>
    %112 = vector.broadcast %111 : vector<1x128xi1> to vector<8x128xi1>
    %113 = vector.broadcast %cst_35 : f32 to vector<8x128xf32>
    %114 = arith.select %112, %105, %113 : vector<8x128xi1>, vector<8x128xf32>
    %c64 = arith.constant 64 : index
    %c0_36 = arith.constant 0 : index
    %115 = vector.load %arg13[%c64, %c0_36] : memref<200x512xf32, #tpu.memory_space<vmem>>, vector<8x128xf32>
    tpu.vector_store %arg13[%c64, %c0_36], %114 {strides = array<i32>} : memref<200x512xf32, #tpu.memory_space<vmem>>, vector<8x128xf32>,
    %116 = vector.extract_strided_slice %2 {offsets = [0, 6], sizes = [8, 122], strides = [1, 1]} : vector<8x128xf32> to vector<8x122xf32>
    %117 = vector.extract_strided_slice %2 {offsets = [0, 0], sizes = [8, 6], strides = [1, 1]} : vector<8x128xf32> to vector<8x6xf32>
    %118 = tpu.concatenate %116, %117 in 1 : vector<8x122xf32>, vector<8x6xf32> -> vector<8x128xf32>
    %c7_i32_37 = arith.constant 7 : i32
    %119 = vector.broadcast %c7_i32_37 : i32 to vector<1x128xi32>
    %120 = arith.cmpi slt, %3, %119 : vector<1x128xi32>
    %c2_i32_38 = arith.constant 2 : i32
    %121 = vector.broadcast %c2_i32_38 : i32 to vector<1x128xi32>
    %122 = arith.cmpi sge, %4, %121 : vector<1x128xi32>
    %123 = arith.andi %120, %122 : vector<1x128xi1>
    %cst_39 = arith.constant 0.000000e+00 : f32
    %124 = vector.shape_cast %123 : vector<1x128xi1> to vector<1x128xi1>
    %125 = vector.broadcast %124 : vector<1x128xi1> to vector<8x128xi1>
    %126 = vector.broadcast %cst_39 : f32 to vector<8x128xf32>
    %127 = arith.select %125, %118, %126 : vector<8x128xi1>, vector<8x128xf32>
    %c72 = arith.constant 72 : index
    %c0_40 = arith.constant 0 : index
    %128 = vector.load %arg13[%c72, %c0_40] : memref<200x512xf32, #tpu.memory_space<vmem>>, vector<8x128xf32>
    tpu.vector_store %arg13[%c72, %c0_40], %127 {strides = array<i32>} : memref<200x512xf32, #tpu.memory_space<vmem>>, vector<8x128xf32>,
    %129 = vector.extract_strided_slice %2 {offsets = [0, 2], sizes = [8, 126], strides = [1, 1]} : vector<8x128xf32> to vector<8x126xf32>
    %130 = vector.extract_strided_slice %2 {offsets = [0, 0], sizes = [8, 2], strides = [1, 1]} : vector<8x128xf32> to vector<8x2xf32>
    %131 = tpu.concatenate %129, %130 in 1 : vector<8x126xf32>, vector<8x2xf32> -> vector<8x128xf32>
    %c6_i32_41 = arith.constant 6 : i32
    %132 = vector.broadcast %c6_i32_41 : i32 to vector<1x128xi32>
    %133 = arith.cmpi slt, %4, %132 : vector<1x128xi32>
    %cst_42 = arith.constant 0.000000e+00 : f32
    %134 = vector.shape_cast %133 : vector<1x128xi1> to vector<1x128xi1>
    %135 = vector.broadcast %134 : vector<1x128xi1> to vector<8x128xi1>
    %136 = vector.broadcast %cst_42 : f32 to vector<8x128xf32>
    %137 = arith.select %135, %131, %136 : vector<8x128xi1>, vector<8x128xf32>
    %c80 = arith.constant 80 : index
    %c0_43 = arith.constant 0 : index
    %138 = vector.load %arg13[%c80, %c0_43] : memref<200x512xf32, #tpu.memory_space<vmem>>, vector<8x128xf32>
    tpu.vector_store %arg13[%c80, %c0_43], %137 {strides = array<i32>} : memref<200x512xf32, #tpu.memory_space<vmem>>, vector<8x128xf32>,
    %139 = vector.extract_strided_slice %2 {offsets = [0, 1], sizes = [8, 127], strides = [1, 1]} : vector<8x128xf32> to vector<8x127xf32>
    %140 = vector.extract_strided_slice %2 {offsets = [0, 0], sizes = [8, 1], strides = [1, 1]} : vector<8x128xf32> to vector<8x1xf32>
    %141 = tpu.concatenate %139, %140 in 1 : vector<8x127xf32>, vector<8x1xf32> -> vector<8x128xf32>
    %c7_i32_44 = arith.constant 7 : i32
    %142 = vector.broadcast %c7_i32_44 : i32 to vector<1x128xi32>
    %143 = arith.cmpi slt, %4, %142 : vector<1x128xi32>
    %cst_45 = arith.constant 0.000000e+00 : f32
    %144 = vector.shape_cast %143 : vector<1x128xi1> to vector<1x128xi1>
    %145 = vector.broadcast %144 : vector<1x128xi1> to vector<8x128xi1>
    %146 = vector.broadcast %cst_45 : f32 to vector<8x128xf32>
    %147 = arith.select %145, %141, %146 : vector<8x128xi1>, vector<8x128xf32>
    %c88 = arith.constant 88 : index
    %c0_46 = arith.constant 0 : index
    %148 = vector.load %arg13[%c88, %c0_46] : memref<200x512xf32, #tpu.memory_space<vmem>>, vector<8x128xf32>
    tpu.vector_store %arg13[%c88, %c0_46], %147 {strides = array<i32>} : memref<200x512xf32, #tpu.memory_space<vmem>>, vector<8x128xf32>,
    %c96 = arith.constant 96 : index
    %c0_47 = arith.constant 0 : index
    %149 = vector.load %arg13[%c96, %c0_47] : memref<200x512xf32, #tpu.memory_space<vmem>>, vector<8x128xf32>
    tpu.vector_store %arg13[%c96, %c0_47], %2 {strides = array<i32>} : memref<200x512xf32, #tpu.memory_space<vmem>>, vector<8x128xf32>,
    %150 = vector.extract_strided_slice %2 {offsets = [0, 127], sizes = [8, 1], strides = [1, 1]} : vector<8x128xf32> to vector<8x1xf32>
    %151 = vector.extract_strided_slice %2 {offsets = [0, 0], sizes = [8, 127], strides = [1, 1]} : vector<8x128xf32> to vector<8x127xf32>
    %152 = tpu.concatenate %150, %151 in 1 : vector<8x1xf32>, vector<8x127xf32> -> vector<8x128xf32>
    %c1_i32_48 = arith.constant 1 : i32
    %153 = vector.broadcast %c1_i32_48 : i32 to vector<1x128xi32>
    %154 = arith.cmpi sge, %4, %153 : vector<1x128xi32>
    %cst_49 = arith.constant 0.000000e+00 : f32
    %155 = vector.shape_cast %154 : vector<1x128xi1> to vector<1x128xi1>
    %156 = vector.broadcast %155 : vector<1x128xi1> to vector<8x128xi1>
    %157 = vector.broadcast %cst_49 : f32 to vector<8x128xf32>
    %158 = arith.select %156, %152, %157 : vector<8x128xi1>, vector<8x128xf32>
    %c104 = arith.constant 104 : index
    %c0_50 = arith.constant 0 : index
    %159 = vector.load %arg13[%c104, %c0_50] : memref<200x512xf32, #tpu.memory_space<vmem>>, vector<8x128xf32>
    tpu.vector_store %arg13[%c104, %c0_50], %158 {strides = array<i32>} : memref<200x512xf32, #tpu.memory_space<vmem>>, vector<8x128xf32>,
    %160 = vector.extract_strided_slice %2 {offsets = [0, 126], sizes = [8, 2], strides = [1, 1]} : vector<8x128xf32> to vector<8x2xf32>
    %161 = vector.extract_strided_slice %2 {offsets = [0, 0], sizes = [8, 126], strides = [1, 1]} : vector<8x128xf32> to vector<8x126xf32>
    %162 = tpu.concatenate %160, %161 in 1 : vector<8x2xf32>, vector<8x126xf32> -> vector<8x128xf32>
    %c2_i32_51 = arith.constant 2 : i32
    %163 = vector.broadcast %c2_i32_51 : i32 to vector<1x128xi32>
    %164 = arith.cmpi sge, %4, %163 : vector<1x128xi32>
    %cst_52 = arith.constant 0.000000e+00 : f32
    %165 = vector.shape_cast %164 : vector<1x128xi1> to vector<1x128xi1>
    %166 = vector.broadcast %165 : vector<1x128xi1> to vector<8x128xi1>
    %167 = vector.broadcast %cst_52 : f32 to vector<8x128xf32>
    %168 = arith.select %166, %162, %167 : vector<8x128xi1>, vector<8x128xf32>
    %c112 = arith.constant 112 : index
    %c0_53 = arith.constant 0 : index
    %169 = vector.load %arg13[%c112, %c0_53] : memref<200x512xf32, #tpu.memory_space<vmem>>, vector<8x128xf32>
    tpu.vector_store %arg13[%c112, %c0_53], %168 {strides = array<i32>} : memref<200x512xf32, #tpu.memory_space<vmem>>, vector<8x128xf32>,
    %170 = vector.extract_strided_slice %2 {offsets = [0, 122], sizes = [8, 6], strides = [1, 1]} : vector<8x128xf32> to vector<8x6xf32>
    %171 = vector.extract_strided_slice %2 {offsets = [0, 0], sizes = [8, 122], strides = [1, 1]} : vector<8x128xf32> to vector<8x122xf32>
    %172 = tpu.concatenate %170, %171 in 1 : vector<8x6xf32>, vector<8x122xf32> -> vector<8x128xf32>
    %c1_i32_54 = arith.constant 1 : i32
    %173 = vector.broadcast %c1_i32_54 : i32 to vector<1x128xi32>
    %174 = arith.cmpi sge, %3, %173 : vector<1x128xi32>
    %c6_i32_55 = arith.constant 6 : i32
    %175 = vector.broadcast %c6_i32_55 : i32 to vector<1x128xi32>
    %176 = arith.cmpi slt, %4, %175 : vector<1x128xi32>
    %177 = arith.andi %174, %176 : vector<1x128xi1>
    %cst_56 = arith.constant 0.000000e+00 : f32
    %178 = vector.shape_cast %177 : vector<1x128xi1> to vector<1x128xi1>
    %179 = vector.broadcast %178 : vector<1x128xi1> to vector<8x128xi1>
    %180 = vector.broadcast %cst_56 : f32 to vector<8x128xf32>
    %181 = arith.select %179, %172, %180 : vector<8x128xi1>, vector<8x128xf32>
    %c120 = arith.constant 120 : index
    %c0_57 = arith.constant 0 : index
    %182 = vector.load %arg13[%c120, %c0_57] : memref<200x512xf32, #tpu.memory_space<vmem>>, vector<8x128xf32>
    tpu.vector_store %arg13[%c120, %c0_57], %181 {strides = array<i32>} : memref<200x512xf32, #tpu.memory_space<vmem>>, vector<8x128xf32>,
    %183 = vector.extract_strided_slice %2 {offsets = [0, 121], sizes = [8, 7], strides = [1, 1]} : vector<8x128xf32> to vector<8x7xf32>
    %184 = vector.extract_strided_slice %2 {offsets = [0, 0], sizes = [8, 121], strides = [1, 1]} : vector<8x128xf32> to vector<8x121xf32>
    %185 = tpu.concatenate %183, %184 in 1 : vector<8x7xf32>, vector<8x121xf32> -> vector<8x128xf32>
    %c1_i32_58 = arith.constant 1 : i32
    %186 = vector.broadcast %c1_i32_58 : i32 to vector<1x128xi32>
    %187 = arith.cmpi sge, %3, %186 : vector<1x128xi32>
    %c7_i32_59 = arith.constant 7 : i32
    %188 = vector.broadcast %c7_i32_59 : i32 to vector<1x128xi32>
    %189 = arith.cmpi slt, %4, %188 : vector<1x128xi32>
    %190 = arith.andi %187, %189 : vector<1x128xi1>
    %cst_60 = arith.constant 0.000000e+00 : f32
    %191 = vector.shape_cast %190 : vector<1x128xi1> to vector<1x128xi1>
    %192 = vector.broadcast %191 : vector<1x128xi1> to vector<8x128xi1>
    %193 = vector.broadcast %cst_60 : f32 to vector<8x128xf32>
    %194 = arith.select %192, %185, %193 : vector<8x128xi1>, vector<8x128xf32>
    %c128 = arith.constant 128 : index
    %c0_61 = arith.constant 0 : index
    %195 = vector.load %arg13[%c128, %c0_61] : memref<200x512xf32, #tpu.memory_space<vmem>>, vector<8x128xf32>
    tpu.vector_store %arg13[%c128, %c0_61], %194 {strides = array<i32>} : memref<200x512xf32, #tpu.memory_space<vmem>>, vector<8x128xf32>,
    %196 = vector.extract_strided_slice %2 {offsets = [0, 120], sizes = [8, 8], strides = [1, 1]} : vector<8x128xf32> to vector<8x8xf32>
    %197 = vector.extract_strided_slice %2 {offsets = [0, 0], sizes = [8, 120], strides = [1, 1]} : vector<8x128xf32> to vector<8x120xf32>
    %198 = tpu.concatenate %196, %197 in 1 : vector<8x8xf32>, vector<8x120xf32> -> vector<8x128xf32>
    %c1_i32_62 = arith.constant 1 : i32
    %199 = vector.broadcast %c1_i32_62 : i32 to vector<1x128xi32>
    %200 = arith.cmpi sge, %3, %199 : vector<1x128xi32>
    %cst_63 = arith.constant 0.000000e+00 : f32
    %201 = vector.shape_cast %200 : vector<1x128xi1> to vector<1x128xi1>
    %202 = vector.broadcast %201 : vector<1x128xi1> to vector<8x128xi1>
    %203 = vector.broadcast %cst_63 : f32 to vector<8x128xf32>
    %204 = arith.select %202, %198, %203 : vector<8x128xi1>, vector<8x128xf32>
    %c136 = arith.constant 136 : index
    %c0_64 = arith.constant 0 : index
    %205 = vector.load %arg13[%c136, %c0_64] : memref<200x512xf32, #tpu.memory_space<vmem>>, vector<8x128xf32>
    tpu.vector_store %arg13[%c136, %c0_64], %204 {strides = array<i32>} : memref<200x512xf32, #tpu.memory_space<vmem>>, vector<8x128xf32>,
    %206 = vector.extract_strided_slice %2 {offsets = [0, 119], sizes = [8, 9], strides = [1, 1]} : vector<8x128xf32> to vector<8x9xf32>
    %207 = vector.extract_strided_slice %2 {offsets = [0, 0], sizes = [8, 119], strides = [1, 1]} : vector<8x128xf32> to vector<8x119xf32>
    %208 = tpu.concatenate %206, %207 in 1 : vector<8x9xf32>, vector<8x119xf32> -> vector<8x128xf32>
    %c1_i32_65 = arith.constant 1 : i32
    %209 = vector.broadcast %c1_i32_65 : i32 to vector<1x128xi32>
    %210 = arith.cmpi sge, %3, %209 : vector<1x128xi32>
    %c1_i32_66 = arith.constant 1 : i32
    %211 = vector.broadcast %c1_i32_66 : i32 to vector<1x128xi32>
    %212 = arith.cmpi sge, %4, %211 : vector<1x128xi32>
    %213 = arith.andi %210, %212 : vector<1x128xi1>
    %cst_67 = arith.constant 0.000000e+00 : f32
    %214 = vector.shape_cast %213 : vector<1x128xi1> to vector<1x128xi1>
    %215 = vector.broadcast %214 : vector<1x128xi1> to vector<8x128xi1>
    %216 = vector.broadcast %cst_67 : f32 to vector<8x128xf32>
    %217 = arith.select %215, %208, %216 : vector<8x128xi1>, vector<8x128xf32>
    %c144 = arith.constant 144 : index
    %c0_68 = arith.constant 0 : index
    %218 = vector.load %arg13[%c144, %c0_68] : memref<200x512xf32, #tpu.memory_space<vmem>>, vector<8x128xf32>
    tpu.vector_store %arg13[%c144, %c0_68], %217 {strides = array<i32>} : memref<200x512xf32, #tpu.memory_space<vmem>>, vector<8x128xf32>,
    %219 = vector.extract_strided_slice %2 {offsets = [0, 118], sizes = [8, 10], strides = [1, 1]} : vector<8x128xf32> to vector<8x10xf32>
    %220 = vector.extract_strided_slice %2 {offsets = [0, 0], sizes = [8, 118], strides = [1, 1]} : vector<8x128xf32> to vector<8x118xf32>
    %221 = tpu.concatenate %219, %220 in 1 : vector<8x10xf32>, vector<8x118xf32> -> vector<8x128xf32>
    %c1_i32_69 = arith.constant 1 : i32
    %222 = vector.broadcast %c1_i32_69 : i32 to vector<1x128xi32>
    %223 = arith.cmpi sge, %3, %222 : vector<1x128xi32>
    %c2_i32_70 = arith.constant 2 : i32
    %224 = vector.broadcast %c2_i32_70 : i32 to vector<1x128xi32>
    %225 = arith.cmpi sge, %4, %224 : vector<1x128xi32>
    %226 = arith.andi %223, %225 : vector<1x128xi1>
    %cst_71 = arith.constant 0.000000e+00 : f32
    %227 = vector.shape_cast %226 : vector<1x128xi1> to vector<1x128xi1>
    %228 = vector.broadcast %227 : vector<1x128xi1> to vector<8x128xi1>
    %229 = vector.broadcast %cst_71 : f32 to vector<8x128xf32>
    %230 = arith.select %228, %221, %229 : vector<8x128xi1>, vector<8x128xf32>
    %c152 = arith.constant 152 : index
    %c0_72 = arith.constant 0 : index
    %231 = vector.load %arg13[%c152, %c0_72] : memref<200x512xf32, #tpu.memory_space<vmem>>, vector<8x128xf32>
    tpu.vector_store %arg13[%c152, %c0_72], %230 {strides = array<i32>} : memref<200x512xf32, #tpu.memory_space<vmem>>, vector<8x128xf32>,
    %232 = vector.extract_strided_slice %2 {offsets = [0, 114], sizes = [8, 14], strides = [1, 1]} : vector<8x128xf32> to vector<8x14xf32>
    %233 = vector.extract_strided_slice %2 {offsets = [0, 0], sizes = [8, 114], strides = [1, 1]} : vector<8x128xf32> to vector<8x114xf32>
    %234 = tpu.concatenate %232, %233 in 1 : vector<8x14xf32>, vector<8x114xf32> -> vector<8x128xf32>
    %c2_i32_73 = arith.constant 2 : i32
    %235 = vector.broadcast %c2_i32_73 : i32 to vector<1x128xi32>
    %236 = arith.cmpi sge, %3, %235 : vector<1x128xi32>
    %c6_i32_74 = arith.constant 6 : i32
    %237 = vector.broadcast %c6_i32_74 : i32 to vector<1x128xi32>
    %238 = arith.cmpi slt, %4, %237 : vector<1x128xi32>
    %239 = arith.andi %236, %238 : vector<1x128xi1>
    %cst_75 = arith.constant 0.000000e+00 : f32
    %240 = vector.shape_cast %239 : vector<1x128xi1> to vector<1x128xi1>
    %241 = vector.broadcast %240 : vector<1x128xi1> to vector<8x128xi1>
    %242 = vector.broadcast %cst_75 : f32 to vector<8x128xf32>
    %243 = arith.select %241, %234, %242 : vector<8x128xi1>, vector<8x128xf32>
    %c160 = arith.constant 160 : index
    %c0_76 = arith.constant 0 : index
    %244 = vector.load %arg13[%c160, %c0_76] : memref<200x512xf32, #tpu.memory_space<vmem>>, vector<8x128xf32>
    tpu.vector_store %arg13[%c160, %c0_76], %243 {strides = array<i32>} : memref<200x512xf32, #tpu.memory_space<vmem>>, vector<8x128xf32>,
    %245 = vector.extract_strided_slice %2 {offsets = [0, 113], sizes = [8, 15], strides = [1, 1]} : vector<8x128xf32> to vector<8x15xf32>
    %246 = vector.extract_strided_slice %2 {offsets = [0, 0], sizes = [8, 113], strides = [1, 1]} : vector<8x128xf32> to vector<8x113xf32>
    %247 = tpu.concatenate %245, %246 in 1 : vector<8x15xf32>, vector<8x113xf32> -> vector<8x128xf32>
    %c2_i32_77 = arith.constant 2 : i32
    %248 = vector.broadcast %c2_i32_77 : i32 to vector<1x128xi32>
    %249 = arith.cmpi sge, %3, %248 : vector<1x128xi32>
    %c7_i32_78 = arith.constant 7 : i32
    %250 = vector.broadcast %c7_i32_78 : i32 to vector<1x128xi32>
    %251 = arith.cmpi slt, %4, %250 : vector<1x128xi32>
    %252 = arith.andi %249, %251 : vector<1x128xi1>
    %cst_79 = arith.constant 0.000000e+00 : f32
    %253 = vector.shape_cast %252 : vector<1x128xi1> to vector<1x128xi1>
    %254 = vector.broadcast %253 : vector<1x128xi1> to vector<8x128xi1>
    %255 = vector.broadcast %cst_79 : f32 to vector<8x128xf32>
    %256 = arith.select %254, %247, %255 : vector<8x128xi1>, vector<8x128xf32>
    %c168 = arith.constant 168 : index
    %c0_80 = arith.constant 0 : index
    %257 = vector.load %arg13[%c168, %c0_80] : memref<200x512xf32, #tpu.memory_space<vmem>>, vector<8x128xf32>
    tpu.vector_store %arg13[%c168, %c0_80], %256 {strides = array<i32>} : memref<200x512xf32, #tpu.memory_space<vmem>>, vector<8x128xf32>,
    %258 = vector.extract_strided_slice %2 {offsets = [0, 112], sizes = [8, 16], strides = [1, 1]} : vector<8x128xf32> to vector<8x16xf32>
    %259 = vector.extract_strided_slice %2 {offsets = [0, 0], sizes = [8, 112], strides = [1, 1]} : vector<8x128xf32> to vector<8x112xf32>
    %260 = tpu.concatenate %258, %259 in 1 : vector<8x16xf32>, vector<8x112xf32> -> vector<8x128xf32>
    %c2_i32_81 = arith.constant 2 : i32
    %261 = vector.broadcast %c2_i32_81 : i32 to vector<1x128xi32>
    %262 = arith.cmpi sge, %3, %261 : vector<1x128xi32>
    %cst_82 = arith.constant 0.000000e+00 : f32
    %263 = vector.shape_cast %262 : vector<1x128xi1> to vector<1x128xi1>
    %264 = vector.broadcast %263 : vector<1x128xi1> to vector<8x128xi1>
    %265 = vector.broadcast %cst_82 : f32 to vector<8x128xf32>
    %266 = arith.select %264, %260, %265 : vector<8x128xi1>, vector<8x128xf32>
    %c176 = arith.constant 176 : index
    %c0_83 = arith.constant 0 : index
    %267 = vector.load %arg13[%c176, %c0_83] : memref<200x512xf32, #tpu.memory_space<vmem>>, vector<8x128xf32>
    tpu.vector_store %arg13[%c176, %c0_83], %266 {strides = array<i32>} : memref<200x512xf32, #tpu.memory_space<vmem>>, vector<8x128xf32>,
    %268 = vector.extract_strided_slice %2 {offsets = [0, 111], sizes = [8, 17], strides = [1, 1]} : vector<8x128xf32> to vector<8x17xf32>
    %269 = vector.extract_strided_slice %2 {offsets = [0, 0], sizes = [8, 111], strides = [1, 1]} : vector<8x128xf32> to vector<8x111xf32>
    %270 = tpu.concatenate %268, %269 in 1 : vector<8x17xf32>, vector<8x111xf32> -> vector<8x128xf32>
    %c2_i32_84 = arith.constant 2 : i32
    %271 = vector.broadcast %c2_i32_84 : i32 to vector<1x128xi32>
    %272 = arith.cmpi sge, %3, %271 : vector<1x128xi32>
    %c1_i32_85 = arith.constant 1 : i32
    %273 = vector.broadcast %c1_i32_85 : i32 to vector<1x128xi32>
    %274 = arith.cmpi sge, %4, %273 : vector<1x128xi32>
    %275 = arith.andi %272, %274 : vector<1x128xi1>
    %cst_86 = arith.constant 0.000000e+00 : f32
    %276 = vector.shape_cast %275 : vector<1x128xi1> to vector<1x128xi1>
    %277 = vector.broadcast %276 : vector<1x128xi1> to vector<8x128xi1>
    %278 = vector.broadcast %cst_86 : f32 to vector<8x128xf32>
    %279 = arith.select %277, %270, %278 : vector<8x128xi1>, vector<8x128xf32>
    %c184 = arith.constant 184 : index
    %c0_87 = arith.constant 0 : index
    %280 = vector.load %arg13[%c184, %c0_87] : memref<200x512xf32, #tpu.memory_space<vmem>>, vector<8x128xf32>
    tpu.vector_store %arg13[%c184, %c0_87], %279 {strides = array<i32>} : memref<200x512xf32, #tpu.memory_space<vmem>>, vector<8x128xf32>,
    %281 = vector.extract_strided_slice %2 {offsets = [0, 110], sizes = [8, 18], strides = [1, 1]} : vector<8x128xf32> to vector<8x18xf32>
    %282 = vector.extract_strided_slice %2 {offsets = [0, 0], sizes = [8, 110], strides = [1, 1]} : vector<8x128xf32> to vector<8x110xf32>
    %283 = tpu.concatenate %281, %282 in 1 : vector<8x18xf32>, vector<8x110xf32> -> vector<8x128xf32>
    %c2_i32_88 = arith.constant 2 : i32
    %284 = vector.broadcast %c2_i32_88 : i32 to vector<1x128xi32>
    %285 = arith.cmpi sge, %3, %284 : vector<1x128xi32>
    %c2_i32_89 = arith.constant 2 : i32
    %286 = vector.broadcast %c2_i32_89 : i32 to vector<1x128xi32>
    %287 = arith.cmpi sge, %4, %286 : vector<1x128xi32>
    %288 = arith.andi %285, %287 : vector<1x128xi1>
    %cst_90 = arith.constant 0.000000e+00 : f32
    %289 = vector.shape_cast %288 : vector<1x128xi1> to vector<1x128xi1>
    %290 = vector.broadcast %289 : vector<1x128xi1> to vector<8x128xi1>
    %291 = vector.broadcast %cst_90 : f32 to vector<8x128xf32>
    %292 = arith.select %290, %283, %291 : vector<8x128xi1>, vector<8x128xf32>
    %c192 = arith.constant 192 : index
    %c0_91 = arith.constant 0 : index
    %293 = vector.load %arg13[%c192, %c0_91] : memref<200x512xf32, #tpu.memory_space<vmem>>, vector<8x128xf32>
    tpu.vector_store %arg13[%c192, %c0_91], %292 {strides = array<i32>} : memref<200x512xf32, #tpu.memory_space<vmem>>, vector<8x128xf32>,
    %c0_92 = arith.constant 0 : index
    %c0_93 = arith.constant 0 : index
    %294 = vector.load %arg3[%c0_92, %c0_93] : memref<8x200xf32, #tpu.memory_space<vmem>>, vector<8x200xf32>
    %c0_94 = arith.constant 0 : index
    %c0_95 = arith.constant 0 : index
    %295 = vector.load %arg13[%c0_94, %c0_95] : memref<200x512xf32, #tpu.memory_space<vmem>>, vector<200x128xf32>
    %cst_96 = arith.constant dense<0.000000e+00> : vector<8x128xf32>
    %296 = tpu.matmul %294, %295, %cst_96 {dimension_numbers = #tpu.dot_dimension_numbers<[1], [0], [0], [1], [0, 0, 1, 1], [], []>} : vector<8x200xf32>, vector<200x128xf32>, vector<8x128xf32> -> vector<8x128xf32>
    %c0_97 = arith.constant 0 : index
    %c0_98 = arith.constant 0 : index
    %297 = vector.load %arg4[%c0_97, %c0_98] : memref<8x1xf32, #tpu.memory_space<vmem>>, vector<8x1xf32>
    %298 = vector.broadcast %297 : vector<8x1xf32> to vector<8x128xf32>
    %299 = arith.addf %296, %298 : vector<8x128xf32>
    %cst_99 = arith.constant 0.000000e+00 : f32
    %300 = vector.broadcast %cst_99 : f32 to vector<8x128xf32>
    %301 = arith.maximumf %299, %300 : vector<8x128xf32>
    %c0_100 = arith.constant 0 : index
    %c0_101 = arith.constant 0 : index
    %302 = vector.load %arg5[%c0_100, %c0_101] : memref<128x512xf32, #tpu.memory_space<vmem>>, vector<128x512xf32>
    %cst_102 = arith.constant dense<0.000000e+00> : vector<8x512xf32>
    %303 = tpu.matmul %301, %302, %cst_102 {dimension_numbers = #tpu.dot_dimension_numbers<[1], [0], [0], [1], [0, 0, 1, 1], [], []>} : vector<8x128xf32>, vector<128x512xf32>, vector<8x512xf32> -> vector<8x512xf32>
    %c0_103 = arith.constant 0 : index
    %c0_104 = arith.constant 0 : index
    %304 = vector.load %arg6[%c0_103, %c0_104] : memref<2x512xi32, #tpu.memory_space<vmem>>, vector<1x512xi32>
    %c1_105 = arith.constant 1 : index
    %c0_106 = arith.constant 0 : index
    %305 = vector.load %arg6[%c1_105, %c0_106] : memref<2x512xi32, #tpu.memory_space<vmem>>, vector<1x512xi32>
    %306 = vector.extract_strided_slice %303 {offsets = [0, 34], sizes = [8, 478], strides = [1, 1]} : vector<8x512xf32> to vector<8x478xf32>
    %307 = vector.extract_strided_slice %303 {offsets = [0, 0], sizes = [8, 34], strides = [1, 1]} : vector<8x512xf32> to vector<8x34xf32>
    %308 = tpu.concatenate %306, %307 in 1 : vector<8x478xf32>, vector<8x34xf32> -> vector<8x512xf32>
    %c14_i32 = arith.constant 14 : i32
    %309 = vector.broadcast %c14_i32 : i32 to vector<1x512xi32>
    %310 = arith.cmpi slt, %304, %309 : vector<1x512xi32>
    %c14_i32_107 = arith.constant 14 : i32
    %311 = vector.broadcast %c14_i32_107 : i32 to vector<1x512xi32>
    %312 = arith.cmpi slt, %305, %311 : vector<1x512xi32>
    %313 = arith.andi %310, %312 : vector<1x512xi1>
    %cst_108 = arith.constant 0.000000e+00 : f32
    %314 = vector.shape_cast %313 : vector<1x512xi1> to vector<1x512xi1>
    %315 = vector.broadcast %314 : vector<1x512xi1> to vector<8x512xi1>
    %316 = vector.broadcast %cst_108 : f32 to vector<8x512xf32>
    %317 = arith.select %315, %308, %316 : vector<8x512xi1>, vector<8x512xf32>
    %c0_109 = arith.constant 0 : index
    %c0_110 = arith.constant 0 : index
    %318 = vector.load %arg13[%c0_109, %c0_110] : memref<200x512xf32, #tpu.memory_space<vmem>>, vector<8x512xf32>
    tpu.vector_store %arg13[%c0_109, %c0_110], %317 {strides = array<i32>} : memref<200x512xf32, #tpu.memory_space<vmem>>, vector<8x512xf32>,
    %319 = vector.extract_strided_slice %303 {offsets = [0, 33], sizes = [8, 479], strides = [1, 1]} : vector<8x512xf32> to vector<8x479xf32>
    %320 = vector.extract_strided_slice %303 {offsets = [0, 0], sizes = [8, 33], strides = [1, 1]} : vector<8x512xf32> to vector<8x33xf32>
    %321 = tpu.concatenate %319, %320 in 1 : vector<8x479xf32>, vector<8x33xf32> -> vector<8x512xf32>
    %c14_i32_111 = arith.constant 14 : i32
    %322 = vector.broadcast %c14_i32_111 : i32 to vector<1x512xi32>
    %323 = arith.cmpi slt, %304, %322 : vector<1x512xi32>
    %c15_i32 = arith.constant 15 : i32
    %324 = vector.broadcast %c15_i32 : i32 to vector<1x512xi32>
    %325 = arith.cmpi slt, %305, %324 : vector<1x512xi32>
    %326 = arith.andi %323, %325 : vector<1x512xi1>
    %cst_112 = arith.constant 0.000000e+00 : f32
    %327 = vector.shape_cast %326 : vector<1x512xi1> to vector<1x512xi1>
    %328 = vector.broadcast %327 : vector<1x512xi1> to vector<8x512xi1>
    %329 = vector.broadcast %cst_112 : f32 to vector<8x512xf32>
    %330 = arith.select %328, %321, %329 : vector<8x512xi1>, vector<8x512xf32>
    %c8_113 = arith.constant 8 : index
    %c0_114 = arith.constant 0 : index
    %331 = vector.load %arg13[%c8_113, %c0_114] : memref<200x512xf32, #tpu.memory_space<vmem>>, vector<8x512xf32>
    tpu.vector_store %arg13[%c8_113, %c0_114], %330 {strides = array<i32>} : memref<200x512xf32, #tpu.memory_space<vmem>>, vector<8x512xf32>,
    %332 = vector.extract_strided_slice %303 {offsets = [0, 32], sizes = [8, 480], strides = [1, 1]} : vector<8x512xf32> to vector<8x480xf32>
    %333 = vector.extract_strided_slice %303 {offsets = [0, 0], sizes = [8, 32], strides = [1, 1]} : vector<8x512xf32> to vector<8x32xf32>
    %334 = tpu.concatenate %332, %333 in 1 : vector<8x480xf32>, vector<8x32xf32> -> vector<8x512xf32>
    %c14_i32_115 = arith.constant 14 : i32
    %335 = vector.broadcast %c14_i32_115 : i32 to vector<1x512xi32>
    %336 = arith.cmpi slt, %304, %335 : vector<1x512xi32>
    %cst_116 = arith.constant 0.000000e+00 : f32
    %337 = vector.shape_cast %336 : vector<1x512xi1> to vector<1x512xi1>
    %338 = vector.broadcast %337 : vector<1x512xi1> to vector<8x512xi1>
    %339 = vector.broadcast %cst_116 : f32 to vector<8x512xf32>
    %340 = arith.select %338, %334, %339 : vector<8x512xi1>, vector<8x512xf32>
    %c16_117 = arith.constant 16 : index
    %c0_118 = arith.constant 0 : index
    %341 = vector.load %arg13[%c16_117, %c0_118] : memref<200x512xf32, #tpu.memory_space<vmem>>, vector<8x512xf32>
    tpu.vector_store %arg13[%c16_117, %c0_118], %340 {strides = array<i32>} : memref<200x512xf32, #tpu.memory_space<vmem>>, vector<8x512xf32>,
    %342 = vector.extract_strided_slice %303 {offsets = [0, 31], sizes = [8, 481], strides = [1, 1]} : vector<8x512xf32> to vector<8x481xf32>
    %343 = vector.extract_strided_slice %303 {offsets = [0, 0], sizes = [8, 31], strides = [1, 1]} : vector<8x512xf32> to vector<8x31xf32>
    %344 = tpu.concatenate %342, %343 in 1 : vector<8x481xf32>, vector<8x31xf32> -> vector<8x512xf32>
    %c14_i32_119 = arith.constant 14 : i32
    %345 = vector.broadcast %c14_i32_119 : i32 to vector<1x512xi32>
    %346 = arith.cmpi slt, %304, %345 : vector<1x512xi32>
    %c1_i32_120 = arith.constant 1 : i32
    %347 = vector.broadcast %c1_i32_120 : i32 to vector<1x512xi32>
    %348 = arith.cmpi sge, %305, %347 : vector<1x512xi32>
    %349 = arith.andi %346, %348 : vector<1x512xi1>
    %cst_121 = arith.constant 0.000000e+00 : f32
    %350 = vector.shape_cast %349 : vector<1x512xi1> to vector<1x512xi1>
    %351 = vector.broadcast %350 : vector<1x512xi1> to vector<8x512xi1>
    %352 = vector.broadcast %cst_121 : f32 to vector<8x512xf32>
    %353 = arith.select %351, %344, %352 : vector<8x512xi1>, vector<8x512xf32>
    %c24_122 = arith.constant 24 : index
    %c0_123 = arith.constant 0 : index
    %354 = vector.load %arg13[%c24_122, %c0_123] : memref<200x512xf32, #tpu.memory_space<vmem>>, vector<8x512xf32>
    tpu.vector_store %arg13[%c24_122, %c0_123], %353 {strides = array<i32>} : memref<200x512xf32, #tpu.memory_space<vmem>>, vector<8x512xf32>,
    %355 = vector.extract_strided_slice %303 {offsets = [0, 30], sizes = [8, 482], strides = [1, 1]} : vector<8x512xf32> to vector<8x482xf32>
    %356 = vector.extract_strided_slice %303 {offsets = [0, 0], sizes = [8, 30], strides = [1, 1]} : vector<8x512xf32> to vector<8x30xf32>
    %357 = tpu.concatenate %355, %356 in 1 : vector<8x482xf32>, vector<8x30xf32> -> vector<8x512xf32>
    %c14_i32_124 = arith.constant 14 : i32
    %358 = vector.broadcast %c14_i32_124 : i32 to vector<1x512xi32>
    %359 = arith.cmpi slt, %304, %358 : vector<1x512xi32>
    %c2_i32_125 = arith.constant 2 : i32
    %360 = vector.broadcast %c2_i32_125 : i32 to vector<1x512xi32>
    %361 = arith.cmpi sge, %305, %360 : vector<1x512xi32>
    %362 = arith.andi %359, %361 : vector<1x512xi1>
    %cst_126 = arith.constant 0.000000e+00 : f32
    %363 = vector.shape_cast %362 : vector<1x512xi1> to vector<1x512xi1>
    %364 = vector.broadcast %363 : vector<1x512xi1> to vector<8x512xi1>
    %365 = vector.broadcast %cst_126 : f32 to vector<8x512xf32>
    %366 = arith.select %364, %357, %365 : vector<8x512xi1>, vector<8x512xf32>
    %c32_127 = arith.constant 32 : index
    %c0_128 = arith.constant 0 : index
    %367 = vector.load %arg13[%c32_127, %c0_128] : memref<200x512xf32, #tpu.memory_space<vmem>>, vector<8x512xf32>
    tpu.vector_store %arg13[%c32_127, %c0_128], %366 {strides = array<i32>} : memref<200x512xf32, #tpu.memory_space<vmem>>, vector<8x512xf32>,
    %368 = vector.extract_strided_slice %303 {offsets = [0, 18], sizes = [8, 494], strides = [1, 1]} : vector<8x512xf32> to vector<8x494xf32>
    %369 = vector.extract_strided_slice %303 {offsets = [0, 0], sizes = [8, 18], strides = [1, 1]} : vector<8x512xf32> to vector<8x18xf32>
    %370 = tpu.concatenate %368, %369 in 1 : vector<8x494xf32>, vector<8x18xf32> -> vector<8x512xf32>
    %c15_i32_129 = arith.constant 15 : i32
    %371 = vector.broadcast %c15_i32_129 : i32 to vector<1x512xi32>
    %372 = arith.cmpi slt, %304, %371 : vector<1x512xi32>
    %c14_i32_130 = arith.constant 14 : i32
    %373 = vector.broadcast %c14_i32_130 : i32 to vector<1x512xi32>
    %374 = arith.cmpi slt, %305, %373 : vector<1x512xi32>
    %375 = arith.andi %372, %374 : vector<1x512xi1>
    %cst_131 = arith.constant 0.000000e+00 : f32
    %376 = vector.shape_cast %375 : vector<1x512xi1> to vector<1x512xi1>
    %377 = vector.broadcast %376 : vector<1x512xi1> to vector<8x512xi1>
    %378 = vector.broadcast %cst_131 : f32 to vector<8x512xf32>
    %379 = arith.select %377, %370, %378 : vector<8x512xi1>, vector<8x512xf32>
    %c40_132 = arith.constant 40 : index
    %c0_133 = arith.constant 0 : index
    %380 = vector.load %arg13[%c40_132, %c0_133] : memref<200x512xf32, #tpu.memory_space<vmem>>, vector<8x512xf32>
    tpu.vector_store %arg13[%c40_132, %c0_133], %379 {strides = array<i32>} : memref<200x512xf32, #tpu.memory_space<vmem>>, vector<8x512xf32>,
    %381 = vector.extract_strided_slice %303 {offsets = [0, 17], sizes = [8, 495], strides = [1, 1]} : vector<8x512xf32> to vector<8x495xf32>
    %382 = vector.extract_strided_slice %303 {offsets = [0, 0], sizes = [8, 17], strides = [1, 1]} : vector<8x512xf32> to vector<8x17xf32>
    %383 = tpu.concatenate %381, %382 in 1 : vector<8x495xf32>, vector<8x17xf32> -> vector<8x512xf32>
    %c15_i32_134 = arith.constant 15 : i32
    %384 = vector.broadcast %c15_i32_134 : i32 to vector<1x512xi32>
    %385 = arith.cmpi slt, %304, %384 : vector<1x512xi32>
    %c15_i32_135 = arith.constant 15 : i32
    %386 = vector.broadcast %c15_i32_135 : i32 to vector<1x512xi32>
    %387 = arith.cmpi slt, %305, %386 : vector<1x512xi32>
    %388 = arith.andi %385, %387 : vector<1x512xi1>
    %cst_136 = arith.constant 0.000000e+00 : f32
    %389 = vector.shape_cast %388 : vector<1x512xi1> to vector<1x512xi1>
    %390 = vector.broadcast %389 : vector<1x512xi1> to vector<8x512xi1>
    %391 = vector.broadcast %cst_136 : f32 to vector<8x512xf32>
    %392 = arith.select %390, %383, %391 : vector<8x512xi1>, vector<8x512xf32>
    %c48_137 = arith.constant 48 : index
    %c0_138 = arith.constant 0 : index
    %393 = vector.load %arg13[%c48_137, %c0_138] : memref<200x512xf32, #tpu.memory_space<vmem>>, vector<8x512xf32>
    tpu.vector_store %arg13[%c48_137, %c0_138], %392 {strides = array<i32>} : memref<200x512xf32, #tpu.memory_space<vmem>>, vector<8x512xf32>,
    %394 = vector.extract_strided_slice %303 {offsets = [0, 16], sizes = [8, 496], strides = [1, 1]} : vector<8x512xf32> to vector<8x496xf32>
    %395 = vector.extract_strided_slice %303 {offsets = [0, 0], sizes = [8, 16], strides = [1, 1]} : vector<8x512xf32> to vector<8x16xf32>
    %396 = tpu.concatenate %394, %395 in 1 : vector<8x496xf32>, vector<8x16xf32> -> vector<8x512xf32>
    %c15_i32_139 = arith.constant 15 : i32
    %397 = vector.broadcast %c15_i32_139 : i32 to vector<1x512xi32>
    %398 = arith.cmpi slt, %304, %397 : vector<1x512xi32>
    %cst_140 = arith.constant 0.000000e+00 : f32
    %399 = vector.shape_cast %398 : vector<1x512xi1> to vector<1x512xi1>
    %400 = vector.broadcast %399 : vector<1x512xi1> to vector<8x512xi1>
    %401 = vector.broadcast %cst_140 : f32 to vector<8x512xf32>
    %402 = arith.select %400, %396, %401 : vector<8x512xi1>, vector<8x512xf32>
    %c56_141 = arith.constant 56 : index
    %c0_142 = arith.constant 0 : index
    %403 = vector.load %arg13[%c56_141, %c0_142] : memref<200x512xf32, #tpu.memory_space<vmem>>, vector<8x512xf32>
    tpu.vector_store %arg13[%c56_141, %c0_142], %402 {strides = array<i32>} : memref<200x512xf32, #tpu.memory_space<vmem>>, vector<8x512xf32>,
    %404 = vector.extract_strided_slice %303 {offsets = [0, 15], sizes = [8, 497], strides = [1, 1]} : vector<8x512xf32> to vector<8x497xf32>
    %405 = vector.extract_strided_slice %303 {offsets = [0, 0], sizes = [8, 15], strides = [1, 1]} : vector<8x512xf32> to vector<8x15xf32>
    %406 = tpu.concatenate %404, %405 in 1 : vector<8x497xf32>, vector<8x15xf32> -> vector<8x512xf32>
    %c15_i32_143 = arith.constant 15 : i32
    %407 = vector.broadcast %c15_i32_143 : i32 to vector<1x512xi32>
    %408 = arith.cmpi slt, %304, %407 : vector<1x512xi32>
    %c1_i32_144 = arith.constant 1 : i32
    %409 = vector.broadcast %c1_i32_144 : i32 to vector<1x512xi32>
    %410 = arith.cmpi sge, %305, %409 : vector<1x512xi32>
    %411 = arith.andi %408, %410 : vector<1x512xi1>
    %cst_145 = arith.constant 0.000000e+00 : f32
    %412 = vector.shape_cast %411 : vector<1x512xi1> to vector<1x512xi1>
    %413 = vector.broadcast %412 : vector<1x512xi1> to vector<8x512xi1>
    %414 = vector.broadcast %cst_145 : f32 to vector<8x512xf32>
    %415 = arith.select %413, %406, %414 : vector<8x512xi1>, vector<8x512xf32>
    %c64_146 = arith.constant 64 : index
    %c0_147 = arith.constant 0 : index
    %416 = vector.load %arg13[%c64_146, %c0_147] : memref<200x512xf32, #tpu.memory_space<vmem>>, vector<8x512xf32>
    tpu.vector_store %arg13[%c64_146, %c0_147], %415 {strides = array<i32>} : memref<200x512xf32, #tpu.memory_space<vmem>>, vector<8x512xf32>,
    %417 = vector.extract_strided_slice %303 {offsets = [0, 14], sizes = [8, 498], strides = [1, 1]} : vector<8x512xf32> to vector<8x498xf32>
    %418 = vector.extract_strided_slice %303 {offsets = [0, 0], sizes = [8, 14], strides = [1, 1]} : vector<8x512xf32> to vector<8x14xf32>
    %419 = tpu.concatenate %417, %418 in 1 : vector<8x498xf32>, vector<8x14xf32> -> vector<8x512xf32>
    %c15_i32_148 = arith.constant 15 : i32
    %420 = vector.broadcast %c15_i32_148 : i32 to vector<1x512xi32>
    %421 = arith.cmpi slt, %304, %420 : vector<1x512xi32>
    %c2_i32_149 = arith.constant 2 : i32
    %422 = vector.broadcast %c2_i32_149 : i32 to vector<1x512xi32>
    %423 = arith.cmpi sge, %305, %422 : vector<1x512xi32>
    %424 = arith.andi %421, %423 : vector<1x512xi1>
    %cst_150 = arith.constant 0.000000e+00 : f32
    %425 = vector.shape_cast %424 : vector<1x512xi1> to vector<1x512xi1>
    %426 = vector.broadcast %425 : vector<1x512xi1> to vector<8x512xi1>
    %427 = vector.broadcast %cst_150 : f32 to vector<8x512xf32>
    %428 = arith.select %426, %419, %427 : vector<8x512xi1>, vector<8x512xf32>
    %c72_151 = arith.constant 72 : index
    %c0_152 = arith.constant 0 : index
    %429 = vector.load %arg13[%c72_151, %c0_152] : memref<200x512xf32, #tpu.memory_space<vmem>>, vector<8x512xf32>
    tpu.vector_store %arg13[%c72_151, %c0_152], %428 {strides = array<i32>} : memref<200x512xf32, #tpu.memory_space<vmem>>, vector<8x512xf32>,
    %430 = vector.extract_strided_slice %303 {offsets = [0, 2], sizes = [8, 510], strides = [1, 1]} : vector<8x512xf32> to vector<8x510xf32>
    %431 = vector.extract_strided_slice %303 {offsets = [0, 0], sizes = [8, 2], strides = [1, 1]} : vector<8x512xf32> to vector<8x2xf32>
    %432 = tpu.concatenate %430, %431 in 1 : vector<8x510xf32>, vector<8x2xf32> -> vector<8x512xf32>
    %c14_i32_153 = arith.constant 14 : i32
    %433 = vector.broadcast %c14_i32_153 : i32 to vector<1x512xi32>
    %434 = arith.cmpi slt, %305, %433 : vector<1x512xi32>
    %cst_154 = arith.constant 0.000000e+00 : f32
    %435 = vector.shape_cast %434 : vector<1x512xi1> to vector<1x512xi1>
    %436 = vector.broadcast %435 : vector<1x512xi1> to vector<8x512xi1>
    %437 = vector.broadcast %cst_154 : f32 to vector<8x512xf32>
    %438 = arith.select %436, %432, %437 : vector<8x512xi1>, vector<8x512xf32>
    %c80_155 = arith.constant 80 : index
    %c0_156 = arith.constant 0 : index
    %439 = vector.load %arg13[%c80_155, %c0_156] : memref<200x512xf32, #tpu.memory_space<vmem>>, vector<8x512xf32>
    tpu.vector_store %arg13[%c80_155, %c0_156], %438 {strides = array<i32>} : memref<200x512xf32, #tpu.memory_space<vmem>>, vector<8x512xf32>,
    %440 = vector.extract_strided_slice %303 {offsets = [0, 1], sizes = [8, 511], strides = [1, 1]} : vector<8x512xf32> to vector<8x511xf32>
    %441 = vector.extract_strided_slice %303 {offsets = [0, 0], sizes = [8, 1], strides = [1, 1]} : vector<8x512xf32> to vector<8x1xf32>
    %442 = tpu.concatenate %440, %441 in 1 : vector<8x511xf32>, vector<8x1xf32> -> vector<8x512xf32>
    %c15_i32_157 = arith.constant 15 : i32
    %443 = vector.broadcast %c15_i32_157 : i32 to vector<1x512xi32>
    %444 = arith.cmpi slt, %305, %443 : vector<1x512xi32>
    %cst_158 = arith.constant 0.000000e+00 : f32
    %445 = vector.shape_cast %444 : vector<1x512xi1> to vector<1x512xi1>
    %446 = vector.broadcast %445 : vector<1x512xi1> to vector<8x512xi1>
    %447 = vector.broadcast %cst_158 : f32 to vector<8x512xf32>
    %448 = arith.select %446, %442, %447 : vector<8x512xi1>, vector<8x512xf32>
    %c88_159 = arith.constant 88 : index
    %c0_160 = arith.constant 0 : index
    %449 = vector.load %arg13[%c88_159, %c0_160] : memref<200x512xf32, #tpu.memory_space<vmem>>, vector<8x512xf32>
    tpu.vector_store %arg13[%c88_159, %c0_160], %448 {strides = array<i32>} : memref<200x512xf32, #tpu.memory_space<vmem>>, vector<8x512xf32>,
    %c96_161 = arith.constant 96 : index
    %c0_162 = arith.constant 0 : index
    %450 = vector.load %arg13[%c96_161, %c0_162] : memref<200x512xf32, #tpu.memory_space<vmem>>, vector<8x512xf32>
    tpu.vector_store %arg13[%c96_161, %c0_162], %303 {strides = array<i32>} : memref<200x512xf32, #tpu.memory_space<vmem>>, vector<8x512xf32>,
    %451 = vector.extract_strided_slice %303 {offsets = [0, 511], sizes = [8, 1], strides = [1, 1]} : vector<8x512xf32> to vector<8x1xf32>
    %452 = vector.extract_strided_slice %303 {offsets = [0, 0], sizes = [8, 511], strides = [1, 1]} : vector<8x512xf32> to vector<8x511xf32>
    %453 = tpu.concatenate %451, %452 in 1 : vector<8x1xf32>, vector<8x511xf32> -> vector<8x512xf32>
    %c1_i32_163 = arith.constant 1 : i32
    %454 = vector.broadcast %c1_i32_163 : i32 to vector<1x512xi32>
    %455 = arith.cmpi sge, %305, %454 : vector<1x512xi32>
    %cst_164 = arith.constant 0.000000e+00 : f32
    %456 = vector.shape_cast %455 : vector<1x512xi1> to vector<1x512xi1>
    %457 = vector.broadcast %456 : vector<1x512xi1> to vector<8x512xi1>
    %458 = vector.broadcast %cst_164 : f32 to vector<8x512xf32>
    %459 = arith.select %457, %453, %458 : vector<8x512xi1>, vector<8x512xf32>
    %c104_165 = arith.constant 104 : index
    %c0_166 = arith.constant 0 : index
    %460 = vector.load %arg13[%c104_165, %c0_166] : memref<200x512xf32, #tpu.memory_space<vmem>>, vector<8x512xf32>
    tpu.vector_store %arg13[%c104_165, %c0_166], %459 {strides = array<i32>} : memref<200x512xf32, #tpu.memory_space<vmem>>, vector<8x512xf32>,
    %461 = vector.extract_strided_slice %303 {offsets = [0, 510], sizes = [8, 2], strides = [1, 1]} : vector<8x512xf32> to vector<8x2xf32>
    %462 = vector.extract_strided_slice %303 {offsets = [0, 0], sizes = [8, 510], strides = [1, 1]} : vector<8x512xf32> to vector<8x510xf32>
    %463 = tpu.concatenate %461, %462 in 1 : vector<8x2xf32>, vector<8x510xf32> -> vector<8x512xf32>
    %c2_i32_167 = arith.constant 2 : i32
    %464 = vector.broadcast %c2_i32_167 : i32 to vector<1x512xi32>
    %465 = arith.cmpi sge, %305, %464 : vector<1x512xi32>
    %cst_168 = arith.constant 0.000000e+00 : f32
    %466 = vector.shape_cast %465 : vector<1x512xi1> to vector<1x512xi1>
    %467 = vector.broadcast %466 : vector<1x512xi1> to vector<8x512xi1>
    %468 = vector.broadcast %cst_168 : f32 to vector<8x512xf32>
    %469 = arith.select %467, %463, %468 : vector<8x512xi1>, vector<8x512xf32>
    %c112_169 = arith.constant 112 : index
    %c0_170 = arith.constant 0 : index
    %470 = vector.load %arg13[%c112_169, %c0_170] : memref<200x512xf32, #tpu.memory_space<vmem>>, vector<8x512xf32>
    tpu.vector_store %arg13[%c112_169, %c0_170], %469 {strides = array<i32>} : memref<200x512xf32, #tpu.memory_space<vmem>>, vector<8x512xf32>,
    %471 = vector.extract_strided_slice %303 {offsets = [0, 498], sizes = [8, 14], strides = [1, 1]} : vector<8x512xf32> to vector<8x14xf32>
    %472 = vector.extract_strided_slice %303 {offsets = [0, 0], sizes = [8, 498], strides = [1, 1]} : vector<8x512xf32> to vector<8x498xf32>
    %473 = tpu.concatenate %471, %472 in 1 : vector<8x14xf32>, vector<8x498xf32> -> vector<8x512xf32>
    %c1_i32_171 = arith.constant 1 : i32
    %474 = vector.broadcast %c1_i32_171 : i32 to vector<1x512xi32>
    %475 = arith.cmpi sge, %304, %474 : vector<1x512xi32>
    %c14_i32_172 = arith.constant 14 : i32
    %476 = vector.broadcast %c14_i32_172 : i32 to vector<1x512xi32>
    %477 = arith.cmpi slt, %305, %476 : vector<1x512xi32>
    %478 = arith.andi %475, %477 : vector<1x512xi1>
    %cst_173 = arith.constant 0.000000e+00 : f32
    %479 = vector.shape_cast %478 : vector<1x512xi1> to vector<1x512xi1>
    %480 = vector.broadcast %479 : vector<1x512xi1> to vector<8x512xi1>
    %481 = vector.broadcast %cst_173 : f32 to vector<8x512xf32>
    %482 = arith.select %480, %473, %481 : vector<8x512xi1>, vector<8x512xf32>
    %c120_174 = arith.constant 120 : index
    %c0_175 = arith.constant 0 : index
    %483 = vector.load %arg13[%c120_174, %c0_175] : memref<200x512xf32, #tpu.memory_space<vmem>>, vector<8x512xf32>
    tpu.vector_store %arg13[%c120_174, %c0_175], %482 {strides = array<i32>} : memref<200x512xf32, #tpu.memory_space<vmem>>, vector<8x512xf32>,
    %484 = vector.extract_strided_slice %303 {offsets = [0, 497], sizes = [8, 15], strides = [1, 1]} : vector<8x512xf32> to vector<8x15xf32>
    %485 = vector.extract_strided_slice %303 {offsets = [0, 0], sizes = [8, 497], strides = [1, 1]} : vector<8x512xf32> to vector<8x497xf32>
    %486 = tpu.concatenate %484, %485 in 1 : vector<8x15xf32>, vector<8x497xf32> -> vector<8x512xf32>
    %c1_i32_176 = arith.constant 1 : i32
    %487 = vector.broadcast %c1_i32_176 : i32 to vector<1x512xi32>
    %488 = arith.cmpi sge, %304, %487 : vector<1x512xi32>
    %c15_i32_177 = arith.constant 15 : i32
    %489 = vector.broadcast %c15_i32_177 : i32 to vector<1x512xi32>
    %490 = arith.cmpi slt, %305, %489 : vector<1x512xi32>
    %491 = arith.andi %488, %490 : vector<1x512xi1>
    %cst_178 = arith.constant 0.000000e+00 : f32
    %492 = vector.shape_cast %491 : vector<1x512xi1> to vector<1x512xi1>
    %493 = vector.broadcast %492 : vector<1x512xi1> to vector<8x512xi1>
    %494 = vector.broadcast %cst_178 : f32 to vector<8x512xf32>
    %495 = arith.select %493, %486, %494 : vector<8x512xi1>, vector<8x512xf32>
    %c128_179 = arith.constant 128 : index
    %c0_180 = arith.constant 0 : index
    %496 = vector.load %arg13[%c128_179, %c0_180] : memref<200x512xf32, #tpu.memory_space<vmem>>, vector<8x512xf32>
    tpu.vector_store %arg13[%c128_179, %c0_180], %495 {strides = array<i32>} : memref<200x512xf32, #tpu.memory_space<vmem>>, vector<8x512xf32>,
    %497 = vector.extract_strided_slice %303 {offsets = [0, 496], sizes = [8, 16], strides = [1, 1]} : vector<8x512xf32> to vector<8x16xf32>
    %498 = vector.extract_strided_slice %303 {offsets = [0, 0], sizes = [8, 496], strides = [1, 1]} : vector<8x512xf32> to vector<8x496xf32>
    %499 = tpu.concatenate %497, %498 in 1 : vector<8x16xf32>, vector<8x496xf32> -> vector<8x512xf32>
    %c1_i32_181 = arith.constant 1 : i32
    %500 = vector.broadcast %c1_i32_181 : i32 to vector<1x512xi32>
    %501 = arith.cmpi sge, %304, %500 : vector<1x512xi32>
    %cst_182 = arith.constant 0.000000e+00 : f32
    %502 = vector.shape_cast %501 : vector<1x512xi1> to vector<1x512xi1>
    %503 = vector.broadcast %502 : vector<1x512xi1> to vector<8x512xi1>
    %504 = vector.broadcast %cst_182 : f32 to vector<8x512xf32>
    %505 = arith.select %503, %499, %504 : vector<8x512xi1>, vector<8x512xf32>
    %c136_183 = arith.constant 136 : index
    %c0_184 = arith.constant 0 : index
    %506 = vector.load %arg13[%c136_183, %c0_184] : memref<200x512xf32, #tpu.memory_space<vmem>>, vector<8x512xf32>
    tpu.vector_store %arg13[%c136_183, %c0_184], %505 {strides = array<i32>} : memref<200x512xf32, #tpu.memory_space<vmem>>, vector<8x512xf32>,
    %507 = vector.extract_strided_slice %303 {offsets = [0, 495], sizes = [8, 17], strides = [1, 1]} : vector<8x512xf32> to vector<8x17xf32>
    %508 = vector.extract_strided_slice %303 {offsets = [0, 0], sizes = [8, 495], strides = [1, 1]} : vector<8x512xf32> to vector<8x495xf32>
    %509 = tpu.concatenate %507, %508 in 1 : vector<8x17xf32>, vector<8x495xf32> -> vector<8x512xf32>
    %c1_i32_185 = arith.constant 1 : i32
    %510 = vector.broadcast %c1_i32_185 : i32 to vector<1x512xi32>
    %511 = arith.cmpi sge, %304, %510 : vector<1x512xi32>
    %c1_i32_186 = arith.constant 1 : i32
    %512 = vector.broadcast %c1_i32_186 : i32 to vector<1x512xi32>
    %513 = arith.cmpi sge, %305, %512 : vector<1x512xi32>
    %514 = arith.andi %511, %513 : vector<1x512xi1>
    %cst_187 = arith.constant 0.000000e+00 : f32
    %515 = vector.shape_cast %514 : vector<1x512xi1> to vector<1x512xi1>
    %516 = vector.broadcast %515 : vector<1x512xi1> to vector<8x512xi1>
    %517 = vector.broadcast %cst_187 : f32 to vector<8x512xf32>
    %518 = arith.select %516, %509, %517 : vector<8x512xi1>, vector<8x512xf32>
    %c144_188 = arith.constant 144 : index
    %c0_189 = arith.constant 0 : index
    %519 = vector.load %arg13[%c144_188, %c0_189] : memref<200x512xf32, #tpu.memory_space<vmem>>, vector<8x512xf32>
    tpu.vector_store %arg13[%c144_188, %c0_189], %518 {strides = array<i32>} : memref<200x512xf32, #tpu.memory_space<vmem>>, vector<8x512xf32>,
    %520 = vector.extract_strided_slice %303 {offsets = [0, 494], sizes = [8, 18], strides = [1, 1]} : vector<8x512xf32> to vector<8x18xf32>
    %521 = vector.extract_strided_slice %303 {offsets = [0, 0], sizes = [8, 494], strides = [1, 1]} : vector<8x512xf32> to vector<8x494xf32>
    %522 = tpu.concatenate %520, %521 in 1 : vector<8x18xf32>, vector<8x494xf32> -> vector<8x512xf32>
    %c1_i32_190 = arith.constant 1 : i32
    %523 = vector.broadcast %c1_i32_190 : i32 to vector<1x512xi32>
    %524 = arith.cmpi sge, %304, %523 : vector<1x512xi32>
    %c2_i32_191 = arith.constant 2 : i32
    %525 = vector.broadcast %c2_i32_191 : i32 to vector<1x512xi32>
    %526 = arith.cmpi sge, %305, %525 : vector<1x512xi32>
    %527 = arith.andi %524, %526 : vector<1x512xi1>
    %cst_192 = arith.constant 0.000000e+00 : f32
    %528 = vector.shape_cast %527 : vector<1x512xi1> to vector<1x512xi1>
    %529 = vector.broadcast %528 : vector<1x512xi1> to vector<8x512xi1>
    %530 = vector.broadcast %cst_192 : f32 to vector<8x512xf32>
    %531 = arith.select %529, %522, %530 : vector<8x512xi1>, vector<8x512xf32>
    %c152_193 = arith.constant 152 : index
    %c0_194 = arith.constant 0 : index
    %532 = vector.load %arg13[%c152_193, %c0_194] : memref<200x512xf32, #tpu.memory_space<vmem>>, vector<8x512xf32>
    tpu.vector_store %arg13[%c152_193, %c0_194], %531 {strides = array<i32>} : memref<200x512xf32, #tpu.memory_space<vmem>>, vector<8x512xf32>,
    %533 = vector.extract_strided_slice %303 {offsets = [0, 482], sizes = [8, 30], strides = [1, 1]} : vector<8x512xf32> to vector<8x30xf32>
    %534 = vector.extract_strided_slice %303 {offsets = [0, 0], sizes = [8, 482], strides = [1, 1]} : vector<8x512xf32> to vector<8x482xf32>
    %535 = tpu.concatenate %533, %534 in 1 : vector<8x30xf32>, vector<8x482xf32> -> vector<8x512xf32>
    %c2_i32_195 = arith.constant 2 : i32
    %536 = vector.broadcast %c2_i32_195 : i32 to vector<1x512xi32>
    %537 = arith.cmpi sge, %304, %536 : vector<1x512xi32>
    %c14_i32_196 = arith.constant 14 : i32
    %538 = vector.broadcast %c14_i32_196 : i32 to vector<1x512xi32>
    %539 = arith.cmpi slt, %305, %538 : vector<1x512xi32>
    %540 = arith.andi %537, %539 : vector<1x512xi1>
    %cst_197 = arith.constant 0.000000e+00 : f32
    %541 = vector.shape_cast %540 : vector<1x512xi1> to vector<1x512xi1>
    %542 = vector.broadcast %541 : vector<1x512xi1> to vector<8x512xi1>
    %543 = vector.broadcast %cst_197 : f32 to vector<8x512xf32>
    %544 = arith.select %542, %535, %543 : vector<8x512xi1>, vector<8x512xf32>
    %c160_198 = arith.constant 160 : index
    %c0_199 = arith.constant 0 : index
    %545 = vector.load %arg13[%c160_198, %c0_199] : memref<200x512xf32, #tpu.memory_space<vmem>>, vector<8x512xf32>
    tpu.vector_store %arg13[%c160_198, %c0_199], %544 {strides = array<i32>} : memref<200x512xf32, #tpu.memory_space<vmem>>, vector<8x512xf32>,
    %546 = vector.extract_strided_slice %303 {offsets = [0, 481], sizes = [8, 31], strides = [1, 1]} : vector<8x512xf32> to vector<8x31xf32>
    %547 = vector.extract_strided_slice %303 {offsets = [0, 0], sizes = [8, 481], strides = [1, 1]} : vector<8x512xf32> to vector<8x481xf32>
    %548 = tpu.concatenate %546, %547 in 1 : vector<8x31xf32>, vector<8x481xf32> -> vector<8x512xf32>
    %c2_i32_200 = arith.constant 2 : i32
    %549 = vector.broadcast %c2_i32_200 : i32 to vector<1x512xi32>
    %550 = arith.cmpi sge, %304, %549 : vector<1x512xi32>
    %c15_i32_201 = arith.constant 15 : i32
    %551 = vector.broadcast %c15_i32_201 : i32 to vector<1x512xi32>
    %552 = arith.cmpi slt, %305, %551 : vector<1x512xi32>
    %553 = arith.andi %550, %552 : vector<1x512xi1>
    %cst_202 = arith.constant 0.000000e+00 : f32
    %554 = vector.shape_cast %553 : vector<1x512xi1> to vector<1x512xi1>
    %555 = vector.broadcast %554 : vector<1x512xi1> to vector<8x512xi1>
    %556 = vector.broadcast %cst_202 : f32 to vector<8x512xf32>
    %557 = arith.select %555, %548, %556 : vector<8x512xi1>, vector<8x512xf32>
    %c168_203 = arith.constant 168 : index
    %c0_204 = arith.constant 0 : index
    %558 = vector.load %arg13[%c168_203, %c0_204] : memref<200x512xf32, #tpu.memory_space<vmem>>, vector<8x512xf32>
    tpu.vector_store %arg13[%c168_203, %c0_204], %557 {strides = array<i32>} : memref<200x512xf32, #tpu.memory_space<vmem>>, vector<8x512xf32>,
    %559 = vector.extract_strided_slice %303 {offsets = [0, 480], sizes = [8, 32], strides = [1, 1]} : vector<8x512xf32> to vector<8x32xf32>
    %560 = vector.extract_strided_slice %303 {offsets = [0, 0], sizes = [8, 480], strides = [1, 1]} : vector<8x512xf32> to vector<8x480xf32>
    %561 = tpu.concatenate %559, %560 in 1 : vector<8x32xf32>, vector<8x480xf32> -> vector<8x512xf32>
    %c2_i32_205 = arith.constant 2 : i32
    %562 = vector.broadcast %c2_i32_205 : i32 to vector<1x512xi32>
    %563 = arith.cmpi sge, %304, %562 : vector<1x512xi32>
    %cst_206 = arith.constant 0.000000e+00 : f32
    %564 = vector.shape_cast %563 : vector<1x512xi1> to vector<1x512xi1>
    %565 = vector.broadcast %564 : vector<1x512xi1> to vector<8x512xi1>
    %566 = vector.broadcast %cst_206 : f32 to vector<8x512xf32>
    %567 = arith.select %565, %561, %566 : vector<8x512xi1>, vector<8x512xf32>
    %c176_207 = arith.constant 176 : index
    %c0_208 = arith.constant 0 : index
    %568 = vector.load %arg13[%c176_207, %c0_208] : memref<200x512xf32, #tpu.memory_space<vmem>>, vector<8x512xf32>
    tpu.vector_store %arg13[%c176_207, %c0_208], %567 {strides = array<i32>} : memref<200x512xf32, #tpu.memory_space<vmem>>, vector<8x512xf32>,
    %569 = vector.extract_strided_slice %303 {offsets = [0, 479], sizes = [8, 33], strides = [1, 1]} : vector<8x512xf32> to vector<8x33xf32>
    %570 = vector.extract_strided_slice %303 {offsets = [0, 0], sizes = [8, 479], strides = [1, 1]} : vector<8x512xf32> to vector<8x479xf32>
    %571 = tpu.concatenate %569, %570 in 1 : vector<8x33xf32>, vector<8x479xf32> -> vector<8x512xf32>
    %c2_i32_209 = arith.constant 2 : i32
    %572 = vector.broadcast %c2_i32_209 : i32 to vector<1x512xi32>
    %573 = arith.cmpi sge, %304, %572 : vector<1x512xi32>
    %c1_i32_210 = arith.constant 1 : i32
    %574 = vector.broadcast %c1_i32_210 : i32 to vector<1x512xi32>
    %575 = arith.cmpi sge, %305, %574 : vector<1x512xi32>
    %576 = arith.andi %573, %575 : vector<1x512xi1>
    %cst_211 = arith.constant 0.000000e+00 : f32
    %577 = vector.shape_cast %576 : vector<1x512xi1> to vector<1x512xi1>
    %578 = vector.broadcast %577 : vector<1x512xi1> to vector<8x512xi1>
    %579 = vector.broadcast %cst_211 : f32 to vector<8x512xf32>
    %580 = arith.select %578, %571, %579 : vector<8x512xi1>, vector<8x512xf32>
    %c184_212 = arith.constant 184 : index
    %c0_213 = arith.constant 0 : index
    %581 = vector.load %arg13[%c184_212, %c0_213] : memref<200x512xf32, #tpu.memory_space<vmem>>, vector<8x512xf32>
    tpu.vector_store %arg13[%c184_212, %c0_213], %580 {strides = array<i32>} : memref<200x512xf32, #tpu.memory_space<vmem>>, vector<8x512xf32>,
    %582 = vector.extract_strided_slice %303 {offsets = [0, 478], sizes = [8, 34], strides = [1, 1]} : vector<8x512xf32> to vector<8x34xf32>
    %583 = vector.extract_strided_slice %303 {offsets = [0, 0], sizes = [8, 478], strides = [1, 1]} : vector<8x512xf32> to vector<8x478xf32>
    %584 = tpu.concatenate %582, %583 in 1 : vector<8x34xf32>, vector<8x478xf32> -> vector<8x512xf32>
    %c2_i32_214 = arith.constant 2 : i32
    %585 = vector.broadcast %c2_i32_214 : i32 to vector<1x512xi32>
    %586 = arith.cmpi sge, %304, %585 : vector<1x512xi32>
    %c2_i32_215 = arith.constant 2 : i32
    %587 = vector.broadcast %c2_i32_215 : i32 to vector<1x512xi32>
    %588 = arith.cmpi sge, %305, %587 : vector<1x512xi32>
    %589 = arith.andi %586, %588 : vector<1x512xi1>
    %cst_216 = arith.constant 0.000000e+00 : f32
    %590 = vector.shape_cast %589 : vector<1x512xi1> to vector<1x512xi1>
    %591 = vector.broadcast %590 : vector<1x512xi1> to vector<8x512xi1>
    %592 = vector.broadcast %cst_216 : f32 to vector<8x512xf32>
    %593 = arith.select %591, %584, %592 : vector<8x512xi1>, vector<8x512xf32>
    %c192_217 = arith.constant 192 : index
    %c0_218 = arith.constant 0 : index
    %594 = vector.load %arg13[%c192_217, %c0_218] : memref<200x512xf32, #tpu.memory_space<vmem>>, vector<8x512xf32>
    tpu.vector_store %arg13[%c192_217, %c0_218], %593 {strides = array<i32>} : memref<200x512xf32, #tpu.memory_space<vmem>>, vector<8x512xf32>,
    %c0_219 = arith.constant 0 : index
    %c0_220 = arith.constant 0 : index
    %595 = vector.load %arg7[%c0_219, %c0_220] : memref<8x200xf32, #tpu.memory_space<vmem>>, vector<8x200xf32>
    %c0_221 = arith.constant 0 : index
    %c0_222 = arith.constant 0 : index
    %596 = vector.load %arg13[%c0_221, %c0_222] : memref<200x512xf32, #tpu.memory_space<vmem>>, vector<200x512xf32>
    %cst_223 = arith.constant dense<0.000000e+00> : vector<8x512xf32>
    %597 = tpu.matmul %595, %596, %cst_223 {dimension_numbers = #tpu.dot_dimension_numbers<[1], [0], [0], [1], [0, 0, 1, 1], [], []>} : vector<8x200xf32>, vector<200x512xf32>, vector<8x512xf32> -> vector<8x512xf32>
    %c0_224 = arith.constant 0 : index
    %c0_225 = arith.constant 0 : index
    %598 = vector.load %arg8[%c0_224, %c0_225] : memref<8x1xf32, #tpu.memory_space<vmem>>, vector<8x1xf32>
    %599 = vector.broadcast %598 : vector<8x1xf32> to vector<8x512xf32>
    %600 = arith.addf %597, %599 : vector<8x512xf32>
    %cst_226 = arith.constant 0.000000e+00 : f32
    %601 = vector.broadcast %cst_226 : f32 to vector<8x512xf32>
    %602 = arith.maximumf %600, %601 : vector<8x512xf32>
    %c0_227 = arith.constant 0 : index
    %c0_228 = arith.constant 0 : index
    %603 = vector.load %arg6[%c0_227, %c0_228] : memref<2x512xi32, #tpu.memory_space<vmem>>, vector<1x512xi32>
    %c1_229 = arith.constant 1 : index
    %c0_230 = arith.constant 0 : index
    %604 = vector.load %arg6[%c1_229, %c0_230] : memref<2x512xi32, #tpu.memory_space<vmem>>, vector<1x512xi32>
    %605 = vector.extract_strided_slice %602 {offsets = [0, 495], sizes = [8, 17], strides = [1, 1]} : vector<8x512xf32> to vector<8x17xf32>
    %606 = vector.extract_strided_slice %602 {offsets = [0, 0], sizes = [8, 495], strides = [1, 1]} : vector<8x512xf32> to vector<8x495xf32>
    %607 = tpu.concatenate %605, %606 in 1 : vector<8x17xf32>, vector<8x495xf32> -> vector<8x512xf32>
    %c1_i32_231 = arith.constant 1 : i32
    %608 = vector.broadcast %c1_i32_231 : i32 to vector<1x512xi32>
    %609 = arith.cmpi sge, %603, %608 : vector<1x512xi32>
    %c1_i32_232 = arith.constant 1 : i32
    %610 = vector.broadcast %c1_i32_232 : i32 to vector<1x512xi32>
    %611 = arith.cmpi sge, %604, %610 : vector<1x512xi32>
    %612 = arith.andi %609, %611 : vector<1x512xi1>
    %cst_233 = arith.constant 0.000000e+00 : f32
    %613 = vector.shape_cast %612 : vector<1x512xi1> to vector<1x512xi1>
    %614 = vector.broadcast %613 : vector<1x512xi1> to vector<8x512xi1>
    %615 = vector.broadcast %cst_233 : f32 to vector<8x512xf32>
    %616 = arith.select %614, %607, %615 : vector<8x512xi1>, vector<8x512xf32>
    %c0_234 = arith.constant 0 : index
    %c0_235 = arith.constant 0 : index
    %617 = vector.load %arg13[%c0_234, %c0_235] : memref<200x512xf32, #tpu.memory_space<vmem>>, vector<8x512xf32>
    tpu.vector_store %arg13[%c0_234, %c0_235], %616 {strides = array<i32>} : memref<200x512xf32, #tpu.memory_space<vmem>>, vector<8x512xf32>,
    %618 = vector.extract_strided_slice %602 {offsets = [0, 496], sizes = [8, 16], strides = [1, 1]} : vector<8x512xf32> to vector<8x16xf32>
    %619 = vector.extract_strided_slice %602 {offsets = [0, 0], sizes = [8, 496], strides = [1, 1]} : vector<8x512xf32> to vector<8x496xf32>
    %620 = tpu.concatenate %618, %619 in 1 : vector<8x16xf32>, vector<8x496xf32> -> vector<8x512xf32>
    %c1_i32_236 = arith.constant 1 : i32
    %621 = vector.broadcast %c1_i32_236 : i32 to vector<1x512xi32>
    %622 = arith.cmpi sge, %603, %621 : vector<1x512xi32>
    %cst_237 = arith.constant 0.000000e+00 : f32
    %623 = vector.shape_cast %622 : vector<1x512xi1> to vector<1x512xi1>
    %624 = vector.broadcast %623 : vector<1x512xi1> to vector<8x512xi1>
    %625 = vector.broadcast %cst_237 : f32 to vector<8x512xf32>
    %626 = arith.select %624, %620, %625 : vector<8x512xi1>, vector<8x512xf32>
    %c8_238 = arith.constant 8 : index
    %c0_239 = arith.constant 0 : index
    %627 = vector.load %arg13[%c8_238, %c0_239] : memref<200x512xf32, #tpu.memory_space<vmem>>, vector<8x512xf32>
    tpu.vector_store %arg13[%c8_238, %c0_239], %626 {strides = array<i32>} : memref<200x512xf32, #tpu.memory_space<vmem>>, vector<8x512xf32>,
    %628 = vector.extract_strided_slice %602 {offsets = [0, 497], sizes = [8, 15], strides = [1, 1]} : vector<8x512xf32> to vector<8x15xf32>
    %629 = vector.extract_strided_slice %602 {offsets = [0, 0], sizes = [8, 497], strides = [1, 1]} : vector<8x512xf32> to vector<8x497xf32>
    %630 = tpu.concatenate %628, %629 in 1 : vector<8x15xf32>, vector<8x497xf32> -> vector<8x512xf32>
    %c1_i32_240 = arith.constant 1 : i32
    %631 = vector.broadcast %c1_i32_240 : i32 to vector<1x512xi32>
    %632 = arith.cmpi sge, %603, %631 : vector<1x512xi32>
    %c15_i32_241 = arith.constant 15 : i32
    %633 = vector.broadcast %c15_i32_241 : i32 to vector<1x512xi32>
    %634 = arith.cmpi slt, %604, %633 : vector<1x512xi32>
    %635 = arith.andi %632, %634 : vector<1x512xi1>
    %cst_242 = arith.constant 0.000000e+00 : f32
    %636 = vector.shape_cast %635 : vector<1x512xi1> to vector<1x512xi1>
    %637 = vector.broadcast %636 : vector<1x512xi1> to vector<8x512xi1>
    %638 = vector.broadcast %cst_242 : f32 to vector<8x512xf32>
    %639 = arith.select %637, %630, %638 : vector<8x512xi1>, vector<8x512xf32>
    %c16_243 = arith.constant 16 : index
    %c0_244 = arith.constant 0 : index
    %640 = vector.load %arg13[%c16_243, %c0_244] : memref<200x512xf32, #tpu.memory_space<vmem>>, vector<8x512xf32>
    tpu.vector_store %arg13[%c16_243, %c0_244], %639 {strides = array<i32>} : memref<200x512xf32, #tpu.memory_space<vmem>>, vector<8x512xf32>,
    %641 = vector.extract_strided_slice %602 {offsets = [0, 511], sizes = [8, 1], strides = [1, 1]} : vector<8x512xf32> to vector<8x1xf32>
    %642 = vector.extract_strided_slice %602 {offsets = [0, 0], sizes = [8, 511], strides = [1, 1]} : vector<8x512xf32> to vector<8x511xf32>
    %643 = tpu.concatenate %641, %642 in 1 : vector<8x1xf32>, vector<8x511xf32> -> vector<8x512xf32>
    %c1_i32_245 = arith.constant 1 : i32
    %644 = vector.broadcast %c1_i32_245 : i32 to vector<1x512xi32>
    %645 = arith.cmpi sge, %604, %644 : vector<1x512xi32>
    %cst_246 = arith.constant 0.000000e+00 : f32
    %646 = vector.shape_cast %645 : vector<1x512xi1> to vector<1x512xi1>
    %647 = vector.broadcast %646 : vector<1x512xi1> to vector<8x512xi1>
    %648 = vector.broadcast %cst_246 : f32 to vector<8x512xf32>
    %649 = arith.select %647, %643, %648 : vector<8x512xi1>, vector<8x512xf32>
    %c24_247 = arith.constant 24 : index
    %c0_248 = arith.constant 0 : index
    %650 = vector.load %arg13[%c24_247, %c0_248] : memref<200x512xf32, #tpu.memory_space<vmem>>, vector<8x512xf32>
    tpu.vector_store %arg13[%c24_247, %c0_248], %649 {strides = array<i32>} : memref<200x512xf32, #tpu.memory_space<vmem>>, vector<8x512xf32>,
    %c32_249 = arith.constant 32 : index
    %c0_250 = arith.constant 0 : index
    %651 = vector.load %arg13[%c32_249, %c0_250] : memref<200x512xf32, #tpu.memory_space<vmem>>, vector<8x512xf32>
    tpu.vector_store %arg13[%c32_249, %c0_250], %602 {strides = array<i32>} : memref<200x512xf32, #tpu.memory_space<vmem>>, vector<8x512xf32>,
    %652 = vector.extract_strided_slice %602 {offsets = [0, 1], sizes = [8, 511], strides = [1, 1]} : vector<8x512xf32> to vector<8x511xf32>
    %653 = vector.extract_strided_slice %602 {offsets = [0, 0], sizes = [8, 1], strides = [1, 1]} : vector<8x512xf32> to vector<8x1xf32>
    %654 = tpu.concatenate %652, %653 in 1 : vector<8x511xf32>, vector<8x1xf32> -> vector<8x512xf32>
    %c15_i32_251 = arith.constant 15 : i32
    %655 = vector.broadcast %c15_i32_251 : i32 to vector<1x512xi32>
    %656 = arith.cmpi slt, %604, %655 : vector<1x512xi32>
    %cst_252 = arith.constant 0.000000e+00 : f32
    %657 = vector.shape_cast %656 : vector<1x512xi1> to vector<1x512xi1>
    %658 = vector.broadcast %657 : vector<1x512xi1> to vector<8x512xi1>
    %659 = vector.broadcast %cst_252 : f32 to vector<8x512xf32>
    %660 = arith.select %658, %654, %659 : vector<8x512xi1>, vector<8x512xf32>
    %c40_253 = arith.constant 40 : index
    %c0_254 = arith.constant 0 : index
    %661 = vector.load %arg13[%c40_253, %c0_254] : memref<200x512xf32, #tpu.memory_space<vmem>>, vector<8x512xf32>
    tpu.vector_store %arg13[%c40_253, %c0_254], %660 {strides = array<i32>} : memref<200x512xf32, #tpu.memory_space<vmem>>, vector<8x512xf32>,
    %662 = vector.extract_strided_slice %602 {offsets = [0, 15], sizes = [8, 497], strides = [1, 1]} : vector<8x512xf32> to vector<8x497xf32>
    %663 = vector.extract_strided_slice %602 {offsets = [0, 0], sizes = [8, 15], strides = [1, 1]} : vector<8x512xf32> to vector<8x15xf32>
    %664 = tpu.concatenate %662, %663 in 1 : vector<8x497xf32>, vector<8x15xf32> -> vector<8x512xf32>
    %c15_i32_255 = arith.constant 15 : i32
    %665 = vector.broadcast %c15_i32_255 : i32 to vector<1x512xi32>
    %666 = arith.cmpi slt, %603, %665 : vector<1x512xi32>
    %c1_i32_256 = arith.constant 1 : i32
    %667 = vector.broadcast %c1_i32_256 : i32 to vector<1x512xi32>
    %668 = arith.cmpi sge, %604, %667 : vector<1x512xi32>
    %669 = arith.andi %666, %668 : vector<1x512xi1>
    %cst_257 = arith.constant 0.000000e+00 : f32
    %670 = vector.shape_cast %669 : vector<1x512xi1> to vector<1x512xi1>
    %671 = vector.broadcast %670 : vector<1x512xi1> to vector<8x512xi1>
    %672 = vector.broadcast %cst_257 : f32 to vector<8x512xf32>
    %673 = arith.select %671, %664, %672 : vector<8x512xi1>, vector<8x512xf32>
    %c48_258 = arith.constant 48 : index
    %c0_259 = arith.constant 0 : index
    %674 = vector.load %arg13[%c48_258, %c0_259] : memref<200x512xf32, #tpu.memory_space<vmem>>, vector<8x512xf32>
    tpu.vector_store %arg13[%c48_258, %c0_259], %673 {strides = array<i32>} : memref<200x512xf32, #tpu.memory_space<vmem>>, vector<8x512xf32>,
    %675 = vector.extract_strided_slice %602 {offsets = [0, 16], sizes = [8, 496], strides = [1, 1]} : vector<8x512xf32> to vector<8x496xf32>
    %676 = vector.extract_strided_slice %602 {offsets = [0, 0], sizes = [8, 16], strides = [1, 1]} : vector<8x512xf32> to vector<8x16xf32>
    %677 = tpu.concatenate %675, %676 in 1 : vector<8x496xf32>, vector<8x16xf32> -> vector<8x512xf32>
    %c15_i32_260 = arith.constant 15 : i32
    %678 = vector.broadcast %c15_i32_260 : i32 to vector<1x512xi32>
    %679 = arith.cmpi slt, %603, %678 : vector<1x512xi32>
    %cst_261 = arith.constant 0.000000e+00 : f32
    %680 = vector.shape_cast %679 : vector<1x512xi1> to vector<1x512xi1>
    %681 = vector.broadcast %680 : vector<1x512xi1> to vector<8x512xi1>
    %682 = vector.broadcast %cst_261 : f32 to vector<8x512xf32>
    %683 = arith.select %681, %677, %682 : vector<8x512xi1>, vector<8x512xf32>
    %c56_262 = arith.constant 56 : index
    %c0_263 = arith.constant 0 : index
    %684 = vector.load %arg13[%c56_262, %c0_263] : memref<200x512xf32, #tpu.memory_space<vmem>>, vector<8x512xf32>
    tpu.vector_store %arg13[%c56_262, %c0_263], %683 {strides = array<i32>} : memref<200x512xf32, #tpu.memory_space<vmem>>, vector<8x512xf32>,
    %685 = vector.extract_strided_slice %602 {offsets = [0, 17], sizes = [8, 495], strides = [1, 1]} : vector<8x512xf32> to vector<8x495xf32>
    %686 = vector.extract_strided_slice %602 {offsets = [0, 0], sizes = [8, 17], strides = [1, 1]} : vector<8x512xf32> to vector<8x17xf32>
    %687 = tpu.concatenate %685, %686 in 1 : vector<8x495xf32>, vector<8x17xf32> -> vector<8x512xf32>
    %c15_i32_264 = arith.constant 15 : i32
    %688 = vector.broadcast %c15_i32_264 : i32 to vector<1x512xi32>
    %689 = arith.cmpi slt, %603, %688 : vector<1x512xi32>
    %c15_i32_265 = arith.constant 15 : i32
    %690 = vector.broadcast %c15_i32_265 : i32 to vector<1x512xi32>
    %691 = arith.cmpi slt, %604, %690 : vector<1x512xi32>
    %692 = arith.andi %689, %691 : vector<1x512xi1>
    %cst_266 = arith.constant 0.000000e+00 : f32
    %693 = vector.shape_cast %692 : vector<1x512xi1> to vector<1x512xi1>
    %694 = vector.broadcast %693 : vector<1x512xi1> to vector<8x512xi1>
    %695 = vector.broadcast %cst_266 : f32 to vector<8x512xf32>
    %696 = arith.select %694, %687, %695 : vector<8x512xi1>, vector<8x512xf32>
    %c64_267 = arith.constant 64 : index
    %c0_268 = arith.constant 0 : index
    %697 = vector.load %arg13[%c64_267, %c0_268] : memref<200x512xf32, #tpu.memory_space<vmem>>, vector<8x512xf32>
    tpu.vector_store %arg13[%c64_267, %c0_268], %696 {strides = array<i32>} : memref<200x512xf32, #tpu.memory_space<vmem>>, vector<8x512xf32>,
    %c0_269 = arith.constant 0 : index
    %c0_270 = arith.constant 0 : index
    %698 = vector.load %arg9[%c0_269, %c0_270] : memref<16x72xf32, #tpu.memory_space<vmem>>, vector<16x72xf32>
    %c0_271 = arith.constant 0 : index
    %c0_272 = arith.constant 0 : index
    %699 = vector.load %arg13[%c0_271, %c0_272] : memref<200x512xf32, #tpu.memory_space<vmem>>, vector<72x512xf32>
    %cst_273 = arith.constant dense<0.000000e+00> : vector<16x512xf32>
    %700 = tpu.matmul %698, %699, %cst_273 {dimension_numbers = #tpu.dot_dimension_numbers<[1], [0], [0], [1], [0, 0, 1, 1], [], []>} : vector<16x72xf32>, vector<72x512xf32>, vector<16x512xf32> -> vector<16x512xf32>
    %c0_274 = arith.constant 0 : index
    %c0_275 = arith.constant 0 : index
    %701 = vector.load %arg10[%c0_274, %c0_275] : memref<16x1xf32, #tpu.memory_space<vmem>>, vector<16x1xf32>
    %702 = vector.broadcast %701 : vector<16x1xf32> to vector<16x512xf32>
    %703 = arith.addf %700, %702 : vector<16x512xf32>
    %cst_276 = arith.constant 0.000000e+00 : f32
    %704 = vector.broadcast %cst_276 : f32 to vector<16x512xf32>
    %705 = arith.maximumf %703, %704 : vector<16x512xf32>
    %c0_277 = arith.constant 0 : index
    %c0_278 = arith.constant 0 : index
    %706 = vector.load %arg11[%c0_277, %c0_278] : memref<512x1024xf32, #tpu.memory_space<vmem>>, vector<512x1024xf32>
    %cst_279 = arith.constant dense<0.000000e+00> : vector<16x1024xf32>
    %707 = tpu.matmul %705, %706, %cst_279 {dimension_numbers = #tpu.dot_dimension_numbers<[1], [0], [0], [1], [0, 0, 1, 1], [], []>} : vector<16x512xf32>, vector<512x1024xf32>, vector<16x1024xf32> -> vector<16x1024xf32>
    %c0_280 = arith.constant 0 : index
    %c0_281 = arith.constant 0 : index
    %708 = vector.load %arg12[%c0_280, %c0_281] : memref<16x1024xf32, #tpu.memory_space<vmem>>, vector<16x1024xf32>
    tpu.vector_store %arg12[%c0_280, %c0_281], %707 {strides = array<i32>} : memref<16x1024xf32, #tpu.memory_space<vmem>>, vector<16x1024xf32>,
    return
  }
}

</mosaic_0001>

<llo_original>
// kernel: hyperpriori_decoder_forward.1
$region0: #{hyperpriori_decoder_forward.1}
  #allocation0 [shape = 'u32[]', space=smem, size = 0x4, offset = 0x4, fixed_abs, tag = 'smem constant byte address 0x4 - core index']
  #allocation1 [shape = 'u32[72,128]{1,0:T(1,128)}', space=vmem, size = 0x9000, scoped, tag = 'internal scratch']
  #allocation2 [shape = 'f32[200,512]{1,0:T(8,128)}', space=vmem, size = 0x64000, scoped, tag = 'scratch operand']
  %s0 = inlined_call_operand.vmem [shape: f32[8,32], index: 0, kind: input, shape index: {}]
  %s1 = inlined_call_operand.hbm [shape: f32[32,128], index: 1, kind: input, shape index: {}]
  %s2 = inlined_call_operand.hbm [shape: s32[2,128], index: 2, kind: input, shape index: {}]
  %s3 = inlined_call_operand.vmem [shape: f32[8,200], index: 3, kind: input, shape index: {}]
  %s4 = inlined_call_operand.vmem [shape: f32[8,1], index: 4, kind: input, shape index: {}]
  %s5 = inlined_call_operand.hbm [shape: f32[128,512], index: 5, kind: input, shape index: {}]
  %s6 = inlined_call_operand.hbm [shape: s32[2,512], index: 6, kind: input, shape index: {}]
  %s7 = inlined_call_operand.vmem [shape: f32[8,200], index: 7, kind: input, shape index: {}]
  %s8 = inlined_call_operand.vmem [shape: f32[8,1], index: 8, kind: input, shape index: {}]
  %s9 = inlined_call_operand.vmem [shape: f32[16,72], index: 9, kind: input, shape index: {}]
  %s10 = inlined_call_operand.vmem [shape: f32[16,1], index: 10, kind: input, shape index: {}]
  %s11 = inlined_call_operand.hbm [shape: f32[512,1024], index: 11, kind: input, shape index: {}]
  %s12 = inlined_call_operand.vmem [shape: f32[16,1024], index: 12, kind: output, shape index: {}]
  %s13 = sld [smem:[#allocation0]]
  $region78: #{hyperpriori_decoder_forward.1} parent=0
    _
  %s15 = ssub.s32 1, %s13
  %s16 = scalar_select 0, %s15, %s13
  $region1: #{hyperpriori_decoder_forward.1} parent=0
    #allocation3 [shape = 'u8[16384]{0}', space=vmem, size = 0x4000, scoped, tag = 'input window, operand 1, single buffered']
    #allocation4 [shape = 's32[1]{0}', space=sflag, size = 0x4, scoped, tag = 'scoped memory for hyperpriori_decoder_forward.1']
    #allocation5 [shape = 'u8[1024]{0}', space=vmem, size = 0x400, scoped, tag = 'input window, operand 2, single buffered']
    #allocation6 [shape = 's32[1]{0}', space=sflag, size = 0x4, scoped, tag = 'scoped memory for hyperpriori_decoder_forward.1']
    #allocation7 [shape = 'u8[262144]{0}', space=vmem, size = 0x40000, scoped, tag = 'input window, operand 5, single buffered']
    #allocation8 [shape = 'u8[4096]{0}', space=vmem, size = 0x1000, scoped, tag = 'input window, operand 6, single buffered']
    #allocation9 [shape = 's32[1]{0}', space=sflag, size = 0x4, scoped, tag = 'scoped memory for hyperpriori_decoder_forward.1']
    #allocation10 [shape = 'u8[2097152]{0}', space=vmem, size = 0x200000, scoped, tag = 'input window, operand 11, single buffered']
    %17 = vsyncpa [#allocation4], 0
    %18 = vsyncpa [#allocation6], 0
    %19 = vsyncpa [#allocation9], 0
    // Predicated region
    $region2: #{hyperpriori_decoder_forward.1} parent=1 // pred_check
      _
    $region3: #{hyperpriori_decoder_forward.1} parent=1 // pred_check_branch
      %21 = sbr.rel (0) target = $region5
    $region4: #{hyperpriori_decoder_forward.1} parent=1 // pred_region
      _
    $region5: #{hyperpriori_decoder_forward.1} parent=1 // pred_fallthru
      _
    // Predicated region
    $region6: #{hyperpriori_decoder_forward.1} parent=1 // pred_check
      _
    $region7: #{hyperpriori_decoder_forward.1} parent=1 // pred_check_branch
      %23 = sbr.rel (0) target = $region9
    $region8: #{hyperpriori_decoder_forward.1} parent=1 // pred_region
      %25 = vsyncadd [#allocation4], 0
      %s26 = sshll.u32 %s1, 4
      %s27 = int_to_ptr.hbm [resolvable:$true] %s26
      %s28 = sshll.u32 [#allocation3], 4
      %s29 = int_to_ptr.vmem [resolvable:$true] %s28
      %34 = dma.hbm_to_vmem [thread:$0]  %s27, 512, %s29, [#allocation4], 128, 128, 8
    $region9: #{hyperpriori_decoder_forward.1} parent=1 // pred_fallthru
      _
    // Predicated region
    $region10: #{hyperpriori_decoder_forward.1} parent=1 // pred_check
      _
    $region11: #{hyperpriori_decoder_forward.1} parent=1 // pred_check_branch
      %36 = sbr.rel (0) target = $region13
    $region12: #{hyperpriori_decoder_forward.1} parent=1 // pred_region
      %38 = vsyncadd [#allocation6], 0
      %s40 = sshll.u32 %s2, 4
      %s41 = int_to_ptr.hbm [resolvable:$true] %s40
      %s42 = sshll.u32 [#allocation5], 4
      %s43 = int_to_ptr.vmem [resolvable:$true] %s42
      %45 = dma.hbm_to_vmem [thread:$0]  %s41, 32, %s43, [#allocation6]
    $region13: #{hyperpriori_decoder_forward.1} parent=1 // pred_fallthru
      _
    // Predicated region
    $region14: #{hyperpriori_decoder_forward.1} parent=1 // pred_check
      _
    $region15: #{hyperpriori_decoder_forward.1} parent=1 // pred_check_branch
      %47 = sbr.rel (0) target = $region17
    $region16: #{hyperpriori_decoder_forward.1} parent=1 // pred_region
      _
    $region17: #{hyperpriori_decoder_forward.1} parent=1 // pred_fallthru
      _
    // Predicated region
    $region18: #{hyperpriori_decoder_forward.1} parent=1 // pred_check
      _
    $region19: #{hyperpriori_decoder_forward.1} parent=1 // pred_check_branch
      %49 = sbr.rel (0) target = $region21
    $region20: #{hyperpriori_decoder_forward.1} parent=1 // pred_region
      _
    $region21: #{hyperpriori_decoder_forward.1} parent=1 // pred_fallthru
      _
    // Predicated region
    $region22: #{hyperpriori_decoder_forward.1} parent=1 // pred_check
      _
    $region23: #{hyperpriori_decoder_forward.1} parent=1 // pred_check_branch
      %51 = sbr.rel (0) target = $region25
    $region24: #{hyperpriori_decoder_forward.1} parent=1 // pred_region
      %53 = vsyncadd [#allocation6], 0
      %s54 = sshll.u32 %s5, 4
      %s55 = int_to_ptr.hbm [resolvable:$true] %s54
      %s56 = sshll.u32 [#allocation7], 4
      %s57 = int_to_ptr.vmem [resolvable:$true] %s56
      %62 = dma.hbm_to_vmem [thread:$0]  %s55, 8192, %s57, [#allocation6], 512, 512, 32
    $region25: #{hyperpriori_decoder_forward.1} parent=1 // pred_fallthru
      _
    // Predicated region
    $region26: #{hyperpriori_decoder_forward.1} parent=1 // pred_check
      _
    $region27: #{hyperpriori_decoder_forward.1} parent=1 // pred_check_branch
      %64 = sbr.rel (0) target = $region29
    $region28: #{hyperpriori_decoder_forward.1} parent=1 // pred_region
      %66 = vsyncadd [#allocation9], 0
      %s68 = sshll.u32 %s6, 4
      %s69 = int_to_ptr.hbm [resolvable:$true] %s68
      %s70 = sshll.u32 [#allocation8], 4
      %s71 = int_to_ptr.vmem [resolvable:$true] %s70
      %73 = dma.hbm_to_vmem [thread:$0]  %s69, 128, %s71, [#allocation9]
    $region29: #{hyperpriori_decoder_forward.1} parent=1 // pred_fallthru
      _
    // Predicated region
    $region30: #{hyperpriori_decoder_forward.1} parent=1 // pred_check
      _
    $region31: #{hyperpriori_decoder_forward.1} parent=1 // pred_check_branch
      %75 = sbr.rel (0) target = $region33
    $region32: #{hyperpriori_decoder_forward.1} parent=1 // pred_region
      _
    $region33: #{hyperpriori_decoder_forward.1} parent=1 // pred_fallthru
      _
    // Predicated region
    $region34: #{hyperpriori_decoder_forward.1} parent=1 // pred_check
      _
    $region35: #{hyperpriori_decoder_forward.1} parent=1 // pred_check_branch
      %77 = sbr.rel (0) target = $region37
    $region36: #{hyperpriori_decoder_forward.1} parent=1 // pred_region
      _
    $region37: #{hyperpriori_decoder_forward.1} parent=1 // pred_fallthru
      _
    // Predicated region
    $region38: #{hyperpriori_decoder_forward.1} parent=1 // pred_check
      _
    $region39: #{hyperpriori_decoder_forward.1} parent=1 // pred_check_branch
      %79 = sbr.rel (0) target = $region41
    $region40: #{hyperpriori_decoder_forward.1} parent=1 // pred_region
      _
    $region41: #{hyperpriori_decoder_forward.1} parent=1 // pred_fallthru
      _
    // Predicated region
    $region42: #{hyperpriori_decoder_forward.1} parent=1 // pred_check
      _
    $region43: #{hyperpriori_decoder_forward.1} parent=1 // pred_check_branch
      %81 = sbr.rel (0) target = $region45
    $region44: #{hyperpriori_decoder_forward.1} parent=1 // pred_region
      _
    $region45: #{hyperpriori_decoder_forward.1} parent=1 // pred_fallthru
      _
    // Predicated region
    $region46: #{hyperpriori_decoder_forward.1} parent=1 // pred_check
      _
    $region47: #{hyperpriori_decoder_forward.1} parent=1 // pred_check_branch
      %83 = sbr.rel (0) target = $region49
    $region48: #{hyperpriori_decoder_forward.1} parent=1 // pred_region
      %85 = vsyncadd [#allocation9], 0
      %s86 = sshll.u32 %s11, 4
      %s87 = int_to_ptr.hbm [resolvable:$true] %s86
      %s88 = sshll.u32 [#allocation10], 4
      %s89 = int_to_ptr.vmem [resolvable:$true] %s88
      %94 = dma.hbm_to_vmem [thread:$0]  %s87, 65536, %s89, [#allocation9], 1024, 1024, 64
    $region49: #{hyperpriori_decoder_forward.1} parent=1 // pred_fallthru
      _
    // Predicated region
    $region50: #{hyperpriori_decoder_forward.1} parent=1 // pred_check
      _
    $region51: #{hyperpriori_decoder_forward.1} parent=1 // pred_check_branch
      %96 = sbr.rel (0) target = $region53
    $region52: #{hyperpriori_decoder_forward.1} parent=1 // pred_region
      %98 = dma.done [#allocation4], 512
    $region53: #{hyperpriori_decoder_forward.1} parent=1 // pred_fallthru
      _
    // Predicated region
    $region54: #{hyperpriori_decoder_forward.1} parent=1 // pred_check
      _
    $region55: #{hyperpriori_decoder_forward.1} parent=1 // pred_check_branch
      %100 = sbr.rel (0) target = $region57
    $region56: #{hyperpriori_decoder_forward.1} parent=1 // pred_region
      %102 = dma.done [#allocation6], 32
    $region57: #{hyperpriori_decoder_forward.1} parent=1 // pred_fallthru
      _
    // Predicated region
    $region58: #{hyperpriori_decoder_forward.1} parent=1 // pred_check
      _
    $region59: #{hyperpriori_decoder_forward.1} parent=1 // pred_check_branch
      %104 = sbr.rel (0) target = $region61
    $region60: #{hyperpriori_decoder_forward.1} parent=1 // pred_region
      %106 = dma.done [#allocation6], 8192
    $region61: #{hyperpriori_decoder_forward.1} parent=1 // pred_fallthru
      _
    // Predicated region
    $region62: #{hyperpriori_decoder_forward.1} parent=1 // pred_check
      _
    $region63: #{hyperpriori_decoder_forward.1} parent=1 // pred_check_branch
      %108 = sbr.rel (0) target = $region65
    $region64: #{hyperpriori_decoder_forward.1} parent=1 // pred_region
      %110 = dma.done [#allocation9], 128
    $region65: #{hyperpriori_decoder_forward.1} parent=1 // pred_fallthru
      _
    // Predicated region
    $region66: #{hyperpriori_decoder_forward.1} parent=1 // pred_check
      _
    $region67: #{hyperpriori_decoder_forward.1} parent=1 // pred_check_branch
      %112 = sbr.rel (0) target = $region69
    $region68: #{hyperpriori_decoder_forward.1} parent=1 // pred_region
      %114 = dma.done [#allocation9], 65536
    $region69: #{hyperpriori_decoder_forward.1} parent=1 // pred_fallthru
      _
    %v115 = vld [vmem:[%s0] sm:$0xff]
    %v116 = vld [vmem:[#allocation3] sm:$0xff]
    %v117 = vld [vmem:[#allocation3 + $0x8] sm:$0xff]
    %v118 = vld [vmem:[#allocation3 + $0x10] sm:$0xff]
    %v119 = vld [vmem:[#allocation3 + $0x18] sm:$0xff]
    %vm120 = vcmask 261120
    %v122 = vsel %vm120, %v115, 0
    %124 = vmatpush.msra.mxu0 0.0
    %125 = vmatpush.msra.mxu0 0.0
    %126 = vmatpush.msra.mxu0 0.0
    %127 = vmatpush.msra.mxu0 0.0
    %128 = vmatpush.msra.mxu0 0.0
    %129 = vmatpush.msra.mxu0 0.0
    %130 = vmatpush.msra.mxu0 0.0
    %131 = vmatpush.msra.mxu0 0.0
    %132 = vmatpush.msra.mxu0 0.0
    %133 = vmatpush.msra.mxu0 0.0
    %134 = vmatpush.msra.mxu0 0.0
    %135 = vmatpush.msra.mxu0 0.0
    %136 = vmatpush.msra.mxu0 %v119
    %137 = vmatpush.msra.mxu0 %v118
    %138 = vmatpush.msra.mxu0 %v117
    %139 = vmatpush.msra.mxu0 %v116
    %140 = vmatmul.f32.gmra.mxu0 %v122
    %v141 = vpop.f32.mrf.mxu0
    %v142 = vadd.f32 0.0, %v141
    %143 = vdwg.mxu0
    %v144 = vld [vmem:[#allocation5] sm:$0x1]
    %v145 = vld [vmem:[#allocation5 + $0x1] sm:$0x1]
    %147 = vrot.lane.b32.xlu0 %v142, 110
    %v148 = vpop.permute.xlu0 %147
    %vm150 = vcmask 900096
    %vm151 = vcmp.lt.s32.totalorder %v144, 6
    %vm152 = vcmp.lt.s32.totalorder %v145, 6
    %vm153 = vmand %vm151, %vm152
    %v154 = vsel %vm153, 1, 0
    %v155 = vperm.slane %v154, 0
    %vm156 = vcmp.eq.s32.totalorder %v155, 1
    %v157 = vsel %vm156, %v148, 0.0
    %158 = vst [vmem:[#allocation2] sm:$0xff] %v157
    %159 = vrot.lane.b32.xlu0 %v142, 111
    %v160 = vpop.permute.xlu0 %159
    %vm162 = vcmask 908288
    %vm163 = vcmp.lt.s32.totalorder %v145, 7
    %vm164 = vmand %vm151, %vm163
    %v165 = vsel %vm164, 1, 0
    %v166 = vperm.slane %v165, 0
    %vm167 = vcmp.eq.s32.totalorder %v166, 1
    %v168 = vsel %vm167, %v160, 0.0
    %169 = vst [vmem:[#allocation2 + $0x20] sm:$0xff] %v168
    %170 = vrot.lane.b32.xlu0 %v142, 112
    %v171 = vpop.permute.xlu0 %170
    %vm173 = vcmask 916480
    %v174 = vsel %vm151, 1, 0
    %v175 = vperm.slane %v174, 0
    %vm176 = vcmp.eq.s32.totalorder %v175, 1
    %v177 = vsel %vm176, %v171, 0.0
    %178 = vst [vmem:[#allocation2 + $0x40] sm:$0xff] %v177
    %179 = vrot.lane.b32.xlu0 %v142, 113
    %v180 = vpop.permute.xlu0 %179
    %vm182 = vcmask 924672
    %vm183 = vcmp.ge.s32.totalorder %v145, 1
    %vm184 = vmand %vm151, %vm183
    %v185 = vsel %vm184, 1, 0
    %v186 = vperm.slane %v185, 0
    %vm187 = vcmp.eq.s32.totalorder %v186, 1
    %v188 = vsel %vm187, %v180, 0.0
    %189 = vst [vmem:[#allocation2 + $0x60] sm:$0xff] %v188
    %190 = vrot.lane.b32.xlu0 %v142, 114
    %v191 = vpop.permute.xlu0 %190
    %vm193 = vcmask 932864
    %vm194 = vcmp.ge.s32.totalorder %v145, 2
    %vm195 = vmand %vm151, %vm194
    %v196 = vsel %vm195, 1, 0
    %v197 = vperm.slane %v196, 0
    %vm198 = vcmp.eq.s32.totalorder %v197, 1
    %v199 = vsel %vm198, %v191, 0.0
    %200 = vst [vmem:[#allocation2 + $0x80] sm:$0xff] %v199
    %201 = vrot.lane.b32.xlu0 %v142, 118
    %v202 = vpop.permute.xlu0 %201
    %vm204 = vcmp.lt.s32.totalorder %v144, 7
    %vm205 = vmand %vm204, %vm152
    %v206 = vsel %vm205, 1, 0
    %v207 = vperm.slane %v206, 0
    %vm208 = vcmp.eq.s32.totalorder %v207, 1
    %v209 = vsel %vm208, %v202, 0.0
    %210 = vst [vmem:[#allocation2 + $0xa0] sm:$0xff] %v209
    %211 = vrot.lane.b32.xlu0 %v142, 119
    %v212 = vpop.permute.xlu0 %211
    %vm214 = vmand %vm204, %vm163
    %v215 = vsel %vm214, 1, 0
    %v216 = vperm.slane %v215, 0
    %vm217 = vcmp.eq.s32.totalorder %v216, 1
    %v218 = vsel %vm217, %v212, 0.0
    %219 = vst [vmem:[#allocation2 + $0xc0] sm:$0xff] %v218
    %220 = vrot.lane.b32.xlu0 %v142, 120
    %v221 = vpop.permute.xlu0 %220
    %v223 = vsel %vm204, 1, 0
    %v224 = vperm.slane %v223, 0
    %vm225 = vcmp.eq.s32.totalorder %v224, 1
    %v226 = vsel %vm225, %v221, 0.0
    %227 = vst [vmem:[#allocation2 + $0xe0] sm:$0xff] %v226
    %228 = vrot.lane.b32.xlu0 %v142, 121
    %v229 = vpop.permute.xlu0 %228
    %vm231 = vmand %vm204, %vm183
    %v232 = vsel %vm231, 1, 0
    %v233 = vperm.slane %v232, 0
    %vm234 = vcmp.eq.s32.totalorder %v233, 1
    %v235 = vsel %vm234, %v229, 0.0
    %236 = vst [vmem:[#allocation2 + $0x100] sm:$0xff] %v235
    %237 = vrot.lane.b32.xlu0 %v142, 122
    %v238 = vpop.permute.xlu0 %237
    %vm240 = vmand %vm204, %vm194
    %v241 = vsel %vm240, 1, 0
    %v242 = vperm.slane %v241, 0
    %vm243 = vcmp.eq.s32.totalorder %v242, 1
    %v244 = vsel %vm243, %v238, 0.0
    %245 = vst [vmem:[#allocation2 + $0x120] sm:$0xff] %v244
    %246 = vrot.lane.b32.xlu0 %v142, 126
    %v247 = vpop.permute.xlu0 %246
    %vm249 = vcmask 1031168
    %v250 = vsel %vm152, 1, 0
    %v251 = vperm.slane %v250, 0
    %vm252 = vcmp.eq.s32.totalorder %v251, 1
    %v253 = vsel %vm252, %v247, 0.0
    %254 = vst [vmem:[#allocation2 + $0x140] sm:$0xff] %v253
    %255 = vrot.lane.b32.xlu0 %v142, 127
    %v256 = vpop.permute.xlu0 %255
    %vm258 = vcmask 1039360
    %v259 = vsel %vm163, 1, 0
    %v260 = vperm.slane %v259, 0
    %vm261 = vcmp.eq.s32.totalorder %v260, 1
    %v262 = vsel %vm261, %v256, 0.0
    %263 = vst [vmem:[#allocation2 + $0x160] sm:$0xff] %v262
    %264 = vst [vmem:[#allocation2 + $0x180] sm:$0xff] %v142
    %265 = vrot.lane.b32.xlu0 %v142, 1
    %v266 = vpop.permute.xlu0 %265
    %vm268 = vcmask 7168
    %v269 = vsel %vm183, 1, 0
    %v270 = vperm.slane %v269, 0
    %vm271 = vcmp.eq.s32.totalorder %v270, 1
    %v272 = vsel %vm271, %v266, 0.0
    %273 = vst [vmem:[#allocation2 + $0x1a0] sm:$0xff] %v272
    %274 = vrot.lane.b32.xlu0 %v142, 2
    %v275 = vpop.permute.xlu0 %274
    %vm277 = vcmask 15360
    %v278 = vsel %vm194, 1, 0
    %v279 = vperm.slane %v278, 0
    %vm280 = vcmp.eq.s32.totalorder %v279, 1
    %v281 = vsel %vm280, %v275, 0.0
    %282 = vst [vmem:[#allocation2 + $0x1c0] sm:$0xff] %v281
    %283 = vrot.lane.b32.xlu0 %v142, 6
    %v284 = vpop.permute.xlu0 %283
    %vm286 = vcmp.ge.s32.totalorder %v144, 1
    %vm287 = vmand %vm286, %vm152
    %v288 = vsel %vm287, 1, 0
    %v289 = vperm.slane %v288, 0
    %vm290 = vcmp.eq.s32.totalorder %v289, 1
    %v291 = vsel %vm290, %v284, 0.0
    %292 = vst [vmem:[#allocation2 + $0x1e0] sm:$0xff] %v291
    %293 = vrot.lane.b32.xlu0 %v142, 7
    %v294 = vpop.permute.xlu0 %293
    %vm296 = vmand %vm286, %vm163
    %v297 = vsel %vm296, 1, 0
    %v298 = vperm.slane %v297, 0
    %vm299 = vcmp.eq.s32.totalorder %v298, 1
    %v300 = vsel %vm299, %v294, 0.0
    %301 = vst [vmem:[#allocation2 + $0x200] sm:$0xff] %v300
    %302 = vrot.lane.b32.xlu0 %v142, 8
    %v303 = vpop.permute.xlu0 %302
    %v305 = vsel %vm286, 1, 0
    %v306 = vperm.slane %v305, 0
    %vm307 = vcmp.eq.s32.totalorder %v306, 1
    %v308 = vsel %vm307, %v303, 0.0
    %309 = vst [vmem:[#allocation2 + $0x220] sm:$0xff] %v308
    %310 = vrot.lane.b32.xlu0 %v142, 9
    %v311 = vpop.permute.xlu0 %310
    %vm313 = vmand %vm286, %vm183
    %v314 = vsel %vm313, 1, 0
    %v315 = vperm.slane %v314, 0
    %vm316 = vcmp.eq.s32.totalorder %v315, 1
    %v317 = vsel %vm316, %v311, 0.0
    %318 = vst [vmem:[#allocation2 + $0x240] sm:$0xff] %v317
    %319 = vrot.lane.b32.xlu0 %v142, 10
    %v320 = vpop.permute.xlu0 %319
    %vm322 = vmand %vm286, %vm194
    %v323 = vsel %vm322, 1, 0
    %v324 = vperm.slane %v323, 0
    %vm325 = vcmp.eq.s32.totalorder %v324, 1
    %v326 = vsel %vm325, %v320, 0.0
    %327 = vst [vmem:[#allocation2 + $0x260] sm:$0xff] %v326
    %328 = vrot.lane.b32.xlu0 %v142, 14
    %v329 = vpop.permute.xlu0 %328
    %vm331 = vcmask 113664
    %vm332 = vcmp.ge.s32.totalorder %v144, 2
    %vm333 = vmand %vm332, %vm152
    %v334 = vsel %vm333, 1, 0
    %v335 = vperm.slane %v334, 0
    %vm336 = vcmp.eq.s32.totalorder %v335, 1
    %v337 = vsel %vm336, %v329, 0.0
    %338 = vst [vmem:[#allocation2 + $0x280] sm:$0xff] %v337
    %339 = vrot.lane.b32.xlu0 %v142, 15
    %v340 = vpop.permute.xlu0 %339
    %vm342 = vcmask 121856
    %vm343 = vmand %vm332, %vm163
    %v344 = vsel %vm343, 1, 0
    %v345 = vperm.slane %v344, 0
    %vm346 = vcmp.eq.s32.totalorder %v345, 1
    %v347 = vsel %vm346, %v340, 0.0
    %348 = vst [vmem:[#allocation2 + $0x2a0] sm:$0xff] %v347
    %349 = vrot.lane.b32.xlu0 %v142, 16
    %v350 = vpop.permute.xlu0 %349
    %vm352 = vcmask 130048
    %v353 = vsel %vm332, 1, 0
    %v354 = vperm.slane %v353, 0
    %vm355 = vcmp.eq.s32.totalorder %v354, 1
    %v356 = vsel %vm355, %v350, 0.0
    %357 = vst [vmem:[#allocation2 + $0x2c0] sm:$0xff] %v356
    %358 = vrot.lane.b32.xlu0 %v142, 17
    %v359 = vpop.permute.xlu0 %358
    %vm361 = vcmask 138240
    %vm362 = vmand %vm332, %vm183
    %v363 = vsel %vm362, 1, 0
    %v364 = vperm.slane %v363, 0
    %vm365 = vcmp.eq.s32.totalorder %v364, 1
    %v366 = vsel %vm365, %v359, 0.0
    %367 = vst [vmem:[#allocation2 + $0x2e0] sm:$0xff] %v366
    %368 = vrot.lane.b32.xlu0 %v142, 18
    %v369 = vpop.permute.xlu0 %368
    %vm371 = vcmask 146432
    %vm372 = vmand %vm332, %vm194
    %v373 = vsel %vm372, 1, 0
    %v374 = vperm.slane %v373, 0
    %vm375 = vcmp.eq.s32.totalorder %v374, 1
    %v376 = vsel %vm375, %v369, 0.0
    %377 = vst [vmem:[#allocation2 + $0x300] sm:$0xff] %v376
    %v378 = vld [vmem:[%s3] sm:$0xff]
    %v379 = vld [vmem:[%s3 + $0x8] sm:$0xff]
    %v380 = vld [vmem:[#allocation2] sm:$0xff]
    %v381 = vld [vmem:[#allocation2 + $0x20] sm:$0xff]
    %v382 = vld [vmem:[#allocation2 + $0x40] sm:$0xff]
    %v383 = vld [vmem:[#allocation2 + $0x60] sm:$0xff]
    %v384 = vld [vmem:[#allocation2 + $0x80] sm:$0xff]
    %v385 = vld [vmem:[#allocation2 + $0xa0] sm:$0xff]
    %v386 = vld [vmem:[#allocation2 + $0xc0] sm:$0xff]
    %v387 = vld [vmem:[#allocation2 + $0xe0] sm:$0xff]
    %v388 = vld [vmem:[#allocation2 + $0x100] sm:$0xff]
    %v389 = vld [vmem:[#allocation2 + $0x120] sm:$0xff]
    %v390 = vld [vmem:[#allocation2 + $0x140] sm:$0xff]
    %v391 = vld [vmem:[#allocation2 + $0x160] sm:$0xff]
    %v392 = vld [vmem:[#allocation2 + $0x180] sm:$0xff]
    %v393 = vld [vmem:[#allocation2 + $0x1a0] sm:$0xff]
    %v394 = vld [vmem:[#allocation2 + $0x1c0] sm:$0xff]
    %v395 = vld [vmem:[#allocation2 + $0x1e0] sm:$0xff]
    %v396 = vld [vmem:[#allocation2 + $0x200] sm:$0xff]
    %v397 = vld [vmem:[#allocation2 + $0x220] sm:$0xff]
    %v398 = vld [vmem:[#allocation2 + $0x240] sm:$0xff]
    %v399 = vld [vmem:[#allocation2 + $0x260] sm:$0xff]
    %v400 = vld [vmem:[#allocation2 + $0x280] sm:$0xff]
    %v401 = vld [vmem:[#allocation2 + $0x2a0] sm:$0xff]
    %v402 = vld [vmem:[#allocation2 + $0x2c0] sm:$0xff]
    %v403 = vld [vmem:[#allocation2 + $0x2e0] sm:$0xff]
    %v404 = vld [vmem:[#allocation2 + $0x300] sm:$0xff]
    %v405 = vld [vmem:[%s4] sm:$0xff]
    %407 = vset.pattern.permute.xlu0 0
    %408 = vperm.xlu0 %407, %v405
    %v409 = vpop.permute.xlu0 %408
    %vm411 = vcmask 588800
    %v413 = vsel %vm411, %v379, 0
    %415 = vmatpush.msra.mxu0 %v395
    %416 = vmatpush.msra.mxu0 %v394
    %417 = vmatpush.msra.mxu0 %v393
    %418 = vmatpush.msra.mxu0 %v392
    %419 = vmatpush.msra.mxu0 %v391
    %420 = vmatpush.msra.mxu0 %v390
    %421 = vmatpush.msra.mxu0 %v389
    %422 = vmatpush.msra.mxu0 %v388
    %423 = vmatpush.msra.mxu0 %v387
    %424 = vmatpush.msra.mxu0 %v386
    %425 = vmatpush.msra.mxu0 %v385
    %426 = vmatpush.msra.mxu0 %v384
    %427 = vmatpush.msra.mxu0 %v383
    %428 = vmatpush.msra.mxu0 %v382
    %429 = vmatpush.msra.mxu0 %v381
    %430 = vmatpush.msra.mxu0 %v380
    %431 = vmatmul.f32.gmra.mxu0 %v378
    %v432 = vpop.f32.mrf.mxu0
    %v433 = vadd.f32 %v409, %v432
    %434 = vdwg.mxu0
    %435 = vmatpush.msra.mxu0 0.0
    %436 = vmatpush.msra.mxu0 0.0
    %437 = vmatpush.msra.mxu0 0.0
    %438 = vmatpush.msra.mxu0 0.0
    %439 = vmatpush.msra.mxu0 0.0
    %440 = vmatpush.msra.mxu0 0.0
    %441 = vmatpush.msra.mxu0 0.0
    %442 = vmatpush.msra.mxu0 %v404
    %443 = vmatpush.msra.mxu0 %v403
    %444 = vmatpush.msra.mxu0 %v402
    %445 = vmatpush.msra.mxu0 %v401
    %446 = vmatpush.msra.mxu0 %v400
    %447 = vmatpush.msra.mxu0 %v399
    %448 = vmatpush.msra.mxu0 %v398
    %449 = vmatpush.msra.mxu0 %v397
    %450 = vmatpush.msra.mxu0 %v396
    %451 = vmatmul.f32.gmra.mxu0 %v413
    %v452 = vpop.f32.mrf.mxu0
    %v453 = vadd.f32 %v433, %v452
    %454 = vdwg.mxu0
    %v455 = vmax.f32 %v453, 0.0
    %v456 = vld [vmem:[#allocation7] sm:$0xff]
    %v457 = vld [vmem:[#allocation7 + $0x8] sm:$0xff]
    %v458 = vld [vmem:[#allocation7 + $0x10] sm:$0xff]
    %v459 = vld [vmem:[#allocation7 + $0x18] sm:$0xff]
    %v460 = vld [vmem:[#allocation7 + $0x20] sm:$0xff]
    %v461 = vld [vmem:[#allocation7 + $0x28] sm:$0xff]
    %v462 = vld [vmem:[#allocation7 + $0x30] sm:$0xff]
    %v463 = vld [vmem:[#allocation7 + $0x38] sm:$0xff]
    %v464 = vld [vmem:[#allocation7 + $0x40] sm:$0xff]
    %v465 = vld [vmem:[#allocation7 + $0x48] sm:$0xff]
    %v466 = vld [vmem:[#allocation7 + $0x50] sm:$0xff]
    %v467 = vld [vmem:[#allocation7 + $0x58] sm:$0xff]
    %v468 = vld [vmem:[#allocation7 + $0x60] sm:$0xff]
    %v469 = vld [vmem:[#allocation7 + $0x68] sm:$0xff]
    %v470 = vld [vmem:[#allocation7 + $0x70] sm:$0xff]
    %v471 = vld [vmem:[#allocation7 + $0x78] sm:$0xff]
    %v472 = vld [vmem:[#allocation7 + $0x80] sm:$0xff]
    %v473 = vld [vmem:[#allocation7 + $0x88] sm:$0xff]
    %v474 = vld [vmem:[#allocation7 + $0x90] sm:$0xff]
    %v475 = vld [vmem:[#allocation7 + $0x98] sm:$0xff]
    %v476 = vld [vmem:[#allocation7 + $0xa0] sm:$0xff]
    %v477 = vld [vmem:[#allocation7 + $0xa8] sm:$0xff]
    %v478 = vld [vmem:[#allocation7 + $0xb0] sm:$0xff]
    %v479 = vld [vmem:[#allocation7 + $0xb8] sm:$0xff]
    %v480 = vld [vmem:[#allocation7 + $0xc0] sm:$0xff]
    %v481 = vld [vmem:[#allocation7 + $0xc8] sm:$0xff]
    %v482 = vld [vmem:[#allocation7 + $0xd0] sm:$0xff]
    %v483 = vld [vmem:[#allocation7 + $0xd8] sm:$0xff]
    %v484 = vld [vmem:[#allocation7 + $0xe0] sm:$0xff]
    %v485 = vld [vmem:[#allocation7 + $0xe8] sm:$0xff]
    %v486 = vld [vmem:[#allocation7 + $0xf0] sm:$0xff]
    %v487 = vld [vmem:[#allocation7 + $0xf8] sm:$0xff]
    %v488 = vld [vmem:[#allocation7 + $0x100] sm:$0xff]
    %v489 = vld [vmem:[#allocation7 + $0x108] sm:$0xff]
    %v490 = vld [vmem:[#allocation7 + $0x110] sm:$0xff]
    %v491 = vld [vmem:[#allocation7 + $0x118] sm:$0xff]
    %v492 = vld [vmem:[#allocation7 + $0x120] sm:$0xff]
    %v493 = vld [vmem:[#allocation7 + $0x128] sm:$0xff]
    %v494 = vld [vmem:[#allocation7 + $0x130] sm:$0xff]
    %v495 = vld [vmem:[#allocation7 + $0x138] sm:$0xff]
    %v496 = vld [vmem:[#allocation7 + $0x140] sm:$0xff]
    %v497 = vld [vmem:[#allocation7 + $0x148] sm:$0xff]
    %v498 = vld [vmem:[#allocation7 + $0x150] sm:$0xff]
    %v499 = vld [vmem:[#allocation7 + $0x158] sm:$0xff]
    %v500 = vld [vmem:[#allocation7 + $0x160] sm:$0xff]
    %v501 = vld [vmem:[#allocation7 + $0x168] sm:$0xff]
    %v502 = vld [vmem:[#allocation7 + $0x170] sm:$0xff]
    %v503 = vld [vmem:[#allocation7 + $0x178] sm:$0xff]
    %v504 = vld [vmem:[#allocation7 + $0x180] sm:$0xff]
    %v505 = vld [vmem:[#allocation7 + $0x188] sm:$0xff]
    %v506 = vld [vmem:[#allocation7 + $0x190] sm:$0xff]
    %v507 = vld [vmem:[#allocation7 + $0x198] sm:$0xff]
    %v508 = vld [vmem:[#allocation7 + $0x1a0] sm:$0xff]
    %v509 = vld [vmem:[#allocation7 + $0x1a8] sm:$0xff]
    %v510 = vld [vmem:[#allocation7 + $0x1b0] sm:$0xff]
    %v511 = vld [vmem:[#allocation7 + $0x1b8] sm:$0xff]
    %v512 = vld [vmem:[#allocation7 + $0x1c0] sm:$0xff]
    %v513 = vld [vmem:[#allocation7 + $0x1c8] sm:$0xff]
    %v514 = vld [vmem:[#allocation7 + $0x1d0] sm:$0xff]
    %v515 = vld [vmem:[#allocation7 + $0x1d8] sm:$0xff]
    %v516 = vld [vmem:[#allocation7 + $0x1e0] sm:$0xff]
    %v517 = vld [vmem:[#allocation7 + $0x1e8] sm:$0xff]
    %v518 = vld [vmem:[#allocation7 + $0x1f0] sm:$0xff]
    %v519 = vld [vmem:[#allocation7 + $0x1f8] sm:$0xff]
    %520 = vmatpush.msra.mxu0 %v516
    %521 = vmatpush.msra.mxu0 %v512
    %522 = vmatpush.msra.mxu0 %v508
    %523 = vmatpush.msra.mxu0 %v504
    %524 = vmatpush.msra.mxu0 %v500
    %525 = vmatpush.msra.mxu0 %v496
    %526 = vmatpush.msra.mxu0 %v492
    %527 = vmatpush.msra.mxu0 %v488
    %528 = vmatpush.msra.mxu0 %v484
    %529 = vmatpush.msra.mxu0 %v480
    %530 = vmatpush.msra.mxu0 %v476
    %531 = vmatpush.msra.mxu0 %v472
    %532 = vmatpush.msra.mxu0 %v468
    %533 = vmatpush.msra.mxu0 %v464
    %534 = vmatpush.msra.mxu0 %v460
    %535 = vmatpush.msra.mxu0 %v456
    %536 = vmatmul.f32.gmra.mxu0 %v455
    %v537 = vpop.f32.mrf.mxu0
    %v538 = vadd.f32 0.0, %v537
    %539 = vdwg.mxu0
    %540 = vmatpush.msra.mxu0 %v517
    %541 = vmatpush.msra.mxu0 %v513
    %542 = vmatpush.msra.mxu0 %v509
    %543 = vmatpush.msra.mxu0 %v505
    %544 = vmatpush.msra.mxu0 %v501
    %545 = vmatpush.msra.mxu0 %v497
    %546 = vmatpush.msra.mxu0 %v493
    %547 = vmatpush.msra.mxu0 %v489
    %548 = vmatpush.msra.mxu0 %v485
    %549 = vmatpush.msra.mxu0 %v481
    %550 = vmatpush.msra.mxu0 %v477
    %551 = vmatpush.msra.mxu0 %v473
    %552 = vmatpush.msra.mxu0 %v469
    %553 = vmatpush.msra.mxu0 %v465
    %554 = vmatpush.msra.mxu0 %v461
    %555 = vmatpush.msra.mxu0 %v457
    %556 = vmatmul.f32.gmra.mxu0 %v455
    %v557 = vpop.f32.mrf.mxu0
    %v558 = vadd.f32 0.0, %v557
    %559 = vdwg.mxu0
    %560 = vmatpush.msra.mxu0 %v518
    %561 = vmatpush.msra.mxu0 %v514
    %562 = vmatpush.msra.mxu0 %v510
    %563 = vmatpush.msra.mxu0 %v506
    %564 = vmatpush.msra.mxu0 %v502
    %565 = vmatpush.msra.mxu0 %v498
    %566 = vmatpush.msra.mxu0 %v494
    %567 = vmatpush.msra.mxu0 %v490
    %568 = vmatpush.msra.mxu0 %v486
    %569 = vmatpush.msra.mxu0 %v482
    %570 = vmatpush.msra.mxu0 %v478
    %571 = vmatpush.msra.mxu0 %v474
    %572 = vmatpush.msra.mxu0 %v470
    %573 = vmatpush.msra.mxu0 %v466
    %574 = vmatpush.msra.mxu0 %v462
    %575 = vmatpush.msra.mxu0 %v458
    %576 = vmatmul.f32.gmra.mxu0 %v455
    %v577 = vpop.f32.mrf.mxu0
    %v578 = vadd.f32 0.0, %v577
    %579 = vdwg.mxu0
    %580 = vmatpush.msra.mxu0 %v519
    %581 = vmatpush.msra.mxu0 %v515
    %582 = vmatpush.msra.mxu0 %v511
    %583 = vmatpush.msra.mxu0 %v507
    %584 = vmatpush.msra.mxu0 %v503
    %585 = vmatpush.msra.mxu0 %v499
    %586 = vmatpush.msra.mxu0 %v495
    %587 = vmatpush.msra.mxu0 %v491
    %588 = vmatpush.msra.mxu0 %v487
    %589 = vmatpush.msra.mxu0 %v483
    %590 = vmatpush.msra.mxu0 %v479
    %591 = vmatpush.msra.mxu0 %v475
    %592 = vmatpush.msra.mxu0 %v471
    %593 = vmatpush.msra.mxu0 %v467
    %594 = vmatpush.msra.mxu0 %v463
    %595 = vmatpush.msra.mxu0 %v459
    %596 = vmatmul.f32.gmra.mxu0 %v455
    %v597 = vpop.f32.mrf.mxu0
    %v598 = vadd.f32 0.0, %v597
    %599 = vdwg.mxu0
    %v600 = vld [vmem:[#allocation8] ss:$2 sm:$0xf]
    %s601 = scalar_lea.vmem [#allocation8], 1
    %v602 = vld [vmem:[%s601] ss:$2 sm:$0xf]
    %607 = vrot.lane.b32.xlu0 %v538, 94
    %v608 = vpop.permute.xlu0 %607
    %609 = vrot.lane.b32.xlu0 %v558, 94
    %v610 = vpop.permute.xlu0 %609
    %611 = vrot.lane.b32.xlu0 %v578, 94
    %v612 = vpop.permute.xlu0 %611
    %613 = vrot.lane.b32.xlu0 %v598, 94
    %v614 = vpop.permute.xlu0 %613
    %vm615 = vcmask 769024
    %v616 = vsel %vm615, %v608, %v610
    %v617 = vsel %vm615, %v610, %v612
    %v618 = vsel %vm615, %v612, %v614
    %v624 = vsel %vm615, %v614, %v608
    %vm625 = vcmp.lt.s32.totalorder %v600, 14
    %vm626 = vcmp.lt.s32.totalorder %v602, 14
    %vm627 = vmand %vm625, %vm626
    %v628 = vsel %vm627, 1, 0
    %v629 = vperm.slane %v628, 0
    %v630 = vperm.slane %v628, 1
    %v631 = vperm.slane %v628, 2
    %v632 = vperm.slane %v628, 3
    %vm633 = vcmp.eq.s32.totalorder %v629, 1
    %vm634 = vcmp.eq.s32.totalorder %v630, 1
    %vm635 = vcmp.eq.s32.totalorder %v631, 1
    %vm636 = vcmp.eq.s32.totalorder %v632, 1
    %v637 = vsel %vm633, %v616, 0.0
    %v638 = vsel %vm634, %v617, 0.0
    %v639 = vsel %vm635, %v618, 0.0
    %v640 = vsel %vm636, %v624, 0.0
    %641 = vst [vmem:[#allocation2] sm:$0xff] %v637
    %642 = vst [vmem:[#allocation2 + $0x8] sm:$0xff] %v638
    %643 = vst [vmem:[#allocation2 + $0x10] sm:$0xff] %v639
    %644 = vst [vmem:[#allocation2 + $0x18] sm:$0xff] %v640
    %645 = vrot.lane.b32.xlu0 %v538, 95
    %v646 = vpop.permute.xlu0 %645
    %647 = vrot.lane.b32.xlu0 %v558, 95
    %v648 = vpop.permute.xlu0 %647
    %649 = vrot.lane.b32.xlu0 %v578, 95
    %v650 = vpop.permute.xlu0 %649
    %651 = vrot.lane.b32.xlu0 %v598, 95
    %v652 = vpop.permute.xlu0 %651
    %vm653 = vcmask 777216
    %v654 = vsel %vm653, %v646, %v648
    %v655 = vsel %vm653, %v648, %v650
    %v656 = vsel %vm653, %v650, %v652
    %v662 = vsel %vm653, %v652, %v646
    %vm663 = vcmp.lt.s32.totalorder %v602, 15
    %vm664 = vmand %vm625, %vm663
    %v665 = vsel %vm664, 1, 0
    %v666 = vperm.slane %v665, 0
    %v667 = vperm.slane %v665, 1
    %v668 = vperm.slane %v665, 2
    %v669 = vperm.slane %v665, 3
    %vm670 = vcmp.eq.s32.totalorder %v666, 1
    %vm671 = vcmp.eq.s32.totalorder %v667, 1
    %vm672 = vcmp.eq.s32.totalorder %v668, 1
    %vm673 = vcmp.eq.s32.totalorder %v669, 1
    %v674 = vsel %vm670, %v654, 0.0
    %v675 = vsel %vm671, %v655, 0.0
    %v676 = vsel %vm672, %v656, 0.0
    %v677 = vsel %vm673, %v662, 0.0
    %678 = vst [vmem:[#allocation2 + $0x20] sm:$0xff] %v674
    %679 = vst [vmem:[#allocation2 + $0x28] sm:$0xff] %v675
    %680 = vst [vmem:[#allocation2 + $0x30] sm:$0xff] %v676
    %681 = vst [vmem:[#allocation2 + $0x38] sm:$0xff] %v677
    %682 = vrot.lane.b32.xlu0 %v538, 96
    %v683 = vpop.permute.xlu0 %682
    %684 = vrot.lane.b32.xlu0 %v558, 96
    %v685 = vpop.permute.xlu0 %684
    %686 = vrot.lane.b32.xlu0 %v578, 96
    %v687 = vpop.permute.xlu0 %686
    %688 = vrot.lane.b32.xlu0 %v598, 96
    %v689 = vpop.permute.xlu0 %688
    %vm690 = vcmask 785408
    %v691 = vsel %vm690, %v683, %v685
    %v692 = vsel %vm690, %v685, %v687
    %v693 = vsel %vm690, %v687, %v689
    %v699 = vsel %vm690, %v689, %v683
    %v700 = vsel %vm625, 1, 0
    %v701 = vperm.slane %v700, 0
    %v702 = vperm.slane %v700, 1
    %v703 = vperm.slane %v700, 2
    %v704 = vperm.slane %v700, 3
    %vm705 = vcmp.eq.s32.totalorder %v701, 1
    %vm706 = vcmp.eq.s32.totalorder %v702, 1
    %vm707 = vcmp.eq.s32.totalorder %v703, 1
    %vm708 = vcmp.eq.s32.totalorder %v704, 1
    %v709 = vsel %vm705, %v691, 0.0
    %v710 = vsel %vm706, %v692, 0.0
    %v711 = vsel %vm707, %v693, 0.0
    %v712 = vsel %vm708, %v699, 0.0
    %713 = vst [vmem:[#allocation2 + $0x40] sm:$0xff] %v709
    %714 = vst [vmem:[#allocation2 + $0x48] sm:$0xff] %v710
    %715 = vst [vmem:[#allocation2 + $0x50] sm:$0xff] %v711
    %716 = vst [vmem:[#allocation2 + $0x58] sm:$0xff] %v712
    %717 = vrot.lane.b32.xlu0 %v538, 97
    %v718 = vpop.permute.xlu0 %717
    %719 = vrot.lane.b32.xlu0 %v558, 97
    %v720 = vpop.permute.xlu0 %719
    %721 = vrot.lane.b32.xlu0 %v578, 97
    %v722 = vpop.permute.xlu0 %721
    %723 = vrot.lane.b32.xlu0 %v598, 97
    %v724 = vpop.permute.xlu0 %723
    %vm725 = vcmask 793600
    %v726 = vsel %vm725, %v718, %v720
    %v727 = vsel %vm725, %v720, %v722
    %v728 = vsel %vm725, %v722, %v724
    %v734 = vsel %vm725, %v724, %v718
    %vm735 = vcmp.ge.s32.totalorder %v602, 1
    %vm736 = vmand %vm625, %vm735
    %v737 = vsel %vm736, 1, 0
    %v738 = vperm.slane %v737, 0
    %v739 = vperm.slane %v737, 1
    %v740 = vperm.slane %v737, 2
    %v741 = vperm.slane %v737, 3
    %vm742 = vcmp.eq.s32.totalorder %v738, 1
    %vm743 = vcmp.eq.s32.totalorder %v739, 1
    %vm744 = vcmp.eq.s32.totalorder %v740, 1
    %vm745 = vcmp.eq.s32.totalorder %v741, 1
    %v746 = vsel %vm742, %v726, 0.0
    %v747 = vsel %vm743, %v727, 0.0
    %v748 = vsel %vm744, %v728, 0.0
    %v749 = vsel %vm745, %v734, 0.0
    %750 = vst [vmem:[#allocation2 + $0x60] sm:$0xff] %v746
    %751 = vst [vmem:[#allocation2 + $0x68] sm:$0xff] %v747
    %752 = vst [vmem:[#allocation2 + $0x70] sm:$0xff] %v748
    %753 = vst [vmem:[#allocation2 + $0x78] sm:$0xff] %v749
    %754 = vrot.lane.b32.xlu0 %v538, 98
    %v755 = vpop.permute.xlu0 %754
    %756 = vrot.lane.b32.xlu0 %v558, 98
    %v757 = vpop.permute.xlu0 %756
    %758 = vrot.lane.b32.xlu0 %v578, 98
    %v759 = vpop.permute.xlu0 %758
    %760 = vrot.lane.b32.xlu0 %v598, 98
    %v761 = vpop.permute.xlu0 %760
    %vm762 = vcmask 801792
    %v763 = vsel %vm762, %v755, %v757
    %v764 = vsel %vm762, %v757, %v759
    %v765 = vsel %vm762, %v759, %v761
    %v771 = vsel %vm762, %v761, %v755
    %vm772 = vcmp.ge.s32.totalorder %v602, 2
    %vm773 = vmand %vm625, %vm772
    %v774 = vsel %vm773, 1, 0
    %v775 = vperm.slane %v774, 0
    %v776 = vperm.slane %v774, 1
    %v777 = vperm.slane %v774, 2
    %v778 = vperm.slane %v774, 3
    %vm779 = vcmp.eq.s32.totalorder %v775, 1
    %vm780 = vcmp.eq.s32.totalorder %v776, 1
    %vm781 = vcmp.eq.s32.totalorder %v777, 1
    %vm782 = vcmp.eq.s32.totalorder %v778, 1
    %v783 = vsel %vm779, %v763, 0.0
    %v784 = vsel %vm780, %v764, 0.0
    %v785 = vsel %vm781, %v765, 0.0
    %v786 = vsel %vm782, %v771, 0.0
    %787 = vst [vmem:[#allocation2 + $0x80] sm:$0xff] %v783
    %788 = vst [vmem:[#allocation2 + $0x88] sm:$0xff] %v784
    %789 = vst [vmem:[#allocation2 + $0x90] sm:$0xff] %v785
    %790 = vst [vmem:[#allocation2 + $0x98] sm:$0xff] %v786
    %791 = vrot.lane.b32.xlu0 %v538, 110
    %v792 = vpop.permute.xlu0 %791
    %793 = vrot.lane.b32.xlu0 %v558, 110
    %v794 = vpop.permute.xlu0 %793
    %795 = vrot.lane.b32.xlu0 %v578, 110
    %v796 = vpop.permute.xlu0 %795
    %797 = vrot.lane.b32.xlu0 %v598, 110
    %v798 = vpop.permute.xlu0 %797
    %v799 = vsel %vm150, %v792, %v794
    %v800 = vsel %vm150, %v794, %v796
    %v801 = vsel %vm150, %v796, %v798
    %v807 = vsel %vm150, %v798, %v792
    %vm808 = vcmp.lt.s32.totalorder %v600, 15
    %vm809 = vmand %vm808, %vm626
    %v810 = vsel %vm809, 1, 0
    %v811 = vperm.slane %v810, 0
    %v812 = vperm.slane %v810, 1
    %v813 = vperm.slane %v810, 2
    %v814 = vperm.slane %v810, 3
    %vm815 = vcmp.eq.s32.totalorder %v811, 1
    %vm816 = vcmp.eq.s32.totalorder %v812, 1
    %vm817 = vcmp.eq.s32.totalorder %v813, 1
    %vm818 = vcmp.eq.s32.totalorder %v814, 1
    %v819 = vsel %vm815, %v799, 0.0
    %v820 = vsel %vm816, %v800, 0.0
    %v821 = vsel %vm817, %v801, 0.0
    %v822 = vsel %vm818, %v807, 0.0
    %823 = vst [vmem:[#allocation2 + $0xa0] sm:$0xff] %v819
    %824 = vst [vmem:[#allocation2 + $0xa8] sm:$0xff] %v820
    %825 = vst [vmem:[#allocation2 + $0xb0] sm:$0xff] %v821
    %826 = vst [vmem:[#allocation2 + $0xb8] sm:$0xff] %v822
    %827 = vrot.lane.b32.xlu0 %v538, 111
    %v828 = vpop.permute.xlu0 %827
    %829 = vrot.lane.b32.xlu0 %v558, 111
    %v830 = vpop.permute.xlu0 %829
    %831 = vrot.lane.b32.xlu0 %v578, 111
    %v832 = vpop.permute.xlu0 %831
    %833 = vrot.lane.b32.xlu0 %v598, 111
    %v834 = vpop.permute.xlu0 %833
    %v835 = vsel %vm162, %v828, %v830
    %v836 = vsel %vm162, %v830, %v832
    %v837 = vsel %vm162, %v832, %v834
    %v843 = vsel %vm162, %v834, %v828
    %vm844 = vmand %vm808, %vm663
    %v845 = vsel %vm844, 1, 0
    %v846 = vperm.slane %v845, 0
    %v847 = vperm.slane %v845, 1
    %v848 = vperm.slane %v845, 2
    %v849 = vperm.slane %v845, 3
    %vm850 = vcmp.eq.s32.totalorder %v846, 1
    %vm851 = vcmp.eq.s32.totalorder %v847, 1
    %vm852 = vcmp.eq.s32.totalorder %v848, 1
    %vm853 = vcmp.eq.s32.totalorder %v849, 1
    %v854 = vsel %vm850, %v835, 0.0
    %v855 = vsel %vm851, %v836, 0.0
    %v856 = vsel %vm852, %v837, 0.0
    %v857 = vsel %vm853, %v843, 0.0
    %858 = vst [vmem:[#allocation2 + $0xc0] sm:$0xff] %v854
    %859 = vst [vmem:[#allocation2 + $0xc8] sm:$0xff] %v855
    %860 = vst [vmem:[#allocation2 + $0xd0] sm:$0xff] %v856
    %861 = vst [vmem:[#allocation2 + $0xd8] sm:$0xff] %v857
    %862 = vrot.lane.b32.xlu0 %v538, 112
    %v863 = vpop.permute.xlu0 %862
    %864 = vrot.lane.b32.xlu0 %v558, 112
    %v865 = vpop.permute.xlu0 %864
    %866 = vrot.lane.b32.xlu0 %v578, 112
    %v867 = vpop.permute.xlu0 %866
    %868 = vrot.lane.b32.xlu0 %v598, 112
    %v869 = vpop.permute.xlu0 %868
    %v870 = vsel %vm173, %v863, %v865
    %v871 = vsel %vm173, %v865, %v867
    %v872 = vsel %vm173, %v867, %v869
    %v878 = vsel %vm173, %v869, %v863
    %v879 = vsel %vm808, 1, 0
    %v880 = vperm.slane %v879, 0
    %v881 = vperm.slane %v879, 1
    %v882 = vperm.slane %v879, 2
    %v883 = vperm.slane %v879, 3
    %vm884 = vcmp.eq.s32.totalorder %v880, 1
    %vm885 = vcmp.eq.s32.totalorder %v881, 1
    %vm886 = vcmp.eq.s32.totalorder %v882, 1
    %vm887 = vcmp.eq.s32.totalorder %v883, 1
    %v888 = vsel %vm884, %v870, 0.0
    %v889 = vsel %vm885, %v871, 0.0
    %v890 = vsel %vm886, %v872, 0.0
    %v891 = vsel %vm887, %v878, 0.0
    %892 = vst [vmem:[#allocation2 + $0xe0] sm:$0xff] %v888
    %893 = vst [vmem:[#allocation2 + $0xe8] sm:$0xff] %v889
    %894 = vst [vmem:[#allocation2 + $0xf0] sm:$0xff] %v890
    %895 = vst [vmem:[#allocation2 + $0xf8] sm:$0xff] %v891
    %896 = vrot.lane.b32.xlu0 %v538, 113
    %v897 = vpop.permute.xlu0 %896
    %898 = vrot.lane.b32.xlu0 %v558, 113
    %v899 = vpop.permute.xlu0 %898
    %900 = vrot.lane.b32.xlu0 %v578, 113
    %v901 = vpop.permute.xlu0 %900
    %902 = vrot.lane.b32.xlu0 %v598, 113
    %v903 = vpop.permute.xlu0 %902
    %v904 = vsel %vm182, %v897, %v899
    %v905 = vsel %vm182, %v899, %v901
    %v906 = vsel %vm182, %v901, %v903
    %v912 = vsel %vm182, %v903, %v897
    %vm913 = vmand %vm808, %vm735
    %v914 = vsel %vm913, 1, 0
    %v915 = vperm.slane %v914, 0
    %v916 = vperm.slane %v914, 1
    %v917 = vperm.slane %v914, 2
    %v918 = vperm.slane %v914, 3
    %vm919 = vcmp.eq.s32.totalorder %v915, 1
    %vm920 = vcmp.eq.s32.totalorder %v916, 1
    %vm921 = vcmp.eq.s32.totalorder %v917, 1
    %vm922 = vcmp.eq.s32.totalorder %v918, 1
    %v923 = vsel %vm919, %v904, 0.0
    %v924 = vsel %vm920, %v905, 0.0
    %v925 = vsel %vm921, %v906, 0.0
    %v926 = vsel %vm922, %v912, 0.0
    %927 = vst [vmem:[#allocation2 + $0x100] sm:$0xff] %v923
    %928 = vst [vmem:[#allocation2 + $0x108] sm:$0xff] %v924
    %929 = vst [vmem:[#allocation2 + $0x110] sm:$0xff] %v925
    %930 = vst [vmem:[#allocation2 + $0x118] sm:$0xff] %v926
    %931 = vrot.lane.b32.xlu0 %v538, 114
    %v932 = vpop.permute.xlu0 %931
    %933 = vrot.lane.b32.xlu0 %v558, 114
    %v934 = vpop.permute.xlu0 %933
    %935 = vrot.lane.b32.xlu0 %v578, 114
    %v936 = vpop.permute.xlu0 %935
    %937 = vrot.lane.b32.xlu0 %v598, 114
    %v938 = vpop.permute.xlu0 %937
    %v939 = vsel %vm193, %v932, %v934
    %v940 = vsel %vm193, %v934, %v936
    %v941 = vsel %vm193, %v936, %v938
    %v947 = vsel %vm193, %v938, %v932
    %vm948 = vmand %vm808, %vm772
    %v949 = vsel %vm948, 1, 0
    %v950 = vperm.slane %v949, 0
    %v951 = vperm.slane %v949, 1
    %v952 = vperm.slane %v949, 2
    %v953 = vperm.slane %v949, 3
    %vm954 = vcmp.eq.s32.totalorder %v950, 1
    %vm955 = vcmp.eq.s32.totalorder %v951, 1
    %vm956 = vcmp.eq.s32.totalorder %v952, 1
    %vm957 = vcmp.eq.s32.totalorder %v953, 1
    %v958 = vsel %vm954, %v939, 0.0
    %v959 = vsel %vm955, %v940, 0.0
    %v960 = vsel %vm956, %v941, 0.0
    %v961 = vsel %vm957, %v947, 0.0
    %962 = vst [vmem:[#allocation2 + $0x120] sm:$0xff] %v958
    %963 = vst [vmem:[#allocation2 + $0x128] sm:$0xff] %v959
    %964 = vst [vmem:[#allocation2 + $0x130] sm:$0xff] %v960
    %965 = vst [vmem:[#allocation2 + $0x138] sm:$0xff] %v961
    %966 = vrot.lane.b32.xlu0 %v538, 126
    %v967 = vpop.permute.xlu0 %966
    %968 = vrot.lane.b32.xlu0 %v558, 126
    %v969 = vpop.permute.xlu0 %968
    %970 = vrot.lane.b32.xlu0 %v578, 126
    %v971 = vpop.permute.xlu0 %970
    %972 = vrot.lane.b32.xlu0 %v598, 126
    %v973 = vpop.permute.xlu0 %972
    %v974 = vsel %vm249, %v967, %v969
    %v975 = vsel %vm249, %v969, %v971
    %v976 = vsel %vm249, %v971, %v973
    %v982 = vsel %vm249, %v973, %v967
    %v983 = vsel %vm626, 1, 0
    %v984 = vperm.slane %v983, 0
    %v985 = vperm.slane %v983, 1
    %v986 = vperm.slane %v983, 2
    %v987 = vperm.slane %v983, 3
    %vm988 = vcmp.eq.s32.totalorder %v984, 1
    %vm989 = vcmp.eq.s32.totalorder %v985, 1
    %vm990 = vcmp.eq.s32.totalorder %v986, 1
    %vm991 = vcmp.eq.s32.totalorder %v987, 1
    %v992 = vsel %vm988, %v974, 0.0
    %v993 = vsel %vm989, %v975, 0.0
    %v994 = vsel %vm990, %v976, 0.0
    %v995 = vsel %vm991, %v982, 0.0
    %996 = vst [vmem:[#allocation2 + $0x140] sm:$0xff] %v992
    %997 = vst [vmem:[#allocation2 + $0x148] sm:$0xff] %v993
    %998 = vst [vmem:[#allocation2 + $0x150] sm:$0xff] %v994
    %999 = vst [vmem:[#allocation2 + $0x158] sm:$0xff] %v995
    %1000 = vrot.lane.b32.xlu0 %v538, 127
    %v1001 = vpop.permute.xlu0 %1000
    %1002 = vrot.lane.b32.xlu0 %v558, 127
    %v1003 = vpop.permute.xlu0 %1002
    %1004 = vrot.lane.b32.xlu0 %v578, 127
    %v1005 = vpop.permute.xlu0 %1004
    %1006 = vrot.lane.b32.xlu0 %v598, 127
    %v1007 = vpop.permute.xlu0 %1006
    %v1008 = vsel %vm258, %v1001, %v1003
    %v1009 = vsel %vm258, %v1003, %v1005
    %v1010 = vsel %vm258, %v1005, %v1007
    %v1016 = vsel %vm258, %v1007, %v1001
    %v1017 = vsel %vm663, 1, 0
    %v1018 = vperm.slane %v1017, 0
    %v1019 = vperm.slane %v1017, 1
    %v1020 = vperm.slane %v1017, 2
    %v1021 = vperm.slane %v1017, 3
    %vm1022 = vcmp.eq.s32.totalorder %v1018, 1
    %vm1023 = vcmp.eq.s32.totalorder %v1019, 1
    %vm1024 = vcmp.eq.s32.totalorder %v1020, 1
    %vm1025 = vcmp.eq.s32.totalorder %v1021, 1
    %v1026 = vsel %vm1022, %v1008, 0.0
    %v1027 = vsel %vm1023, %v1009, 0.0
    %v1028 = vsel %vm1024, %v1010, 0.0
    %v1029 = vsel %vm1025, %v1016, 0.0
    %1030 = vst [vmem:[#allocation2 + $0x160] sm:$0xff] %v1026
    %1031 = vst [vmem:[#allocation2 + $0x168] sm:$0xff] %v1027
    %1032 = vst [vmem:[#allocation2 + $0x170] sm:$0xff] %v1028
    %1033 = vst [vmem:[#allocation2 + $0x178] sm:$0xff] %v1029
    %1034 = vst [vmem:[#allocation2 + $0x180] sm:$0xff] %v538
    %1035 = vst [vmem:[#allocation2 + $0x188] sm:$0xff] %v558
    %1036 = vst [vmem:[#allocation2 + $0x190] sm:$0xff] %v578
    %1037 = vst [vmem:[#allocation2 + $0x198] sm:$0xff] %v598
    %1038 = vrot.lane.b32.xlu0 %v598, 1
    %v1039 = vpop.permute.xlu0 %1038
    %1041 = vrot.lane.b32.xlu0 %v538, 1
    %v1042 = vpop.permute.xlu0 %1041
    %1043 = vrot.lane.b32.xlu0 %v558, 1
    %v1044 = vpop.permute.xlu0 %1043
    %1045 = vrot.lane.b32.xlu0 %v578, 1
    %v1046 = vpop.permute.xlu0 %1045
    %v1047 = vsel %vm268, %v1042, %v1044
    %v1048 = vsel %vm268, %v1044, %v1046
    %v1049 = vsel %vm268, %v1046, %v1039
    %v1054 = vsel %vm268, %v1039, %v1042
    %v1055 = vsel %vm735, 1, 0
    %v1056 = vperm.slane %v1055, 0
    %v1057 = vperm.slane %v1055, 1
    %v1058 = vperm.slane %v1055, 2
    %v1059 = vperm.slane %v1055, 3
    %vm1060 = vcmp.eq.s32.totalorder %v1056, 1
    %vm1061 = vcmp.eq.s32.totalorder %v1057, 1
    %vm1062 = vcmp.eq.s32.totalorder %v1058, 1
    %vm1063 = vcmp.eq.s32.totalorder %v1059, 1
    %v1064 = vsel %vm1060, %v1054, 0.0
    %v1065 = vsel %vm1061, %v1047, 0.0
    %v1066 = vsel %vm1062, %v1048, 0.0
    %v1067 = vsel %vm1063, %v1049, 0.0
    %1068 = vst [vmem:[#allocation2 + $0x1a0] sm:$0xff] %v1064
    %1069 = vst [vmem:[#allocation2 + $0x1a8] sm:$0xff] %v1065
    %1070 = vst [vmem:[#allocation2 + $0x1b0] sm:$0xff] %v1066
    %1071 = vst [vmem:[#allocation2 + $0x1b8] sm:$0xff] %v1067
    %1072 = vrot.lane.b32.xlu0 %v598, 2
    %v1073 = vpop.permute.xlu0 %1072
    %1075 = vrot.lane.b32.xlu0 %v538, 2
    %v1076 = vpop.permute.xlu0 %1075
    %1077 = vrot.lane.b32.xlu0 %v558, 2
    %v1078 = vpop.permute.xlu0 %1077
    %1079 = vrot.lane.b32.xlu0 %v578, 2
    %v1080 = vpop.permute.xlu0 %1079
    %v1081 = vsel %vm277, %v1076, %v1078
    %v1082 = vsel %vm277, %v1078, %v1080
    %v1083 = vsel %vm277, %v1080, %v1073
    %v1088 = vsel %vm277, %v1073, %v1076
    %v1089 = vsel %vm772, 1, 0
    %v1090 = vperm.slane %v1089, 0
    %v1091 = vperm.slane %v1089, 1
    %v1092 = vperm.slane %v1089, 2
    %v1093 = vperm.slane %v1089, 3
    %vm1094 = vcmp.eq.s32.totalorder %v1090, 1
    %vm1095 = vcmp.eq.s32.totalorder %v1091, 1
    %vm1096 = vcmp.eq.s32.totalorder %v1092, 1
    %vm1097 = vcmp.eq.s32.totalorder %v1093, 1
    %v1098 = vsel %vm1094, %v1088, 0.0
    %v1099 = vsel %vm1095, %v1081, 0.0
    %v1100 = vsel %vm1096, %v1082, 0.0
    %v1101 = vsel %vm1097, %v1083, 0.0
    %1102 = vst [vmem:[#allocation2 + $0x1c0] sm:$0xff] %v1098
    %1103 = vst [vmem:[#allocation2 + $0x1c8] sm:$0xff] %v1099
    %1104 = vst [vmem:[#allocation2 + $0x1d0] sm:$0xff] %v1100
    %1105 = vst [vmem:[#allocation2 + $0x1d8] sm:$0xff] %v1101
    %1106 = vrot.lane.b32.xlu0 %v598, 14
    %v1107 = vpop.permute.xlu0 %1106
    %1109 = vrot.lane.b32.xlu0 %v538, 14
    %v1110 = vpop.permute.xlu0 %1109
    %1111 = vrot.lane.b32.xlu0 %v558, 14
    %v1112 = vpop.permute.xlu0 %1111
    %1113 = vrot.lane.b32.xlu0 %v578, 14
    %v1114 = vpop.permute.xlu0 %1113
    %v1115 = vsel %vm331, %v1110, %v1112
    %v1116 = vsel %vm331, %v1112, %v1114
    %v1117 = vsel %vm331, %v1114, %v1107
    %v1122 = vsel %vm331, %v1107, %v1110
    %vm1123 = vcmp.ge.s32.totalorder %v600, 1
    %vm1124 = vmand %vm1123, %vm626
    %v1125 = vsel %vm1124, 1, 0
    %v1126 = vperm.slane %v1125, 0
    %v1127 = vperm.slane %v1125, 1
    %v1128 = vperm.slane %v1125, 2
    %v1129 = vperm.slane %v1125, 3
    %vm1130 = vcmp.eq.s32.totalorder %v1126, 1
    %vm1131 = vcmp.eq.s32.totalorder %v1127, 1
    %vm1132 = vcmp.eq.s32.totalorder %v1128, 1
    %vm1133 = vcmp.eq.s32.totalorder %v1129, 1
    %v1134 = vsel %vm1130, %v1122, 0.0
    %v1135 = vsel %vm1131, %v1115, 0.0
    %v1136 = vsel %vm1132, %v1116, 0.0
    %v1137 = vsel %vm1133, %v1117, 0.0
    %1138 = vst [vmem:[#allocation2 + $0x1e0] sm:$0xff] %v1134
    %1139 = vst [vmem:[#allocation2 + $0x1e8] sm:$0xff] %v1135
    %1140 = vst [vmem:[#allocation2 + $0x1f0] sm:$0xff] %v1136
    %1141 = vst [vmem:[#allocation2 + $0x1f8] sm:$0xff] %v1137
    %1142 = vrot.lane.b32.xlu0 %v598, 15
    %v1143 = vpop.permute.xlu0 %1142
    %1145 = vrot.lane.b32.xlu0 %v538, 15
    %v1146 = vpop.permute.xlu0 %1145
    %1147 = vrot.lane.b32.xlu0 %v558, 15
    %v1148 = vpop.permute.xlu0 %1147
    %1149 = vrot.lane.b32.xlu0 %v578, 15
    %v1150 = vpop.permute.xlu0 %1149
    %v1151 = vsel %vm342, %v1146, %v1148
    %v1152 = vsel %vm342, %v1148, %v1150
    %v1153 = vsel %vm342, %v1150, %v1143
    %v1158 = vsel %vm342, %v1143, %v1146
    %vm1159 = vmand %vm1123, %vm663
    %v1160 = vsel %vm1159, 1, 0
    %v1161 = vperm.slane %v1160, 0
    %v1162 = vperm.slane %v1160, 1
    %v1163 = vperm.slane %v1160, 2
    %v1164 = vperm.slane %v1160, 3
    %vm1165 = vcmp.eq.s32.totalorder %v1161, 1
    %vm1166 = vcmp.eq.s32.totalorder %v1162, 1
    %vm1167 = vcmp.eq.s32.totalorder %v1163, 1
    %vm1168 = vcmp.eq.s32.totalorder %v1164, 1
    %v1169 = vsel %vm1165, %v1158, 0.0
    %v1170 = vsel %vm1166, %v1151, 0.0
    %v1171 = vsel %vm1167, %v1152, 0.0
    %v1172 = vsel %vm1168, %v1153, 0.0
    %1173 = vst [vmem:[#allocation2 + $0x200] sm:$0xff] %v1169
    %1174 = vst [vmem:[#allocation2 + $0x208] sm:$0xff] %v1170
    %1175 = vst [vmem:[#allocation2 + $0x210] sm:$0xff] %v1171
    %1176 = vst [vmem:[#allocation2 + $0x218] sm:$0xff] %v1172
    %1177 = vrot.lane.b32.xlu0 %v598, 16
    %v1178 = vpop.permute.xlu0 %1177
    %1180 = vrot.lane.b32.xlu0 %v538, 16
    %v1181 = vpop.permute.xlu0 %1180
    %1182 = vrot.lane.b32.xlu0 %v558, 16
    %v1183 = vpop.permute.xlu0 %1182
    %1184 = vrot.lane.b32.xlu0 %v578, 16
    %v1185 = vpop.permute.xlu0 %1184
    %v1186 = vsel %vm352, %v1181, %v1183
    %v1187 = vsel %vm352, %v1183, %v1185
    %v1188 = vsel %vm352, %v1185, %v1178
    %v1193 = vsel %vm352, %v1178, %v1181
    %v1194 = vsel %vm1123, 1, 0
    %v1195 = vperm.slane %v1194, 0
    %v1196 = vperm.slane %v1194, 1
    %v1197 = vperm.slane %v1194, 2
    %v1198 = vperm.slane %v1194, 3
    %vm1199 = vcmp.eq.s32.totalorder %v1195, 1
    %vm1200 = vcmp.eq.s32.totalorder %v1196, 1
    %vm1201 = vcmp.eq.s32.totalorder %v1197, 1
    %vm1202 = vcmp.eq.s32.totalorder %v1198, 1
    %v1203 = vsel %vm1199, %v1193, 0.0
    %v1204 = vsel %vm1200, %v1186, 0.0
    %v1205 = vsel %vm1201, %v1187, 0.0
    %v1206 = vsel %vm1202, %v1188, 0.0
    %1207 = vst [vmem:[#allocation2 + $0x220] sm:$0xff] %v1203
    %1208 = vst [vmem:[#allocation2 + $0x228] sm:$0xff] %v1204
    %1209 = vst [vmem:[#allocation2 + $0x230] sm:$0xff] %v1205
    %1210 = vst [vmem:[#allocation2 + $0x238] sm:$0xff] %v1206
    %1211 = vrot.lane.b32.xlu0 %v598, 17
    %v1212 = vpop.permute.xlu0 %1211
    %1214 = vrot.lane.b32.xlu0 %v538, 17
    %v1215 = vpop.permute.xlu0 %1214
    %1216 = vrot.lane.b32.xlu0 %v558, 17
    %v1217 = vpop.permute.xlu0 %1216
    %1218 = vrot.lane.b32.xlu0 %v578, 17
    %v1219 = vpop.permute.xlu0 %1218
    %v1220 = vsel %vm361, %v1215, %v1217
    %v1221 = vsel %vm361, %v1217, %v1219
    %v1222 = vsel %vm361, %v1219, %v1212
    %v1227 = vsel %vm361, %v1212, %v1215
    %vm1228 = vmand %vm1123, %vm735
    %v1229 = vsel %vm1228, 1, 0
    %v1230 = vperm.slane %v1229, 0
    %v1231 = vperm.slane %v1229, 1
    %v1232 = vperm.slane %v1229, 2
    %v1233 = vperm.slane %v1229, 3
    %vm1234 = vcmp.eq.s32.totalorder %v1230, 1
    %vm1235 = vcmp.eq.s32.totalorder %v1231, 1
    %vm1236 = vcmp.eq.s32.totalorder %v1232, 1
    %vm1237 = vcmp.eq.s32.totalorder %v1233, 1
    %v1238 = vsel %vm1234, %v1227, 0.0
    %v1239 = vsel %vm1235, %v1220, 0.0
    %v1240 = vsel %vm1236, %v1221, 0.0
    %v1241 = vsel %vm1237, %v1222, 0.0
    %1242 = vst [vmem:[#allocation2 + $0x240] sm:$0xff] %v1238
    %1243 = vst [vmem:[#allocation2 + $0x248] sm:$0xff] %v1239
    %1244 = vst [vmem:[#allocation2 + $0x250] sm:$0xff] %v1240
    %1245 = vst [vmem:[#allocation2 + $0x258] sm:$0xff] %v1241
    %1246 = vrot.lane.b32.xlu0 %v598, 18
    %v1247 = vpop.permute.xlu0 %1246
    %1249 = vrot.lane.b32.xlu0 %v538, 18
    %v1250 = vpop.permute.xlu0 %1249
    %1251 = vrot.lane.b32.xlu0 %v558, 18
    %v1252 = vpop.permute.xlu0 %1251
    %1253 = vrot.lane.b32.xlu0 %v578, 18
    %v1254 = vpop.permute.xlu0 %1253
    %v1255 = vsel %vm371, %v1250, %v1252
    %v1256 = vsel %vm371, %v1252, %v1254
    %v1257 = vsel %vm371, %v1254, %v1247
    %v1262 = vsel %vm371, %v1247, %v1250
    %vm1263 = vmand %vm1123, %vm772
    %v1264 = vsel %vm1263, 1, 0
    %v1265 = vperm.slane %v1264, 0
    %v1266 = vperm.slane %v1264, 1
    %v1267 = vperm.slane %v1264, 2
    %v1268 = vperm.slane %v1264, 3
    %vm1269 = vcmp.eq.s32.totalorder %v1265, 1
    %vm1270 = vcmp.eq.s32.totalorder %v1266, 1
    %vm1271 = vcmp.eq.s32.totalorder %v1267, 1
    %vm1272 = vcmp.eq.s32.totalorder %v1268, 1
    %v1273 = vsel %vm1269, %v1262, 0.0
    %v1274 = vsel %vm1270, %v1255, 0.0
    %v1275 = vsel %vm1271, %v1256, 0.0
    %v1276 = vsel %vm1272, %v1257, 0.0
    %1277 = vst [vmem:[#allocation2 + $0x260] sm:$0xff] %v1273
    %1278 = vst [vmem:[#allocation2 + $0x268] sm:$0xff] %v1274
    %1279 = vst [vmem:[#allocation2 + $0x270] sm:$0xff] %v1275
    %1280 = vst [vmem:[#allocation2 + $0x278] sm:$0xff] %v1276
    %1281 = vrot.lane.b32.xlu0 %v598, 30
    %v1282 = vpop.permute.xlu0 %1281
    %1284 = vrot.lane.b32.xlu0 %v538, 30
    %v1285 = vpop.permute.xlu0 %1284
    %1286 = vrot.lane.b32.xlu0 %v558, 30
    %v1287 = vpop.permute.xlu0 %1286
    %1288 = vrot.lane.b32.xlu0 %v578, 30
    %v1289 = vpop.permute.xlu0 %1288
    %vm1290 = vcmask 244736
    %v1291 = vsel %vm1290, %v1285, %v1287
    %v1292 = vsel %vm1290, %v1287, %v1289
    %v1293 = vsel %vm1290, %v1289, %v1282
    %v1298 = vsel %vm1290, %v1282, %v1285
    %vm1299 = vcmp.ge.s32.totalorder %v600, 2
    %vm1300 = vmand %vm1299, %vm626
    %v1301 = vsel %vm1300, 1, 0
    %v1302 = vperm.slane %v1301, 0
    %v1303 = vperm.slane %v1301, 1
    %v1304 = vperm.slane %v1301, 2
    %v1305 = vperm.slane %v1301, 3
    %vm1306 = vcmp.eq.s32.totalorder %v1302, 1
    %vm1307 = vcmp.eq.s32.totalorder %v1303, 1
    %vm1308 = vcmp.eq.s32.totalorder %v1304, 1
    %vm1309 = vcmp.eq.s32.totalorder %v1305, 1
    %v1310 = vsel %vm1306, %v1298, 0.0
    %v1311 = vsel %vm1307, %v1291, 0.0
    %v1312 = vsel %vm1308, %v1292, 0.0
    %v1313 = vsel %vm1309, %v1293, 0.0
    %1314 = vst [vmem:[#allocation2 + $0x280] sm:$0xff] %v1310
    %1315 = vst [vmem:[#allocation2 + $0x288] sm:$0xff] %v1311
    %1316 = vst [vmem:[#allocation2 + $0x290] sm:$0xff] %v1312
    %1317 = vst [vmem:[#allocation2 + $0x298] sm:$0xff] %v1313
    %1318 = vrot.lane.b32.xlu0 %v598, 31
    %v1319 = vpop.permute.xlu0 %1318
    %1321 = vrot.lane.b32.xlu0 %v538, 31
    %v1322 = vpop.permute.xlu0 %1321
    %1323 = vrot.lane.b32.xlu0 %v558, 31
    %v1324 = vpop.permute.xlu0 %1323
    %1325 = vrot.lane.b32.xlu0 %v578, 31
    %v1326 = vpop.permute.xlu0 %1325
    %vm1327 = vcmask 252928
    %v1328 = vsel %vm1327, %v1322, %v1324
    %v1329 = vsel %vm1327, %v1324, %v1326
    %v1330 = vsel %vm1327, %v1326, %v1319
    %v1335 = vsel %vm1327, %v1319, %v1322
    %vm1336 = vmand %vm1299, %vm663
    %v1337 = vsel %vm1336, 1, 0
    %v1338 = vperm.slane %v1337, 0
    %v1339 = vperm.slane %v1337, 1
    %v1340 = vperm.slane %v1337, 2
    %v1341 = vperm.slane %v1337, 3
    %vm1342 = vcmp.eq.s32.totalorder %v1338, 1
    %vm1343 = vcmp.eq.s32.totalorder %v1339, 1
    %vm1344 = vcmp.eq.s32.totalorder %v1340, 1
    %vm1345 = vcmp.eq.s32.totalorder %v1341, 1
    %v1346 = vsel %vm1342, %v1335, 0.0
    %v1347 = vsel %vm1343, %v1328, 0.0
    %v1348 = vsel %vm1344, %v1329, 0.0
    %v1349 = vsel %vm1345, %v1330, 0.0
    %1350 = vst [vmem:[#allocation2 + $0x2a0] sm:$0xff] %v1346
    %1351 = vst [vmem:[#allocation2 + $0x2a8] sm:$0xff] %v1347
    %1352 = vst [vmem:[#allocation2 + $0x2b0] sm:$0xff] %v1348
    %1353 = vst [vmem:[#allocation2 + $0x2b8] sm:$0xff] %v1349
    %1354 = vrot.lane.b32.xlu0 %v598, 32
    %v1355 = vpop.permute.xlu0 %1354
    %1357 = vrot.lane.b32.xlu0 %v538, 32
    %v1358 = vpop.permute.xlu0 %1357
    %1359 = vrot.lane.b32.xlu0 %v558, 32
    %v1360 = vpop.permute.xlu0 %1359
    %1361 = vrot.lane.b32.xlu0 %v578, 32
    %v1362 = vpop.permute.xlu0 %1361
    %v1363 = vsel %vm120, %v1358, %v1360
    %v1364 = vsel %vm120, %v1360, %v1362
    %v1365 = vsel %vm120, %v1362, %v1355
    %v1370 = vsel %vm120, %v1355, %v1358
    %v1371 = vsel %vm1299, 1, 0
    %v1372 = vperm.slane %v1371, 0
    %v1373 = vperm.slane %v1371, 1
    %v1374 = vperm.slane %v1371, 2
    %v1375 = vperm.slane %v1371, 3
    %vm1376 = vcmp.eq.s32.totalorder %v1372, 1
    %vm1377 = vcmp.eq.s32.totalorder %v1373, 1
    %vm1378 = vcmp.eq.s32.totalorder %v1374, 1
    %vm1379 = vcmp.eq.s32.totalorder %v1375, 1
    %v1380 = vsel %vm1376, %v1370, 0.0
    %v1381 = vsel %vm1377, %v1363, 0.0
    %v1382 = vsel %vm1378, %v1364, 0.0
    %v1383 = vsel %vm1379, %v1365, 0.0
    %1384 = vst [vmem:[#allocation2 + $0x2c0] sm:$0xff] %v1380
    %1385 = vst [vmem:[#allocation2 + $0x2c8] sm:$0xff] %v1381
    %1386 = vst [vmem:[#allocation2 + $0x2d0] sm:$0xff] %v1382
    %1387 = vst [vmem:[#allocation2 + $0x2d8] sm:$0xff] %v1383
    %1388 = vrot.lane.b32.xlu0 %v598, 33
    %v1389 = vpop.permute.xlu0 %1388
    %1391 = vrot.lane.b32.xlu0 %v538, 33
    %v1392 = vpop.permute.xlu0 %1391
    %1393 = vrot.lane.b32.xlu0 %v558, 33
    %v1394 = vpop.permute.xlu0 %1393
    %1395 = vrot.lane.b32.xlu0 %v578, 33
    %v1396 = vpop.permute.xlu0 %1395
    %vm1397 = vcmask 269312
    %v1398 = vsel %vm1397, %v1392, %v1394
    %v1399 = vsel %vm1397, %v1394, %v1396
    %v1400 = vsel %vm1397, %v1396, %v1389
    %v1405 = vsel %vm1397, %v1389, %v1392
    %vm1406 = vmand %vm1299, %vm735
    %v1407 = vsel %vm1406, 1, 0
    %v1408 = vperm.slane %v1407, 0
    %v1409 = vperm.slane %v1407, 1
    %v1410 = vperm.slane %v1407, 2
    %v1411 = vperm.slane %v1407, 3
    %vm1412 = vcmp.eq.s32.totalorder %v1408, 1
    %vm1413 = vcmp.eq.s32.totalorder %v1409, 1
    %vm1414 = vcmp.eq.s32.totalorder %v1410, 1
    %vm1415 = vcmp.eq.s32.totalorder %v1411, 1
    %v1416 = vsel %vm1412, %v1405, 0.0
    %v1417 = vsel %vm1413, %v1398, 0.0
    %v1418 = vsel %vm1414, %v1399, 0.0
    %v1419 = vsel %vm1415, %v1400, 0.0
    %1420 = vst [vmem:[#allocation2 + $0x2e0] sm:$0xff] %v1416
    %1421 = vst [vmem:[#allocation2 + $0x2e8] sm:$0xff] %v1417
    %1422 = vst [vmem:[#allocation2 + $0x2f0] sm:$0xff] %v1418
    %1423 = vst [vmem:[#allocation2 + $0x2f8] sm:$0xff] %v1419
    %1424 = vrot.lane.b32.xlu0 %v598, 34
    %v1425 = vpop.permute.xlu0 %1424
    %1427 = vrot.lane.b32.xlu0 %v538, 34
    %v1428 = vpop.permute.xlu0 %1427
    %1429 = vrot.lane.b32.xlu0 %v558, 34
    %v1430 = vpop.permute.xlu0 %1429
    %1431 = vrot.lane.b32.xlu0 %v578, 34
    %v1432 = vpop.permute.xlu0 %1431
    %vm1433 = vcmask 277504
    %v1434 = vsel %vm1433, %v1428, %v1430
    %v1435 = vsel %vm1433, %v1430, %v1432
    %v1436 = vsel %vm1433, %v1432, %v1425
    %v1441 = vsel %vm1433, %v1425, %v1428
    %vm1442 = vmand %vm1299, %vm772
    %v1443 = vsel %vm1442, 1, 0
    %v1444 = vperm.slane %v1443, 0
    %v1445 = vperm.slane %v1443, 1
    %v1446 = vperm.slane %v1443, 2
    %v1447 = vperm.slane %v1443, 3
    %vm1448 = vcmp.eq.s32.totalorder %v1444, 1
    %vm1449 = vcmp.eq.s32.totalorder %v1445, 1
    %vm1450 = vcmp.eq.s32.totalorder %v1446, 1
    %vm1451 = vcmp.eq.s32.totalorder %v1447, 1
    %v1452 = vsel %vm1448, %v1441, 0.0
    %v1453 = vsel %vm1449, %v1434, 0.0
    %v1454 = vsel %vm1450, %v1435, 0.0
    %v1455 = vsel %vm1451, %v1436, 0.0
    %1456 = vst [vmem:[#allocation2 + $0x300] sm:$0xff] %v1452
    %1457 = vst [vmem:[#allocation2 + $0x308] sm:$0xff] %v1453
    %1458 = vst [vmem:[#allocation2 + $0x310] sm:$0xff] %v1454
    %1459 = vst [vmem:[#allocation2 + $0x318] sm:$0xff] %v1455
    %v1460 = vld [vmem:[%s7] sm:$0xff]
    %v1461 = vld [vmem:[%s7 + $0x8] sm:$0xff]
    %v1462 = vld [vmem:[#allocation2] sm:$0xff]
    %v1463 = vld [vmem:[#allocation2 + $0x8] sm:$0xff]
    %v1464 = vld [vmem:[#allocation2 + $0x10] sm:$0xff]
    %v1465 = vld [vmem:[#allocation2 + $0x18] sm:$0xff]
    %v1466 = vld [vmem:[#allocation2 + $0x20] sm:$0xff]
    %v1467 = vld [vmem:[#allocation2 + $0x28] sm:$0xff]
    %v1468 = vld [vmem:[#allocation2 + $0x30] sm:$0xff]
    %v1469 = vld [vmem:[#allocation2 + $0x38] sm:$0xff]
    %v1470 = vld [vmem:[#allocation2 + $0x40] sm:$0xff]
    %v1471 = vld [vmem:[#allocation2 + $0x48] sm:$0xff]
    %v1472 = vld [vmem:[#allocation2 + $0x50] sm:$0xff]
    %v1473 = vld [vmem:[#allocation2 + $0x58] sm:$0xff]
    %v1474 = vld [vmem:[#allocation2 + $0x60] sm:$0xff]
    %v1475 = vld [vmem:[#allocation2 + $0x68] sm:$0xff]
    %v1476 = vld [vmem:[#allocation2 + $0x70] sm:$0xff]
    %v1477 = vld [vmem:[#allocation2 + $0x78] sm:$0xff]
    %v1478 = vld [vmem:[#allocation2 + $0x80] sm:$0xff]
    %v1479 = vld [vmem:[#allocation2 + $0x88] sm:$0xff]
    %v1480 = vld [vmem:[#allocation2 + $0x90] sm:$0xff]
    %v1481 = vld [vmem:[#allocation2 + $0x98] sm:$0xff]
    %v1482 = vld [vmem:[#allocation2 + $0xa0] sm:$0xff]
    %v1483 = vld [vmem:[#allocation2 + $0xa8] sm:$0xff]
    %v1484 = vld [vmem:[#allocation2 + $0xb0] sm:$0xff]
    %v1485 = vld [vmem:[#allocation2 + $0xb8] sm:$0xff]
    %v1486 = vld [vmem:[#allocation2 + $0xc0] sm:$0xff]
    %v1487 = vld [vmem:[#allocation2 + $0xc8] sm:$0xff]
    %v1488 = vld [vmem:[#allocation2 + $0xd0] sm:$0xff]
    %v1489 = vld [vmem:[#allocation2 + $0xd8] sm:$0xff]
    %v1490 = vld [vmem:[#allocation2 + $0xe0] sm:$0xff]
    %v1491 = vld [vmem:[#allocation2 + $0xe8] sm:$0xff]
    %v1492 = vld [vmem:[#allocation2 + $0xf0] sm:$0xff]
    %v1493 = vld [vmem:[#allocation2 + $0xf8] sm:$0xff]
    %v1494 = vld [vmem:[#allocation2 + $0x100] sm:$0xff]
    %v1495 = vld [vmem:[#allocation2 + $0x108] sm:$0xff]
    %v1496 = vld [vmem:[#allocation2 + $0x110] sm:$0xff]
    %v1497 = vld [vmem:[#allocation2 + $0x118] sm:$0xff]
    %v1498 = vld [vmem:[#allocation2 + $0x120] sm:$0xff]
    %v1499 = vld [vmem:[#allocation2 + $0x128] sm:$0xff]
    %v1500 = vld [vmem:[#allocation2 + $0x130] sm:$0xff]
    %v1501 = vld [vmem:[#allocation2 + $0x138] sm:$0xff]
    %v1502 = vld [vmem:[#allocation2 + $0x140] sm:$0xff]
    %v1503 = vld [vmem:[#allocation2 + $0x148] sm:$0xff]
    %v1504 = vld [vmem:[#allocation2 + $0x150] sm:$0xff]
    %v1505 = vld [vmem:[#allocation2 + $0x158] sm:$0xff]
    %v1506 = vld [vmem:[#allocation2 + $0x160] sm:$0xff]
    %v1507 = vld [vmem:[#allocation2 + $0x168] sm:$0xff]
    %v1508 = vld [vmem:[#allocation2 + $0x170] sm:$0xff]
    %v1509 = vld [vmem:[#allocation2 + $0x178] sm:$0xff]
    %v1510 = vld [vmem:[#allocation2 + $0x180] sm:$0xff]
    %v1511 = vld [vmem:[#allocation2 + $0x188] sm:$0xff]
    %v1512 = vld [vmem:[#allocation2 + $0x190] sm:$0xff]
    %v1513 = vld [vmem:[#allocation2 + $0x198] sm:$0xff]
    %v1514 = vld [vmem:[#allocation2 + $0x1a0] sm:$0xff]
    %v1515 = vld [vmem:[#allocation2 + $0x1a8] sm:$0xff]
    %v1516 = vld [vmem:[#allocation2 + $0x1b0] sm:$0xff]
    %v1517 = vld [vmem:[#allocation2 + $0x1b8] sm:$0xff]
    %v1518 = vld [vmem:[#allocation2 + $0x1c0] sm:$0xff]
    %v1519 = vld [vmem:[#allocation2 + $0x1c8] sm:$0xff]
    %v1520 = vld [vmem:[#allocation2 + $0x1d0] sm:$0xff]
    %v1521 = vld [vmem:[#allocation2 + $0x1d8] sm:$0xff]
    %v1522 = vld [vmem:[#allocation2 + $0x1e0] sm:$0xff]
    %v1523 = vld [vmem:[#allocation2 + $0x1e8] sm:$0xff]
    %v1524 = vld [vmem:[#allocation2 + $0x1f0] sm:$0xff]
    %v1525 = vld [vmem:[#allocation2 + $0x1f8] sm:$0xff]
    %v1526 = vld [vmem:[#allocation2 + $0x200] sm:$0xff]
    %v1527 = vld [vmem:[#allocation2 + $0x208] sm:$0xff]
    %v1528 = vld [vmem:[#allocation2 + $0x210] sm:$0xff]
    %v1529 = vld [vmem:[#allocation2 + $0x218] sm:$0xff]
    %v1530 = vld [vmem:[#allocation2 + $0x220] sm:$0xff]
    %v1531 = vld [vmem:[#allocation2 + $0x228] sm:$0xff]
    %v1532 = vld [vmem:[#allocation2 + $0x230] sm:$0xff]
    %v1533 = vld [vmem:[#allocation2 + $0x238] sm:$0xff]
    %v1534 = vld [vmem:[#allocation2 + $0x240] sm:$0xff]
    %v1535 = vld [vmem:[#allocation2 + $0x248] sm:$0xff]
    %v1536 = vld [vmem:[#allocation2 + $0x250] sm:$0xff]
    %v1537 = vld [vmem:[#allocation2 + $0x258] sm:$0xff]
    %v1538 = vld [vmem:[#allocation2 + $0x260] sm:$0xff]
    %v1539 = vld [vmem:[#allocation2 + $0x268] sm:$0xff]
    %v1540 = vld [vmem:[#allocation2 + $0x270] sm:$0xff]
    %v1541 = vld [vmem:[#allocation2 + $0x278] sm:$0xff]
    %v1542 = vld [vmem:[#allocation2 + $0x280] sm:$0xff]
    %v1543 = vld [vmem:[#allocation2 + $0x288] sm:$0xff]
    %v1544 = vld [vmem:[#allocation2 + $0x290] sm:$0xff]
    %v1545 = vld [vmem:[#allocation2 + $0x298] sm:$0xff]
    %v1546 = vld [vmem:[#allocation2 + $0x2a0] sm:$0xff]
    %v1547 = vld [vmem:[#allocation2 + $0x2a8] sm:$0xff]
    %v1548 = vld [vmem:[#allocation2 + $0x2b0] sm:$0xff]
    %v1549 = vld [vmem:[#allocation2 + $0x2b8] sm:$0xff]
    %v1550 = vld [vmem:[#allocation2 + $0x2c0] sm:$0xff]
    %v1551 = vld [vmem:[#allocation2 + $0x2c8] sm:$0xff]
    %v1552 = vld [vmem:[#allocation2 + $0x2d0] sm:$0xff]
    %v1553 = vld [vmem:[#allocation2 + $0x2d8] sm:$0xff]
    %v1554 = vld [vmem:[#allocation2 + $0x2e0] sm:$0xff]
    %v1555 = vld [vmem:[#allocation2 + $0x2e8] sm:$0xff]
    %v1556 = vld [vmem:[#allocation2 + $0x2f0] sm:$0xff]
    %v1557 = vld [vmem:[#allocation2 + $0x2f8] sm:$0xff]
    %v1558 = vld [vmem:[#allocation2 + $0x300] sm:$0xff]
    %v1559 = vld [vmem:[#allocation2 + $0x308] sm:$0xff]
    %v1560 = vld [vmem:[#allocation2 + $0x310] sm:$0xff]
    %v1561 = vld [vmem:[#allocation2 + $0x318] sm:$0xff]
    %v1562 = vld [vmem:[%s8] sm:$0xff]
    %1564 = vset.pattern.permute.xlu0 0
    %1565 = vperm.xlu0 %1564, %v1562
    %v1566 = vpop.permute.xlu0 %1565
    %v1569 = vsel %vm411, %v1461, 0
    %1571 = vmatpush.msra.mxu0 %v1522
    %1572 = vmatpush.msra.mxu0 %v1518
    %1573 = vmatpush.msra.mxu0 %v1514
    %1574 = vmatpush.msra.mxu0 %v1510
    %1575 = vmatpush.msra.mxu0 %v1506
    %1576 = vmatpush.msra.mxu0 %v1502
    %1577 = vmatpush.msra.mxu0 %v1498
    %1578 = vmatpush.msra.mxu0 %v1494
    %1579 = vmatpush.msra.mxu0 %v1490
    %1580 = vmatpush.msra.mxu0 %v1486
    %1581 = vmatpush.msra.mxu0 %v1482
    %1582 = vmatpush.msra.mxu0 %v1478
    %1583 = vmatpush.msra.mxu0 %v1474
    %1584 = vmatpush.msra.mxu0 %v1470
    %1585 = vmatpush.msra.mxu0 %v1466
    %1586 = vmatpush.msra.mxu0 %v1462
    %1587 = vmatmul.f32.gmra.mxu0 %v1460
    %v1588 = vpop.f32.mrf.mxu0
    %v1589 = vadd.f32 %v1566, %v1588
    %1590 = vdwg.mxu0
    %1591 = vmatpush.msra.mxu0 0.0
    %1592 = vmatpush.msra.mxu0 0.0
    %1593 = vmatpush.msra.mxu0 0.0
    %1594 = vmatpush.msra.mxu0 0.0
    %1595 = vmatpush.msra.mxu0 0.0
    %1596 = vmatpush.msra.mxu0 0.0
    %1597 = vmatpush.msra.mxu0 0.0
    %1598 = vmatpush.msra.mxu0 %v1558
    %1599 = vmatpush.msra.mxu0 %v1554
    %1600 = vmatpush.msra.mxu0 %v1550
    %1601 = vmatpush.msra.mxu0 %v1546
    %1602 = vmatpush.msra.mxu0 %v1542
    %1603 = vmatpush.msra.mxu0 %v1538
    %1604 = vmatpush.msra.mxu0 %v1534
    %1605 = vmatpush.msra.mxu0 %v1530
    %1606 = vmatpush.msra.mxu0 %v1526
    %1607 = vmatmul.f32.gmra.mxu0 %v1569
    %v1608 = vpop.f32.mrf.mxu0
    %v1609 = vadd.f32 %v1589, %v1608
    %1610 = vdwg.mxu0
    %1611 = vmatpush.msra.mxu0 %v1523
    %1612 = vmatpush.msra.mxu0 %v1519
    %1613 = vmatpush.msra.mxu0 %v1515
    %1614 = vmatpush.msra.mxu0 %v1511
    %1615 = vmatpush.msra.mxu0 %v1507
    %1616 = vmatpush.msra.mxu0 %v1503
    %1617 = vmatpush.msra.mxu0 %v1499
    %1618 = vmatpush.msra.mxu0 %v1495
    %1619 = vmatpush.msra.mxu0 %v1491
    %1620 = vmatpush.msra.mxu0 %v1487
    %1621 = vmatpush.msra.mxu0 %v1483
    %1622 = vmatpush.msra.mxu0 %v1479
    %1623 = vmatpush.msra.mxu0 %v1475
    %1624 = vmatpush.msra.mxu0 %v1471
    %1625 = vmatpush.msra.mxu0 %v1467
    %1626 = vmatpush.msra.mxu0 %v1463
    %1627 = vmatmul.f32.gmra.mxu0 %v1460
    %v1628 = vpop.f32.mrf.mxu0
    %v1629 = vadd.f32 %v1566, %v1628
    %1630 = vdwg.mxu0
    %1631 = vmatpush.msra.mxu0 0.0
    %1632 = vmatpush.msra.mxu0 0.0
    %1633 = vmatpush.msra.mxu0 0.0
    %1634 = vmatpush.msra.mxu0 0.0
    %1635 = vmatpush.msra.mxu0 0.0
    %1636 = vmatpush.msra.mxu0 0.0
    %1637 = vmatpush.msra.mxu0 0.0
    %1638 = vmatpush.msra.mxu0 %v1559
    %1639 = vmatpush.msra.mxu0 %v1555
    %1640 = vmatpush.msra.mxu0 %v1551
    %1641 = vmatpush.msra.mxu0 %v1547
    %1642 = vmatpush.msra.mxu0 %v1543
    %1643 = vmatpush.msra.mxu0 %v1539
    %1644 = vmatpush.msra.mxu0 %v1535
    %1645 = vmatpush.msra.mxu0 %v1531
    %1646 = vmatpush.msra.mxu0 %v1527
    %1647 = vmatmul.f32.gmra.mxu0 %v1569
    %v1648 = vpop.f32.mrf.mxu0
    %v1649 = vadd.f32 %v1629, %v1648
    %1650 = vdwg.mxu0
    %1651 = vmatpush.msra.mxu0 %v1524
    %1652 = vmatpush.msra.mxu0 %v1520
    %1653 = vmatpush.msra.mxu0 %v1516
    %1654 = vmatpush.msra.mxu0 %v1512
    %1655 = vmatpush.msra.mxu0 %v1508
    %1656 = vmatpush.msra.mxu0 %v1504
    %1657 = vmatpush.msra.mxu0 %v1500
    %1658 = vmatpush.msra.mxu0 %v1496
    %1659 = vmatpush.msra.mxu0 %v1492
    %1660 = vmatpush.msra.mxu0 %v1488
    %1661 = vmatpush.msra.mxu0 %v1484
    %1662 = vmatpush.msra.mxu0 %v1480
    %1663 = vmatpush.msra.mxu0 %v1476
    %1664 = vmatpush.msra.mxu0 %v1472
    %1665 = vmatpush.msra.mxu0 %v1468
    %1666 = vmatpush.msra.mxu0 %v1464
    %1667 = vmatmul.f32.gmra.mxu0 %v1460
    %v1668 = vpop.f32.mrf.mxu0
    %v1669 = vadd.f32 %v1566, %v1668
    %1670 = vdwg.mxu0
    %1671 = vmatpush.msra.mxu0 0.0
    %1672 = vmatpush.msra.mxu0 0.0
    %1673 = vmatpush.msra.mxu0 0.0
    %1674 = vmatpush.msra.mxu0 0.0
    %1675 = vmatpush.msra.mxu0 0.0
    %1676 = vmatpush.msra.mxu0 0.0
    %1677 = vmatpush.msra.mxu0 0.0
    %1678 = vmatpush.msra.mxu0 %v1560
    %1679 = vmatpush.msra.mxu0 %v1556
    %1680 = vmatpush.msra.mxu0 %v1552
    %1681 = vmatpush.msra.mxu0 %v1548
    %1682 = vmatpush.msra.mxu0 %v1544
    %1683 = vmatpush.msra.mxu0 %v1540
    %1684 = vmatpush.msra.mxu0 %v1536
    %1685 = vmatpush.msra.mxu0 %v1532
    %1686 = vmatpush.msra.mxu0 %v1528
    %1687 = vmatmul.f32.gmra.mxu0 %v1569
    %v1688 = vpop.f32.mrf.mxu0
    %v1689 = vadd.f32 %v1669, %v1688
    %1690 = vdwg.mxu0
    %1691 = vmatpush.msra.mxu0 %v1525
    %1692 = vmatpush.msra.mxu0 %v1521
    %1693 = vmatpush.msra.mxu0 %v1517
    %1694 = vmatpush.msra.mxu0 %v1513
    %1695 = vmatpush.msra.mxu0 %v1509
    %1696 = vmatpush.msra.mxu0 %v1505
    %1697 = vmatpush.msra.mxu0 %v1501
    %1698 = vmatpush.msra.mxu0 %v1497
    %1699 = vmatpush.msra.mxu0 %v1493
    %1700 = vmatpush.msra.mxu0 %v1489
    %1701 = vmatpush.msra.mxu0 %v1485
    %1702 = vmatpush.msra.mxu0 %v1481
    %1703 = vmatpush.msra.mxu0 %v1477
    %1704 = vmatpush.msra.mxu0 %v1473
    %1705 = vmatpush.msra.mxu0 %v1469
    %1706 = vmatpush.msra.mxu0 %v1465
    %1707 = vmatmul.f32.gmra.mxu0 %v1460
    %v1708 = vpop.f32.mrf.mxu0
    %v1709 = vadd.f32 %v1566, %v1708
    %1710 = vdwg.mxu0
    %1711 = vmatpush.msra.mxu0 0.0
    %1712 = vmatpush.msra.mxu0 0.0
    %1713 = vmatpush.msra.mxu0 0.0
    %1714 = vmatpush.msra.mxu0 0.0
    %1715 = vmatpush.msra.mxu0 0.0
    %1716 = vmatpush.msra.mxu0 0.0
    %1717 = vmatpush.msra.mxu0 0.0
    %1718 = vmatpush.msra.mxu0 %v1561
    %1719 = vmatpush.msra.mxu0 %v1557
    %1720 = vmatpush.msra.mxu0 %v1553
    %1721 = vmatpush.msra.mxu0 %v1549
    %1722 = vmatpush.msra.mxu0 %v1545
    %1723 = vmatpush.msra.mxu0 %v1541
    %1724 = vmatpush.msra.mxu0 %v1537
    %1725 = vmatpush.msra.mxu0 %v1533
    %1726 = vmatpush.msra.mxu0 %v1529
    %1727 = vmatmul.f32.gmra.mxu0 %v1569
    %v1728 = vpop.f32.mrf.mxu0
    %v1729 = vadd.f32 %v1709, %v1728
    %1730 = vdwg.mxu0
    %v1731 = vmax.f32 %v1609, 0.0
    %v1732 = vmax.f32 %v1649, 0.0
    %v1733 = vmax.f32 %v1689, 0.0
    %v1734 = vmax.f32 %v1729, 0.0
    %v1735 = vld [vmem:[#allocation8] ss:$2 sm:$0xf]
    %v1736 = vld [vmem:[%s601] ss:$2 sm:$0xf]
    %1738 = vrot.lane.b32.xlu0 %v1734, 17
    %v1739 = vpop.permute.xlu0 %1738
    %1744 = vrot.lane.b32.xlu0 %v1731, 17
    %v1745 = vpop.permute.xlu0 %1744
    %1746 = vrot.lane.b32.xlu0 %v1732, 17
    %v1747 = vpop.permute.xlu0 %1746
    %1748 = vrot.lane.b32.xlu0 %v1733, 17
    %v1749 = vpop.permute.xlu0 %1748
    %v1750 = vsel %vm361, %v1745, %v1747
    %v1751 = vsel %vm361, %v1747, %v1749
    %v1752 = vsel %vm361, %v1749, %v1739
    %v1757 = vsel %vm361, %v1739, %v1745
    %vm1758 = vcmp.ge.s32.totalorder %v1735, 1
    %vm1759 = vcmp.ge.s32.totalorder %v1736, 1
    %vm1760 = vmand %vm1758, %vm1759
    %v1761 = vsel %vm1760, 1, 0
    %v1762 = vperm.slane %v1761, 0
    %v1763 = vperm.slane %v1761, 1
    %v1764 = vperm.slane %v1761, 2
    %v1765 = vperm.slane %v1761, 3
    %vm1766 = vcmp.eq.s32.totalorder %v1762, 1
    %vm1767 = vcmp.eq.s32.totalorder %v1763, 1
    %vm1768 = vcmp.eq.s32.totalorder %v1764, 1
    %vm1769 = vcmp.eq.s32.totalorder %v1765, 1
    %v1770 = vsel %vm1766, %v1757, 0.0
    %v1771 = vsel %vm1767, %v1750, 0.0
    %v1772 = vsel %vm1768, %v1751, 0.0
    %v1773 = vsel %vm1769, %v1752, 0.0
    %1774 = vst [vmem:[#allocation2] sm:$0xff] %v1770
    %1775 = vst [vmem:[#allocation2 + $0x8] sm:$0xff] %v1771
    %1776 = vst [vmem:[#allocation2 + $0x10] sm:$0xff] %v1772
    %1777 = vst [vmem:[#allocation2 + $0x18] sm:$0xff] %v1773
    %1778 = vrot.lane.b32.xlu0 %v1734, 16
    %v1779 = vpop.permute.xlu0 %1778
    %1781 = vrot.lane.b32.xlu0 %v1731, 16
    %v1782 = vpop.permute.xlu0 %1781
    %1783 = vrot.lane.b32.xlu0 %v1732, 16
    %v1784 = vpop.permute.xlu0 %1783
    %1785 = vrot.lane.b32.xlu0 %v1733, 16
    %v1786 = vpop.permute.xlu0 %1785
    %v1787 = vsel %vm352, %v1782, %v1784
    %v1788 = vsel %vm352, %v1784, %v1786
    %v1789 = vsel %vm352, %v1786, %v1779
    %v1794 = vsel %vm352, %v1779, %v1782
    %v1795 = vsel %vm1758, 1, 0
    %v1796 = vperm.slane %v1795, 0
    %v1797 = vperm.slane %v1795, 1
    %v1798 = vperm.slane %v1795, 2
    %v1799 = vperm.slane %v1795, 3
    %vm1800 = vcmp.eq.s32.totalorder %v1796, 1
    %vm1801 = vcmp.eq.s32.totalorder %v1797, 1
    %vm1802 = vcmp.eq.s32.totalorder %v1798, 1
    %vm1803 = vcmp.eq.s32.totalorder %v1799, 1
    %v1804 = vsel %vm1800, %v1794, 0.0
    %v1805 = vsel %vm1801, %v1787, 0.0
    %v1806 = vsel %vm1802, %v1788, 0.0
    %v1807 = vsel %vm1803, %v1789, 0.0
    %1808 = vst [vmem:[#allocation2 + $0x20] sm:$0xff] %v1804
    %1809 = vst [vmem:[#allocation2 + $0x28] sm:$0xff] %v1805
    %1810 = vst [vmem:[#allocation2 + $0x30] sm:$0xff] %v1806
    %1811 = vst [vmem:[#allocation2 + $0x38] sm:$0xff] %v1807
    %1812 = vrot.lane.b32.xlu0 %v1734, 15
    %v1813 = vpop.permute.xlu0 %1812
    %1815 = vrot.lane.b32.xlu0 %v1731, 15
    %v1816 = vpop.permute.xlu0 %1815
    %1817 = vrot.lane.b32.xlu0 %v1732, 15
    %v1818 = vpop.permute.xlu0 %1817
    %1819 = vrot.lane.b32.xlu0 %v1733, 15
    %v1820 = vpop.permute.xlu0 %1819
    %v1821 = vsel %vm342, %v1816, %v1818
    %v1822 = vsel %vm342, %v1818, %v1820
    %v1823 = vsel %vm342, %v1820, %v1813
    %v1828 = vsel %vm342, %v1813, %v1816
    %vm1829 = vcmp.lt.s32.totalorder %v1736, 15
    %vm1830 = vmand %vm1758, %vm1829
    %v1831 = vsel %vm1830, 1, 0
    %v1832 = vperm.slane %v1831, 0
    %v1833 = vperm.slane %v1831, 1
    %v1834 = vperm.slane %v1831, 2
    %v1835 = vperm.slane %v1831, 3
    %vm1836 = vcmp.eq.s32.totalorder %v1832, 1
    %vm1837 = vcmp.eq.s32.totalorder %v1833, 1
    %vm1838 = vcmp.eq.s32.totalorder %v1834, 1
    %vm1839 = vcmp.eq.s32.totalorder %v1835, 1
    %v1840 = vsel %vm1836, %v1828, 0.0
    %v1841 = vsel %vm1837, %v1821, 0.0
    %v1842 = vsel %vm1838, %v1822, 0.0
    %v1843 = vsel %vm1839, %v1823, 0.0
    %1844 = vst [vmem:[#allocation2 + $0x40] sm:$0xff] %v1840
    %1845 = vst [vmem:[#allocation2 + $0x48] sm:$0xff] %v1841
    %1846 = vst [vmem:[#allocation2 + $0x50] sm:$0xff] %v1842
    %1847 = vst [vmem:[#allocation2 + $0x58] sm:$0xff] %v1843
    %1848 = vrot.lane.b32.xlu0 %v1734, 1
    %v1849 = vpop.permute.xlu0 %1848
    %1851 = vrot.lane.b32.xlu0 %v1731, 1
    %v1852 = vpop.permute.xlu0 %1851
    %1853 = vrot.lane.b32.xlu0 %v1732, 1
    %v1854 = vpop.permute.xlu0 %1853
    %1855 = vrot.lane.b32.xlu0 %v1733, 1
    %v1856 = vpop.permute.xlu0 %1855
    %v1857 = vsel %vm268, %v1852, %v1854
    %v1858 = vsel %vm268, %v1854, %v1856
    %v1859 = vsel %vm268, %v1856, %v1849
    %v1864 = vsel %vm268, %v1849, %v1852
    %v1865 = vsel %vm1759, 1, 0
    %v1866 = vperm.slane %v1865, 0
    %v1867 = vperm.slane %v1865, 1
    %v1868 = vperm.slane %v1865, 2
    %v1869 = vperm.slane %v1865, 3
    %vm1870 = vcmp.eq.s32.totalorder %v1866, 1
    %vm1871 = vcmp.eq.s32.totalorder %v1867, 1
    %vm1872 = vcmp.eq.s32.totalorder %v1868, 1
    %vm1873 = vcmp.eq.s32.totalorder %v1869, 1
    %v1874 = vsel %vm1870, %v1864, 0.0
    %v1875 = vsel %vm1871, %v1857, 0.0
    %v1876 = vsel %vm1872, %v1858, 0.0
    %v1877 = vsel %vm1873, %v1859, 0.0
    %1878 = vst [vmem:[#allocation2 + $0x60] sm:$0xff] %v1874
    %1879 = vst [vmem:[#allocation2 + $0x68] sm:$0xff] %v1875
    %1880 = vst [vmem:[#allocation2 + $0x70] sm:$0xff] %v1876
    %1881 = vst [vmem:[#allocation2 + $0x78] sm:$0xff] %v1877
    %1882 = vst [vmem:[#allocation2 + $0x80] sm:$0xff] %v1731
    %1883 = vst [vmem:[#allocation2 + $0x88] sm:$0xff] %v1732
    %1884 = vst [vmem:[#allocation2 + $0x90] sm:$0xff] %v1733
    %1885 = vst [vmem:[#allocation2 + $0x98] sm:$0xff] %v1734
    %1886 = vrot.lane.b32.xlu0 %v1731, 127
    %v1887 = vpop.permute.xlu0 %1886
    %1888 = vrot.lane.b32.xlu0 %v1732, 127
    %v1889 = vpop.permute.xlu0 %1888
    %1890 = vrot.lane.b32.xlu0 %v1733, 127
    %v1891 = vpop.permute.xlu0 %1890
    %1892 = vrot.lane.b32.xlu0 %v1734, 127
    %v1893 = vpop.permute.xlu0 %1892
    %v1894 = vsel %vm258, %v1887, %v1889
    %v1895 = vsel %vm258, %v1889, %v1891
    %v1896 = vsel %vm258, %v1891, %v1893
    %v1902 = vsel %vm258, %v1893, %v1887
    %v1903 = vsel %vm1829, 1, 0
    %v1904 = vperm.slane %v1903, 0
    %v1905 = vperm.slane %v1903, 1
    %v1906 = vperm.slane %v1903, 2
    %v1907 = vperm.slane %v1903, 3
    %vm1908 = vcmp.eq.s32.totalorder %v1904, 1
    %vm1909 = vcmp.eq.s32.totalorder %v1905, 1
    %vm1910 = vcmp.eq.s32.totalorder %v1906, 1
    %vm1911 = vcmp.eq.s32.totalorder %v1907, 1
    %v1912 = vsel %vm1908, %v1894, 0.0
    %v1913 = vsel %vm1909, %v1895, 0.0
    %v1914 = vsel %vm1910, %v1896, 0.0
    %v1915 = vsel %vm1911, %v1902, 0.0
    %1916 = vst [vmem:[#allocation2 + $0xa0] sm:$0xff] %v1912
    %1917 = vst [vmem:[#allocation2 + $0xa8] sm:$0xff] %v1913
    %1918 = vst [vmem:[#allocation2 + $0xb0] sm:$0xff] %v1914
    %1919 = vst [vmem:[#allocation2 + $0xb8] sm:$0xff] %v1915
    %1920 = vrot.lane.b32.xlu0 %v1731, 113
    %v1921 = vpop.permute.xlu0 %1920
    %1922 = vrot.lane.b32.xlu0 %v1732, 113
    %v1923 = vpop.permute.xlu0 %1922
    %1924 = vrot.lane.b32.xlu0 %v1733, 113
    %v1925 = vpop.permute.xlu0 %1924
    %1926 = vrot.lane.b32.xlu0 %v1734, 113
    %v1927 = vpop.permute.xlu0 %1926
    %v1928 = vsel %vm182, %v1921, %v1923
    %v1929 = vsel %vm182, %v1923, %v1925
    %v1930 = vsel %vm182, %v1925, %v1927
    %v1936 = vsel %vm182, %v1927, %v1921
    %vm1937 = vcmp.lt.s32.totalorder %v1735, 15
    %vm1938 = vmand %vm1937, %vm1759
    %v1939 = vsel %vm1938, 1, 0
    %v1940 = vperm.slane %v1939, 0
    %v1941 = vperm.slane %v1939, 1
    %v1942 = vperm.slane %v1939, 2
    %v1943 = vperm.slane %v1939, 3
    %vm1944 = vcmp.eq.s32.totalorder %v1940, 1
    %vm1945 = vcmp.eq.s32.totalorder %v1941, 1
    %vm1946 = vcmp.eq.s32.totalorder %v1942, 1
    %vm1947 = vcmp.eq.s32.totalorder %v1943, 1
    %v1948 = vsel %vm1944, %v1928, 0.0
    %v1949 = vsel %vm1945, %v1929, 0.0
    %v1950 = vsel %vm1946, %v1930, 0.0
    %v1951 = vsel %vm1947, %v1936, 0.0
    %1952 = vst [vmem:[#allocation2 + $0xc0] sm:$0xff] %v1948
    %1953 = vst [vmem:[#allocation2 + $0xc8] sm:$0xff] %v1949
    %1954 = vst [vmem:[#allocation2 + $0xd0] sm:$0xff] %v1950
    %1955 = vst [vmem:[#allocation2 + $0xd8] sm:$0xff] %v1951
    %1956 = vrot.lane.b32.xlu0 %v1731, 112
    %v1957 = vpop.permute.xlu0 %1956
    %1958 = vrot.lane.b32.xlu0 %v1732, 112
    %v1959 = vpop.permute.xlu0 %1958
    %1960 = vrot.lane.b32.xlu0 %v1733, 112
    %v1961 = vpop.permute.xlu0 %1960
    %1962 = vrot.lane.b32.xlu0 %v1734, 112
    %v1963 = vpop.permute.xlu0 %1962
    %v1964 = vsel %vm173, %v1957, %v1959
    %v1965 = vsel %vm173, %v1959, %v1961
    %v1966 = vsel %vm173, %v1961, %v1963
    %v1972 = vsel %vm173, %v1963, %v1957
    %v1973 = vsel %vm1937, 1, 0
    %v1974 = vperm.slane %v1973, 0
    %v1975 = vperm.slane %v1973, 1
    %v1976 = vperm.slane %v1973, 2
    %v1977 = vperm.slane %v1973, 3
    %vm1978 = vcmp.eq.s32.totalorder %v1974, 1
    %vm1979 = vcmp.eq.s32.totalorder %v1975, 1
    %vm1980 = vcmp.eq.s32.totalorder %v1976, 1
    %vm1981 = vcmp.eq.s32.totalorder %v1977, 1
    %v1982 = vsel %vm1978, %v1964, 0.0
    %v1983 = vsel %vm1979, %v1965, 0.0
    %v1984 = vsel %vm1980, %v1966, 0.0
    %v1985 = vsel %vm1981, %v1972, 0.0
    %1986 = vst [vmem:[#allocation2 + $0xe0] sm:$0xff] %v1982
    %1987 = vst [vmem:[#allocation2 + $0xe8] sm:$0xff] %v1983
    %1988 = vst [vmem:[#allocation2 + $0xf0] sm:$0xff] %v1984
    %1989 = vst [vmem:[#allocation2 + $0xf8] sm:$0xff] %v1985
    %1990 = vrot.lane.b32.xlu0 %v1731, 111
    %v1991 = vpop.permute.xlu0 %1990
    %1992 = vrot.lane.b32.xlu0 %v1732, 111
    %v1993 = vpop.permute.xlu0 %1992
    %1994 = vrot.lane.b32.xlu0 %v1733, 111
    %v1995 = vpop.permute.xlu0 %1994
    %1996 = vrot.lane.b32.xlu0 %v1734, 111
    %v1997 = vpop.permute.xlu0 %1996
    %v1998 = vsel %vm162, %v1991, %v1993
    %v1999 = vsel %vm162, %v1993, %v1995
    %v2000 = vsel %vm162, %v1995, %v1997
    %v2006 = vsel %vm162, %v1997, %v1991
    %vm2007 = vmand %vm1937, %vm1829
    %v2008 = vsel %vm2007, 1, 0
    %v2009 = vperm.slane %v2008, 0
    %v2010 = vperm.slane %v2008, 1
    %v2011 = vperm.slane %v2008, 2
    %v2012 = vperm.slane %v2008, 3
    %vm2013 = vcmp.eq.s32.totalorder %v2009, 1
    %vm2014 = vcmp.eq.s32.totalorder %v2010, 1
    %vm2015 = vcmp.eq.s32.totalorder %v2011, 1
    %vm2016 = vcmp.eq.s32.totalorder %v2012, 1
    %v2017 = vsel %vm2013, %v1998, 0.0
    %v2018 = vsel %vm2014, %v1999, 0.0
    %v2019 = vsel %vm2015, %v2000, 0.0
    %v2020 = vsel %vm2016, %v2006, 0.0
    %2021 = vst [vmem:[#allocation2 + $0x100] sm:$0xff] %v2017
    %2022 = vst [vmem:[#allocation2 + $0x108] sm:$0xff] %v2018
    %2023 = vst [vmem:[#allocation2 + $0x110] sm:$0xff] %v2019
    %2024 = vst [vmem:[#allocation2 + $0x118] sm:$0xff] %v2020
    %v2025 = vld [vmem:[%s9] sm:$0xff]
    %v2026 = vld [vmem:[%s9 + $0x8] sm:$0xff]
    %v2027 = vld [vmem:[#allocation2] sm:$0xff]
    %v2028 = vld [vmem:[#allocation2 + $0x8] sm:$0xff]
    %v2029 = vld [vmem:[#allocation2 + $0x10] sm:$0xff]
    %v2030 = vld [vmem:[#allocation2 + $0x18] sm:$0xff]
    %v2031 = vld [vmem:[#allocation2 + $0x20] sm:$0xff]
    %v2032 = vld [vmem:[#allocation2 + $0x28] sm:$0xff]
    %v2033 = vld [vmem:[#allocation2 + $0x30] sm:$0xff]
    %v2034 = vld [vmem:[#allocation2 + $0x38] sm:$0xff]
    %v2035 = vld [vmem:[#allocation2 + $0x40] sm:$0xff]
    %v2036 = vld [vmem:[#allocation2 + $0x48] sm:$0xff]
    %v2037 = vld [vmem:[#allocation2 + $0x50] sm:$0xff]
    %v2038 = vld [vmem:[#allocation2 + $0x58] sm:$0xff]
    %v2039 = vld [vmem:[#allocation2 + $0x60] sm:$0xff]
    %v2040 = vld [vmem:[#allocation2 + $0x68] sm:$0xff]
    %v2041 = vld [vmem:[#allocation2 + $0x70] sm:$0xff]
    %v2042 = vld [vmem:[#allocation2 + $0x78] sm:$0xff]
    %v2043 = vld [vmem:[#allocation2 + $0x80] sm:$0xff]
    %v2044 = vld [vmem:[#allocation2 + $0x88] sm:$0xff]
    %v2045 = vld [vmem:[#allocation2 + $0x90] sm:$0xff]
    %v2046 = vld [vmem:[#allocation2 + $0x98] sm:$0xff]
    %v2047 = vld [vmem:[#allocation2 + $0xa0] sm:$0xff]
    %v2048 = vld [vmem:[#allocation2 + $0xa8] sm:$0xff]
    %v2049 = vld [vmem:[#allocation2 + $0xb0] sm:$0xff]
    %v2050 = vld [vmem:[#allocation2 + $0xb8] sm:$0xff]
    %v2051 = vld [vmem:[#allocation2 + $0xc0] sm:$0xff]
    %v2052 = vld [vmem:[#allocation2 + $0xc8] sm:$0xff]
    %v2053 = vld [vmem:[#allocation2 + $0xd0] sm:$0xff]
    %v2054 = vld [vmem:[#allocation2 + $0xd8] sm:$0xff]
    %v2055 = vld [vmem:[#allocation2 + $0xe0] sm:$0xff]
    %v2056 = vld [vmem:[#allocation2 + $0xe8] sm:$0xff]
    %v2057 = vld [vmem:[#allocation2 + $0xf0] sm:$0xff]
    %v2058 = vld [vmem:[#allocation2 + $0xf8] sm:$0xff]
    %v2059 = vld [vmem:[#allocation2 + $0x100] sm:$0xff]
    %v2060 = vld [vmem:[#allocation2 + $0x108] sm:$0xff]
    %v2061 = vld [vmem:[#allocation2 + $0x110] sm:$0xff]
    %v2062 = vld [vmem:[#allocation2 + $0x118] sm:$0xff]
    %v2063 = vld [vmem:[%s10] sm:$0xff]
    %v2064 = vld [vmem:[%s10 + $0x8] sm:$0xff]
    %2066 = vset.pattern.permute.xlu0 0
    %2067 = vperm.xlu0 %2066, %v2063
    %v2068 = vpop.permute.xlu0 %2067
    %2071 = vset.pattern.permute.xlu0 0
    %2072 = vperm.xlu0 %2071, %v2064
    %v2073 = vpop.permute.xlu0 %2072
    %v2076 = vsel %vm411, %v2025, 0
    %v2079 = vsel %vm411, %v2026, 0
    %2081 = vmatpush.msra.mxu0 0.0
    %2082 = vmatpush.msra.mxu0 0.0
    %2083 = vmatpush.msra.mxu0 0.0
    %2084 = vmatpush.msra.mxu0 0.0
    %2085 = vmatpush.msra.mxu0 0.0
    %2086 = vmatpush.msra.mxu0 0.0
    %2087 = vmatpush.msra.mxu0 0.0
    %2088 = vmatpush.msra.mxu0 %v2059
    %2089 = vmatpush.msra.mxu0 %v2055
    %2090 = vmatpush.msra.mxu0 %v2051
    %2091 = vmatpush.msra.mxu0 %v2047
    %2092 = vmatpush.msra.mxu0 %v2043
    %2093 = vmatpush.msra.mxu0 %v2039
    %2094 = vmatpush.msra.mxu0 %v2035
    %2095 = vmatpush.msra.mxu0 %v2031
    %2096 = vmatpush.msra.mxu0 %v2027
    %2097 = vmatmul.f32.gmra.mxu0 %v2076
    %v2098 = vpop.f32.mrf.mxu0
    %v2099 = vadd.f32 %v2068, %v2098
    %2100 = vmatmul.f32.gmra.mxu0 %v2079
    %v2101 = vpop.f32.mrf.mxu0
    %v2102 = vadd.f32 %v2073, %v2101
    %2103 = vdwg.mxu0
    %2104 = vmatpush.msra.mxu0 0.0
    %2105 = vmatpush.msra.mxu0 0.0
    %2106 = vmatpush.msra.mxu0 0.0
    %2107 = vmatpush.msra.mxu0 0.0
    %2108 = vmatpush.msra.mxu0 0.0
    %2109 = vmatpush.msra.mxu0 0.0
    %2110 = vmatpush.msra.mxu0 0.0
    %2111 = vmatpush.msra.mxu0 %v2060
    %2112 = vmatpush.msra.mxu0 %v2056
    %2113 = vmatpush.msra.mxu0 %v2052
    %2114 = vmatpush.msra.mxu0 %v2048
    %2115 = vmatpush.msra.mxu0 %v2044
    %2116 = vmatpush.msra.mxu0 %v2040
    %2117 = vmatpush.msra.mxu0 %v2036
    %2118 = vmatpush.msra.mxu0 %v2032
    %2119 = vmatpush.msra.mxu0 %v2028
    %2120 = vmatmul.f32.gmra.mxu0 %v2076
    %v2121 = vpop.f32.mrf.mxu0
    %v2122 = vadd.f32 %v2068, %v2121
    %2123 = vmatmul.f32.gmra.mxu0 %v2079
    %v2124 = vpop.f32.mrf.mxu0
    %v2125 = vadd.f32 %v2073, %v2124
    %2126 = vdwg.mxu0
    %2127 = vmatpush.msra.mxu0 0.0
    %2128 = vmatpush.msra.mxu0 0.0
    %2129 = vmatpush.msra.mxu0 0.0
    %2130 = vmatpush.msra.mxu0 0.0
    %2131 = vmatpush.msra.mxu0 0.0
    %2132 = vmatpush.msra.mxu0 0.0
    %2133 = vmatpush.msra.mxu0 0.0
    %2134 = vmatpush.msra.mxu0 %v2061
    %2135 = vmatpush.msra.mxu0 %v2057
    %2136 = vmatpush.msra.mxu0 %v2053
    %2137 = vmatpush.msra.mxu0 %v2049
    %2138 = vmatpush.msra.mxu0 %v2045
    %2139 = vmatpush.msra.mxu0 %v2041
    %2140 = vmatpush.msra.mxu0 %v2037
    %2141 = vmatpush.msra.mxu0 %v2033
    %2142 = vmatpush.msra.mxu0 %v2029
    %2143 = vmatmul.f32.gmra.mxu0 %v2076
    %v2144 = vpop.f32.mrf.mxu0
    %v2145 = vadd.f32 %v2068, %v2144
    %2146 = vmatmul.f32.gmra.mxu0 %v2079
    %v2147 = vpop.f32.mrf.mxu0
    %v2148 = vadd.f32 %v2073, %v2147
    %2149 = vdwg.mxu0
    %2150 = vmatpush.msra.mxu0 0.0
    %2151 = vmatpush.msra.mxu0 0.0
    %2152 = vmatpush.msra.mxu0 0.0
    %2153 = vmatpush.msra.mxu0 0.0
    %2154 = vmatpush.msra.mxu0 0.0
    %2155 = vmatpush.msra.mxu0 0.0
    %2156 = vmatpush.msra.mxu0 0.0
    %2157 = vmatpush.msra.mxu0 %v2062
    %2158 = vmatpush.msra.mxu0 %v2058
    %2159 = vmatpush.msra.mxu0 %v2054
    %2160 = vmatpush.msra.mxu0 %v2050
    %2161 = vmatpush.msra.mxu0 %v2046
    %2162 = vmatpush.msra.mxu0 %v2042
    %2163 = vmatpush.msra.mxu0 %v2038
    %2164 = vmatpush.msra.mxu0 %v2034
    %2165 = vmatpush.msra.mxu0 %v2030
    %2166 = vmatmul.f32.gmra.mxu0 %v2076
    %v2167 = vpop.f32.mrf.mxu0
    %v2168 = vadd.f32 %v2068, %v2167
    %2169 = vmatmul.f32.gmra.mxu0 %v2079
    %v2170 = vpop.f32.mrf.mxu0
    %v2171 = vadd.f32 %v2073, %v2170
    %2172 = vdwg.mxu0
    %v2173 = vmax.f32 %v2099, 0.0
    %v2174 = vmax.f32 %v2122, 0.0
    %v2175 = vmax.f32 %v2145, 0.0
    %v2176 = vmax.f32 %v2168, 0.0
    %v2177 = vmax.f32 %v2102, 0.0
    %v2178 = vmax.f32 %v2125, 0.0
    %v2179 = vmax.f32 %v2148, 0.0
    %v2180 = vmax.f32 %v2171, 0.0
    %v2181 = vld [vmem:[#allocation10] sm:$0xff]
    %v2182 = vld [vmem:[#allocation10 + $0x8] sm:$0xff]
    %v2183 = vld [vmem:[#allocation10 + $0x10] sm:$0xff]
    %v2184 = vld [vmem:[#allocation10 + $0x18] sm:$0xff]
    %v2185 = vld [vmem:[#allocation10 + $0x20] sm:$0xff]
    %v2186 = vld [vmem:[#allocation10 + $0x28] sm:$0xff]
    %v2187 = vld [vmem:[#allocation10 + $0x30] sm:$0xff]
    %v2188 = vld [vmem:[#allocation10 + $0x38] sm:$0xff]
    %v2189 = vld [vmem:[#allocation10 + $0x40] sm:$0xff]
    %v2190 = vld [vmem:[#allocation10 + $0x48] sm:$0xff]
    %v2191 = vld [vmem:[#allocation10 + $0x50] sm:$0xff]
    %v2192 = vld [vmem:[#allocation10 + $0x58] sm:$0xff]
    %v2193 = vld [vmem:[#allocation10 + $0x60] sm:$0xff]
    %v2194 = vld [vmem:[#allocation10 + $0x68] sm:$0xff]
    %v2195 = vld [vmem:[#allocation10 + $0x70] sm:$0xff]
    %v2196 = vld [vmem:[#allocation10 + $0x78] sm:$0xff]
    %v2197 = vld [vmem:[#allocation10 + $0x80] sm:$0xff]
    %v2198 = vld [vmem:[#allocation10 + $0x88] sm:$0xff]
    %v2199 = vld [vmem:[#allocation10 + $0x90] sm:$0xff]
    %v2200 = vld [vmem:[#allocation10 + $0x98] sm:$0xff]
    %v2201 = vld [vmem:[#allocation10 + $0xa0] sm:$0xff]
    %v2202 = vld [vmem:[#allocation10 + $0xa8] sm:$0xff]
    %v2203 = vld [vmem:[#allocation10 + $0xb0] sm:$0xff]
    %v2204 = vld [vmem:[#allocation10 + $0xb8] sm:$0xff]
    %v2205 = vld [vmem:[#allocation10 + $0xc0] sm:$0xff]
    %v2206 = vld [vmem:[#allocation10 + $0xc8] sm:$0xff]
    %v2207 = vld [vmem:[#allocation10 + $0xd0] sm:$0xff]
    %v2208 = vld [vmem:[#allocation10 + $0xd8] sm:$0xff]
    %v2209 = vld [vmem:[#allocation10 + $0xe0] sm:$0xff]
    %v2210 = vld [vmem:[#allocation10 + $0xe8] sm:$0xff]
    %v2211 = vld [vmem:[#allocation10 + $0xf0] sm:$0xff]
    %v2212 = vld [vmem:[#allocation10 + $0xf8] sm:$0xff]
    %v2213 = vld [vmem:[#allocation10 + $0x100] sm:$0xff]
    %v2214 = vld [vmem:[#allocation10 + $0x108] sm:$0xff]
    %v2215 = vld [vmem:[#allocation10 + $0x110] sm:$0xff]
    %v2216 = vld [vmem:[#allocation10 + $0x118] sm:$0xff]
    %v2217 = vld [vmem:[#allocation10 + $0x120] sm:$0xff]
    %v2218 = vld [vmem:[#allocation10 + $0x128] sm:$0xff]
    %v2219 = vld [vmem:[#allocation10 + $0x130] sm:$0xff]
    %v2220 = vld [vmem:[#allocation10 + $0x138] sm:$0xff]
    %v2221 = vld [vmem:[#allocation10 + $0x140] sm:$0xff]
    %v2222 = vld [vmem:[#allocation10 + $0x148] sm:$0xff]
    %v2223 = vld [vmem:[#allocation10 + $0x150] sm:$0xff]
    %v2224 = vld [vmem:[#allocation10 + $0x158] sm:$0xff]
    %v2225 = vld [vmem:[#allocation10 + $0x160] sm:$0xff]
    %v2226 = vld [vmem:[#allocation10 + $0x168] sm:$0xff]
    %v2227 = vld [vmem:[#allocation10 + $0x170] sm:$0xff]
    %v2228 = vld [vmem:[#allocation10 + $0x178] sm:$0xff]
    %v2229 = vld [vmem:[#allocation10 + $0x180] sm:$0xff]
    %v2230 = vld [vmem:[#allocation10 + $0x188] sm:$0xff]
    %v2231 = vld [vmem:[#allocation10 + $0x190] sm:$0xff]
    %v2232 = vld [vmem:[#allocation10 + $0x198] sm:$0xff]
    %v2233 = vld [vmem:[#allocation10 + $0x1a0] sm:$0xff]
    %v2234 = vld [vmem:[#allocation10 + $0x1a8] sm:$0xff]
    %v2235 = vld [vmem:[#allocation10 + $0x1b0] sm:$0xff]
    %v2236 = vld [vmem:[#allocation10 + $0x1b8] sm:$0xff]
    %v2237 = vld [vmem:[#allocation10 + $0x1c0] sm:$0xff]
    %v2238 = vld [vmem:[#allocation10 + $0x1c8] sm:$0xff]
    %v2239 = vld [vmem:[#allocation10 + $0x1d0] sm:$0xff]
    %v2240 = vld [vmem:[#allocation10 + $0x1d8] sm:$0xff]
    %v2241 = vld [vmem:[#allocation10 + $0x1e0] sm:$0xff]
    %v2242 = vld [vmem:[#allocation10 + $0x1e8] sm:$0xff]
    %v2243 = vld [vmem:[#allocation10 + $0x1f0] sm:$0xff]
    %v2244 = vld [vmem:[#allocation10 + $0x1f8] sm:$0xff]
    %v2245 = vld [vmem:[#allocation10 + $0x200] sm:$0xff]
    %v2246 = vld [vmem:[#allocation10 + $0x208] sm:$0xff]
    %v2247 = vld [vmem:[#allocation10 + $0x210] sm:$0xff]
    %v2248 = vld [vmem:[#allocation10 + $0x218] sm:$0xff]
    %v2249 = vld [vmem:[#allocation10 + $0x220] sm:$0xff]
    %v2250 = vld [vmem:[#allocation10 + $0x228] sm:$0xff]
    %v2251 = vld [vmem:[#allocation10 + $0x230] sm:$0xff]
    %v2252 = vld [vmem:[#allocation10 + $0x238] sm:$0xff]
    %v2253 = vld [vmem:[#allocation10 + $0x240] sm:$0xff]
    %v2254 = vld [vmem:[#allocation10 + $0x248] sm:$0xff]
    %v2255 = vld [vmem:[#allocation10 + $0x250] sm:$0xff]
    %v2256 = vld [vmem:[#allocation10 + $0x258] sm:$0xff]
    %v2257 = vld [vmem:[#allocation10 + $0x260] sm:$0xff]
    %v2258 = vld [vmem:[#allocation10 + $0x268] sm:$0xff]
    %v2259 = vld [vmem:[#allocation10 + $0x270] sm:$0xff]
    %v2260 = vld [vmem:[#allocation10 + $0x278] sm:$0xff]
    %v2261 = vld [vmem:[#allocation10 + $0x280] sm:$0xff]
    %v2262 = vld [vmem:[#allocation10 + $0x288] sm:$0xff]
    %v2263 = vld [vmem:[#allocation10 + $0x290] sm:$0xff]
    %v2264 = vld [vmem:[#allocation10 + $0x298] sm:$0xff]
    %v2265 = vld [vmem:[#allocation10 + $0x2a0] sm:$0xff]
    %v2266 = vld [vmem:[#allocation10 + $0x2a8] sm:$0xff]
    %v2267 = vld [vmem:[#allocation10 + $0x2b0] sm:$0xff]
    %v2268 = vld [vmem:[#allocation10 + $0x2b8] sm:$0xff]
    %v2269 = vld [vmem:[#allocation10 + $0x2c0] sm:$0xff]
    %v2270 = vld [vmem:[#allocation10 + $0x2c8] sm:$0xff]
    %v2271 = vld [vmem:[#allocation10 + $0x2d0] sm:$0xff]
    %v2272 = vld [vmem:[#allocation10 + $0x2d8] sm:$0xff]
    %v2273 = vld [vmem:[#allocation10 + $0x2e0] sm:$0xff]
    %v2274 = vld [vmem:[#allocation10 + $0x2e8] sm:$0xff]
    %v2275 = vld [vmem:[#allocation10 + $0x2f0] sm:$0xff]
    %v2276 = vld [vmem:[#allocation10 + $0x2f8] sm:$0xff]
    %v2277 = vld [vmem:[#allocation10 + $0x300] sm:$0xff]
    %v2278 = vld [vmem:[#allocation10 + $0x308] sm:$0xff]
    %v2279 = vld [vmem:[#allocation10 + $0x310] sm:$0xff]
    %v2280 = vld [vmem:[#allocation10 + $0x318] sm:$0xff]
    %v2281 = vld [vmem:[#allocation10 + $0x320] sm:$0xff]
    %v2282 = vld [vmem:[#allocation10 + $0x328] sm:$0xff]
    %v2283 = vld [vmem:[#allocation10 + $0x330] sm:$0xff]
    %v2284 = vld [vmem:[#allocation10 + $0x338] sm:$0xff]
    %v2285 = vld [vmem:[#allocation10 + $0x340] sm:$0xff]
    %v2286 = vld [vmem:[#allocation10 + $0x348] sm:$0xff]
    %v2287 = vld [vmem:[#allocation10 + $0x350] sm:$0xff]
    %v2288 = vld [vmem:[#allocation10 + $0x358] sm:$0xff]
    %v2289 = vld [vmem:[#allocation10 + $0x360] sm:$0xff]
    %v2290 = vld [vmem:[#allocation10 + $0x368] sm:$0xff]
    %v2291 = vld [vmem:[#allocation10 + $0x370] sm:$0xff]
    %v2292 = vld [vmem:[#allocation10 + $0x378] sm:$0xff]
    %v2293 = vld [vmem:[#allocation10 + $0x380] sm:$0xff]
    %v2294 = vld [vmem:[#allocation10 + $0x388] sm:$0xff]
    %v2295 = vld [vmem:[#allocation10 + $0x390] sm:$0xff]
    %v2296 = vld [vmem:[#allocation10 + $0x398] sm:$0xff]
    %v2297 = vld [vmem:[#allocation10 + $0x3a0] sm:$0xff]
    %v2298 = vld [vmem:[#allocation10 + $0x3a8] sm:$0xff]
    %v2299 = vld [vmem:[#allocation10 + $0x3b0] sm:$0xff]
    %v2300 = vld [vmem:[#allocation10 + $0x3b8] sm:$0xff]
    %v2301 = vld [vmem:[#allocation10 + $0x3c0] sm:$0xff]
    %v2302 = vld [vmem:[#allocation10 + $0x3c8] sm:$0xff]
    %v2303 = vld [vmem:[#allocation10 + $0x3d0] sm:$0xff]
    %v2304 = vld [vmem:[#allocation10 + $0x3d8] sm:$0xff]
    %v2305 = vld [vmem:[#allocation10 + $0x3e0] sm:$0xff]
    %v2306 = vld [vmem:[#allocation10 + $0x3e8] sm:$0xff]
    %v2307 = vld [vmem:[#allocation10 + $0x3f0] sm:$0xff]
    %v2308 = vld [vmem:[#allocation10 + $0x3f8] sm:$0xff]
    %v2309 = vld [vmem:[#allocation10 + $0x400] sm:$0xff]
    %v2310 = vld [vmem:[#allocation10 + $0x408] sm:$0xff]
    %v2311 = vld [vmem:[#allocation10 + $0x410] sm:$0xff]
    %v2312 = vld [vmem:[#allocation10 + $0x418] sm:$0xff]
    %v2313 = vld [vmem:[#allocation10 + $0x420] sm:$0xff]
    %v2314 = vld [vmem:[#allocation10 + $0x428] sm:$0xff]
    %v2315 = vld [vmem:[#allocation10 + $0x430] sm:$0xff]
    %v2316 = vld [vmem:[#allocation10 + $0x438] sm:$0xff]
    %v2317 = vld [vmem:[#allocation10 + $0x440] sm:$0xff]
    %v2318 = vld [vmem:[#allocation10 + $0x448] sm:$0xff]
    %v2319 = vld [vmem:[#allocation10 + $0x450] sm:$0xff]
    %v2320 = vld [vmem:[#allocation10 + $0x458] sm:$0xff]
    %v2321 = vld [vmem:[#allocation10 + $0x460] sm:$0xff]
    %v2322 = vld [vmem:[#allocation10 + $0x468] sm:$0xff]
    %v2323 = vld [vmem:[#allocation10 + $0x470] sm:$0xff]
    %v2324 = vld [vmem:[#allocation10 + $0x478] sm:$0xff]
    %v2325 = vld [vmem:[#allocation10 + $0x480] sm:$0xff]
    %v2326 = vld [vmem:[#allocation10 + $0x488] sm:$0xff]
    %v2327 = vld [vmem:[#allocation10 + $0x490] sm:$0xff]
    %v2328 = vld [vmem:[#allocation10 + $0x498] sm:$0xff]
    %v2329 = vld [vmem:[#allocation10 + $0x4a0] sm:$0xff]
    %v2330 = vld [vmem:[#allocation10 + $0x4a8] sm:$0xff]
    %v2331 = vld [vmem:[#allocation10 + $0x4b0] sm:$0xff]
    %v2332 = vld [vmem:[#allocation10 + $0x4b8] sm:$0xff]
    %v2333 = vld [vmem:[#allocation10 + $0x4c0] sm:$0xff]
    %v2334 = vld [vmem:[#allocation10 + $0x4c8] sm:$0xff]
    %v2335 = vld [vmem:[#allocation10 + $0x4d0] sm:$0xff]
    %v2336 = vld [vmem:[#allocation10 + $0x4d8] sm:$0xff]
    %v2337 = vld [vmem:[#allocation10 + $0x4e0] sm:$0xff]
    %v2338 = vld [vmem:[#allocation10 + $0x4e8] sm:$0xff]
    %v2339 = vld [vmem:[#allocation10 + $0x4f0] sm:$0xff]
    %v2340 = vld [vmem:[#allocation10 + $0x4f8] sm:$0xff]
    %v2341 = vld [vmem:[#allocation10 + $0x500] sm:$0xff]
    %v2342 = vld [vmem:[#allocation10 + $0x508] sm:$0xff]
    %v2343 = vld [vmem:[#allocation10 + $0x510] sm:$0xff]
    %v2344 = vld [vmem:[#allocation10 + $0x518] sm:$0xff]
    %v2345 = vld [vmem:[#allocation10 + $0x520] sm:$0xff]
    %v2346 = vld [vmem:[#allocation10 + $0x528] sm:$0xff]
    %v2347 = vld [vmem:[#allocation10 + $0x530] sm:$0xff]
    %v2348 = vld [vmem:[#allocation10 + $0x538] sm:$0xff]
    %v2349 = vld [vmem:[#allocation10 + $0x540] sm:$0xff]
    %v2350 = vld [vmem:[#allocation10 + $0x548] sm:$0xff]
    %v2351 = vld [vmem:[#allocation10 + $0x550] sm:$0xff]
    %v2352 = vld [vmem:[#allocation10 + $0x558] sm:$0xff]
    %v2353 = vld [vmem:[#allocation10 + $0x560] sm:$0xff]
    %v2354 = vld [vmem:[#allocation10 + $0x568] sm:$0xff]
    %v2355 = vld [vmem:[#allocation10 + $0x570] sm:$0xff]
    %v2356 = vld [vmem:[#allocation10 + $0x578] sm:$0xff]
    %v2357 = vld [vmem:[#allocation10 + $0x580] sm:$0xff]
    %v2358 = vld [vmem:[#allocation10 + $0x588] sm:$0xff]
    %v2359 = vld [vmem:[#allocation10 + $0x590] sm:$0xff]
    %v2360 = vld [vmem:[#allocation10 + $0x598] sm:$0xff]
    %v2361 = vld [vmem:[#allocation10 + $0x5a0] sm:$0xff]
    %v2362 = vld [vmem:[#allocation10 + $0x5a8] sm:$0xff]
    %v2363 = vld [vmem:[#allocation10 + $0x5b0] sm:$0xff]
    %v2364 = vld [vmem:[#allocation10 + $0x5b8] sm:$0xff]
    %v2365 = vld [vmem:[#allocation10 + $0x5c0] sm:$0xff]
    %v2366 = vld [vmem:[#allocation10 + $0x5c8] sm:$0xff]
    %v2367 = vld [vmem:[#allocation10 + $0x5d0] sm:$0xff]
    %v2368 = vld [vmem:[#allocation10 + $0x5d8] sm:$0xff]
    %v2369 = vld [vmem:[#allocation10 + $0x5e0] sm:$0xff]
    %v2370 = vld [vmem:[#allocation10 + $0x5e8] sm:$0xff]
    %v2371 = vld [vmem:[#allocation10 + $0x5f0] sm:$0xff]
    %v2372 = vld [vmem:[#allocation10 + $0x5f8] sm:$0xff]
    %v2373 = vld [vmem:[#allocation10 + $0x600] sm:$0xff]
    %v2374 = vld [vmem:[#allocation10 + $0x608] sm:$0xff]
    %v2375 = vld [vmem:[#allocation10 + $0x610] sm:$0xff]
    %v2376 = vld [vmem:[#allocation10 + $0x618] sm:$0xff]
    %v2377 = vld [vmem:[#allocation10 + $0x620] sm:$0xff]
    %v2378 = vld [vmem:[#allocation10 + $0x628] sm:$0xff]
    %v2379 = vld [vmem:[#allocation10 + $0x630] sm:$0xff]
    %v2380 = vld [vmem:[#allocation10 + $0x638] sm:$0xff]
    %v2381 = vld [vmem:[#allocation10 + $0x640] sm:$0xff]
    %v2382 = vld [vmem:[#allocation10 + $0x648] sm:$0xff]
    %v2383 = vld [vmem:[#allocation10 + $0x650] sm:$0xff]
    %v2384 = vld [vmem:[#allocation10 + $0x658] sm:$0xff]
    %v2385 = vld [vmem:[#allocation10 + $0x660] sm:$0xff]
    %v2386 = vld [vmem:[#allocation10 + $0x668] sm:$0xff]
    %v2387 = vld [vmem:[#allocation10 + $0x670] sm:$0xff]
    %v2388 = vld [vmem:[#allocation10 + $0x678] sm:$0xff]
    %v2389 = vld [vmem:[#allocation10 + $0x680] sm:$0xff]
    %v2390 = vld [vmem:[#allocation10 + $0x688] sm:$0xff]
    %v2391 = vld [vmem:[#allocation10 + $0x690] sm:$0xff]
    %v2392 = vld [vmem:[#allocation10 + $0x698] sm:$0xff]
    %v2393 = vld [vmem:[#allocation10 + $0x6a0] sm:$0xff]
    %v2394 = vld [vmem:[#allocation10 + $0x6a8] sm:$0xff]
    %v2395 = vld [vmem:[#allocation10 + $0x6b0] sm:$0xff]
    %v2396 = vld [vmem:[#allocation10 + $0x6b8] sm:$0xff]
    %v2397 = vld [vmem:[#allocation10 + $0x6c0] sm:$0xff]
    %v2398 = vld [vmem:[#allocation10 + $0x6c8] sm:$0xff]
    %v2399 = vld [vmem:[#allocation10 + $0x6d0] sm:$0xff]
    %v2400 = vld [vmem:[#allocation10 + $0x6d8] sm:$0xff]
    %v2401 = vld [vmem:[#allocation10 + $0x6e0] sm:$0xff]
    %v2402 = vld [vmem:[#allocation10 + $0x6e8] sm:$0xff]
    %v2403 = vld [vmem:[#allocation10 + $0x6f0] sm:$0xff]
    %v2404 = vld [vmem:[#allocation10 + $0x6f8] sm:$0xff]
    %v2405 = vld [vmem:[#allocation10 + $0x700] sm:$0xff]
    %v2406 = vld [vmem:[#allocation10 + $0x708] sm:$0xff]
    %v2407 = vld [vmem:[#allocation10 + $0x710] sm:$0xff]
    %v2408 = vld [vmem:[#allocation10 + $0x718] sm:$0xff]
    %v2409 = vld [vmem:[#allocation10 + $0x720] sm:$0xff]
    %v2410 = vld [vmem:[#allocation10 + $0x728] sm:$0xff]
    %v2411 = vld [vmem:[#allocation10 + $0x730] sm:$0xff]
    %v2412 = vld [vmem:[#allocation10 + $0x738] sm:$0xff]
    %v2413 = vld [vmem:[#allocation10 + $0x740] sm:$0xff]
    %v2414 = vld [vmem:[#allocation10 + $0x748] sm:$0xff]
    %v2415 = vld [vmem:[#allocation10 + $0x750] sm:$0xff]
    %v2416 = vld [vmem:[#allocation10 + $0x758] sm:$0xff]
    %v2417 = vld [vmem:[#allocation10 + $0x760] sm:$0xff]
    %v2418 = vld [vmem:[#allocation10 + $0x768] sm:$0xff]
    %v2419 = vld [vmem:[#allocation10 + $0x770] sm:$0xff]
    %v2420 = vld [vmem:[#allocation10 + $0x778] sm:$0xff]
    %v2421 = vld [vmem:[#allocation10 + $0x780] sm:$0xff]
    %v2422 = vld [vmem:[#allocation10 + $0x788] sm:$0xff]
    %v2423 = vld [vmem:[#allocation10 + $0x790] sm:$0xff]
    %v2424 = vld [vmem:[#allocation10 + $0x798] sm:$0xff]
    %v2425 = vld [vmem:[#allocation10 + $0x7a0] sm:$0xff]
    %v2426 = vld [vmem:[#allocation10 + $0x7a8] sm:$0xff]
    %v2427 = vld [vmem:[#allocation10 + $0x7b0] sm:$0xff]
    %v2428 = vld [vmem:[#allocation10 + $0x7b8] sm:$0xff]
    %v2429 = vld [vmem:[#allocation10 + $0x7c0] sm:$0xff]
    %v2430 = vld [vmem:[#allocation10 + $0x7c8] sm:$0xff]
    %v2431 = vld [vmem:[#allocation10 + $0x7d0] sm:$0xff]
    %v2432 = vld [vmem:[#allocation10 + $0x7d8] sm:$0xff]
    %v2433 = vld [vmem:[#allocation10 + $0x7e0] sm:$0xff]
    %v2434 = vld [vmem:[#allocation10 + $0x7e8] sm:$0xff]
    %v2435 = vld [vmem:[#allocation10 + $0x7f0] sm:$0xff]
    %v2436 = vld [vmem:[#allocation10 + $0x7f8] sm:$0xff]
    %v2437 = vld [vmem:[#allocation10 + $0x800] sm:$0xff]
    %v2438 = vld [vmem:[#allocation10 + $0x808] sm:$0xff]
    %v2439 = vld [vmem:[#allocation10 + $0x810] sm:$0xff]
    %v2440 = vld [vmem:[#allocation10 + $0x818] sm:$0xff]
    %v2441 = vld [vmem:[#allocation10 + $0x820] sm:$0xff]
    %v2442 = vld [vmem:[#allocation10 + $0x828] sm:$0xff]
    %v2443 = vld [vmem:[#allocation10 + $0x830] sm:$0xff]
    %v2444 = vld [vmem:[#allocation10 + $0x838] sm:$0xff]
    %v2445 = vld [vmem:[#allocation10 + $0x840] sm:$0xff]
    %v2446 = vld [vmem:[#allocation10 + $0x848] sm:$0xff]
    %v2447 = vld [vmem:[#allocation10 + $0x850] sm:$0xff]
    %v2448 = vld [vmem:[#allocation10 + $0x858] sm:$0xff]
    %v2449 = vld [vmem:[#allocation10 + $0x860] sm:$0xff]
    %v2450 = vld [vmem:[#allocation10 + $0x868] sm:$0xff]
    %v2451 = vld [vmem:[#allocation10 + $0x870] sm:$0xff]
    %v2452 = vld [vmem:[#allocation10 + $0x878] sm:$0xff]
    %v2453 = vld [vmem:[#allocation10 + $0x880] sm:$0xff]
    %v2454 = vld [vmem:[#allocation10 + $0x888] sm:$0xff]
    %v2455 = vld [vmem:[#allocation10 + $0x890] sm:$0xff]
    %v2456 = vld [vmem:[#allocation10 + $0x898] sm:$0xff]
    %v2457 = vld [vmem:[#allocation10 + $0x8a0] sm:$0xff]
    %v2458 = vld [vmem:[#allocation10 + $0x8a8] sm:$0xff]
    %v2459 = vld [vmem:[#allocation10 + $0x8b0] sm:$0xff]
    %v2460 = vld [vmem:[#allocation10 + $0x8b8] sm:$0xff]
    %v2461 = vld [vmem:[#allocation10 + $0x8c0] sm:$0xff]
    %v2462 = vld [vmem:[#allocation10 + $0x8c8] sm:$0xff]
    %v2463 = vld [vmem:[#allocation10 + $0x8d0] sm:$0xff]
    %v2464 = vld [vmem:[#allocation10 + $0x8d8] sm:$0xff]
    %v2465 = vld [vmem:[#allocation10 + $0x8e0] sm:$0xff]
    %v2466 = vld [vmem:[#allocation10 + $0x8e8] sm:$0xff]
    %v2467 = vld [vmem:[#allocation10 + $0x8f0] sm:$0xff]
    %v2468 = vld [vmem:[#allocation10 + $0x8f8] sm:$0xff]
    %v2469 = vld [vmem:[#allocation10 + $0x900] sm:$0xff]
    %v2470 = vld [vmem:[#allocation10 + $0x908] sm:$0xff]
    %v2471 = vld [vmem:[#allocation10 + $0x910] sm:$0xff]
    %v2472 = vld [vmem:[#allocation10 + $0x918] sm:$0xff]
    %v2473 = vld [vmem:[#allocation10 + $0x920] sm:$0xff]
    %v2474 = vld [vmem:[#allocation10 + $0x928] sm:$0xff]
    %v2475 = vld [vmem:[#allocation10 + $0x930] sm:$0xff]
    %v2476 = vld [vmem:[#allocation10 + $0x938] sm:$0xff]
    %v2477 = vld [vmem:[#allocation10 + $0x940] sm:$0xff]
    %v2478 = vld [vmem:[#allocation10 + $0x948] sm:$0xff]
    %v2479 = vld [vmem:[#allocation10 + $0x950] sm:$0xff]
    %v2480 = vld [vmem:[#allocation10 + $0x958] sm:$0xff]
    %v2481 = vld [vmem:[#allocation10 + $0x960] sm:$0xff]
    %v2482 = vld [vmem:[#allocation10 + $0x968] sm:$0xff]
    %v2483 = vld [vmem:[#allocation10 + $0x970] sm:$0xff]
    %v2484 = vld [vmem:[#allocation10 + $0x978] sm:$0xff]
    %v2485 = vld [vmem:[#allocation10 + $0x980] sm:$0xff]
    %v2486 = vld [vmem:[#allocation10 + $0x988] sm:$0xff]
    %v2487 = vld [vmem:[#allocation10 + $0x990] sm:$0xff]
    %v2488 = vld [vmem:[#allocation10 + $0x998] sm:$0xff]
    %v2489 = vld [vmem:[#allocation10 + $0x9a0] sm:$0xff]
    %v2490 = vld [vmem:[#allocation10 + $0x9a8] sm:$0xff]
    %v2491 = vld [vmem:[#allocation10 + $0x9b0] sm:$0xff]
    %v2492 = vld [vmem:[#allocation10 + $0x9b8] sm:$0xff]
    %v2493 = vld [vmem:[#allocation10 + $0x9c0] sm:$0xff]
    %v2494 = vld [vmem:[#allocation10 + $0x9c8] sm:$0xff]
    %v2495 = vld [vmem:[#allocation10 + $0x9d0] sm:$0xff]
    %v2496 = vld [vmem:[#allocation10 + $0x9d8] sm:$0xff]
    %v2497 = vld [vmem:[#allocation10 + $0x9e0] sm:$0xff]
    %v2498 = vld [vmem:[#allocation10 + $0x9e8] sm:$0xff]
    %v2499 = vld [vmem:[#allocation10 + $0x9f0] sm:$0xff]
    %v2500 = vld [vmem:[#allocation10 + $0x9f8] sm:$0xff]
    %v2501 = vld [vmem:[#allocation10 + $0xa00] sm:$0xff]
    %v2502 = vld [vmem:[#allocation10 + $0xa08] sm:$0xff]
    %v2503 = vld [vmem:[#allocation10 + $0xa10] sm:$0xff]
    %v2504 = vld [vmem:[#allocation10 + $0xa18] sm:$0xff]
    %v2505 = vld [vmem:[#allocation10 + $0xa20] sm:$0xff]
    %v2506 = vld [vmem:[#allocation10 + $0xa28] sm:$0xff]
    %v2507 = vld [vmem:[#allocation10 + $0xa30] sm:$0xff]
    %v2508 = vld [vmem:[#allocation10 + $0xa38] sm:$0xff]
    %v2509 = vld [vmem:[#allocation10 + $0xa40] sm:$0xff]
    %v2510 = vld [vmem:[#allocation10 + $0xa48] sm:$0xff]
    %v2511 = vld [vmem:[#allocation10 + $0xa50] sm:$0xff]
    %v2512 = vld [vmem:[#allocation10 + $0xa58] sm:$0xff]
    %v2513 = vld [vmem:[#allocation10 + $0xa60] sm:$0xff]
    %v2514 = vld [vmem:[#allocation10 + $0xa68] sm:$0xff]
    %v2515 = vld [vmem:[#allocation10 + $0xa70] sm:$0xff]
    %v2516 = vld [vmem:[#allocation10 + $0xa78] sm:$0xff]
    %v2517 = vld [vmem:[#allocation10 + $0xa80] sm:$0xff]
    %v2518 = vld [vmem:[#allocation10 + $0xa88] sm:$0xff]
    %v2519 = vld [vmem:[#allocation10 + $0xa90] sm:$0xff]
    %v2520 = vld [vmem:[#allocation10 + $0xa98] sm:$0xff]
    %v2521 = vld [vmem:[#allocation10 + $0xaa0] sm:$0xff]
    %v2522 = vld [vmem:[#allocation10 + $0xaa8] sm:$0xff]
    %v2523 = vld [vmem:[#allocation10 + $0xab0] sm:$0xff]
    %v2524 = vld [vmem:[#allocation10 + $0xab8] sm:$0xff]
    %v2525 = vld [vmem:[#allocation10 + $0xac0] sm:$0xff]
    %v2526 = vld [vmem:[#allocation10 + $0xac8] sm:$0xff]
    %v2527 = vld [vmem:[#allocation10 + $0xad0] sm:$0xff]
    %v2528 = vld [vmem:[#allocation10 + $0xad8] sm:$0xff]
    %v2529 = vld [vmem:[#allocation10 + $0xae0] sm:$0xff]
    %v2530 = vld [vmem:[#allocation10 + $0xae8] sm:$0xff]
    %v2531 = vld [vmem:[#allocation10 + $0xaf0] sm:$0xff]
    %v2532 = vld [vmem:[#allocation10 + $0xaf8] sm:$0xff]
    %v2533 = vld [vmem:[#allocation10 + $0xb00] sm:$0xff]
    %v2534 = vld [vmem:[#allocation10 + $0xb08] sm:$0xff]
    %v2535 = vld [vmem:[#allocation10 + $0xb10] sm:$0xff]
    %v2536 = vld [vmem:[#allocation10 + $0xb18] sm:$0xff]
    %v2537 = vld [vmem:[#allocation10 + $0xb20] sm:$0xff]
    %v2538 = vld [vmem:[#allocation10 + $0xb28] sm:$0xff]
    %v2539 = vld [vmem:[#allocation10 + $0xb30] sm:$0xff]
    %v2540 = vld [vmem:[#allocation10 + $0xb38] sm:$0xff]
    %v2541 = vld [vmem:[#allocation10 + $0xb40] sm:$0xff]
    %v2542 = vld [vmem:[#allocation10 + $0xb48] sm:$0xff]
    %v2543 = vld [vmem:[#allocation10 + $0xb50] sm:$0xff]
    %v2544 = vld [vmem:[#allocation10 + $0xb58] sm:$0xff]
    %v2545 = vld [vmem:[#allocation10 + $0xb60] sm:$0xff]
    %v2546 = vld [vmem:[#allocation10 + $0xb68] sm:$0xff]
    %v2547 = vld [vmem:[#allocation10 + $0xb70] sm:$0xff]
    %v2548 = vld [vmem:[#allocation10 + $0xb78] sm:$0xff]
    %v2549 = vld [vmem:[#allocation10 + $0xb80] sm:$0xff]
    %v2550 = vld [vmem:[#allocation10 + $0xb88] sm:$0xff]
    %v2551 = vld [vmem:[#allocation10 + $0xb90] sm:$0xff]
    %v2552 = vld [vmem:[#allocation10 + $0xb98] sm:$0xff]
    %v2553 = vld [vmem:[#allocation10 + $0xba0] sm:$0xff]
    %v2554 = vld [vmem:[#allocation10 + $0xba8] sm:$0xff]
    %v2555 = vld [vmem:[#allocation10 + $0xbb0] sm:$0xff]
    %v2556 = vld [vmem:[#allocation10 + $0xbb8] sm:$0xff]
    %v2557 = vld [vmem:[#allocation10 + $0xbc0] sm:$0xff]
    %v2558 = vld [vmem:[#allocation10 + $0xbc8] sm:$0xff]
    %v2559 = vld [vmem:[#allocation10 + $0xbd0] sm:$0xff]
    %v2560 = vld [vmem:[#allocation10 + $0xbd8] sm:$0xff]
    %v2561 = vld [vmem:[#allocation10 + $0xbe0] sm:$0xff]
    %v2562 = vld [vmem:[#allocation10 + $0xbe8] sm:$0xff]
    %v2563 = vld [vmem:[#allocation10 + $0xbf0] sm:$0xff]
    %v2564 = vld [vmem:[#allocation10 + $0xbf8] sm:$0xff]
    %v2565 = vld [vmem:[#allocation10 + $0xc00] sm:$0xff]
    %v2566 = vld [vmem:[#allocation10 + $0xc08] sm:$0xff]
    %v2567 = vld [vmem:[#allocation10 + $0xc10] sm:$0xff]
    %v2568 = vld [vmem:[#allocation10 + $0xc18] sm:$0xff]
    %v2569 = vld [vmem:[#allocation10 + $0xc20] sm:$0xff]
    %v2570 = vld [vmem:[#allocation10 + $0xc28] sm:$0xff]
    %v2571 = vld [vmem:[#allocation10 + $0xc30] sm:$0xff]
    %v2572 = vld [vmem:[#allocation10 + $0xc38] sm:$0xff]
    %v2573 = vld [vmem:[#allocation10 + $0xc40] sm:$0xff]
    %v2574 = vld [vmem:[#allocation10 + $0xc48] sm:$0xff]
    %v2575 = vld [vmem:[#allocation10 + $0xc50] sm:$0xff]
    %v2576 = vld [vmem:[#allocation10 + $0xc58] sm:$0xff]
    %v2577 = vld [vmem:[#allocation10 + $0xc60] sm:$0xff]
    %v2578 = vld [vmem:[#allocation10 + $0xc68] sm:$0xff]
    %v2579 = vld [vmem:[#allocation10 + $0xc70] sm:$0xff]
    %v2580 = vld [vmem:[#allocation10 + $0xc78] sm:$0xff]
    %v2581 = vld [vmem:[#allocation10 + $0xc80] sm:$0xff]
    %v2582 = vld [vmem:[#allocation10 + $0xc88] sm:$0xff]
    %v2583 = vld [vmem:[#allocation10 + $0xc90] sm:$0xff]
    %v2584 = vld [vmem:[#allocation10 + $0xc98] sm:$0xff]
    %v2585 = vld [vmem:[#allocation10 + $0xca0] sm:$0xff]
    %v2586 = vld [vmem:[#allocation10 + $0xca8] sm:$0xff]
    %v2587 = vld [vmem:[#allocation10 + $0xcb0] sm:$0xff]
    %v2588 = vld [vmem:[#allocation10 + $0xcb8] sm:$0xff]
    %v2589 = vld [vmem:[#allocation10 + $0xcc0] sm:$0xff]
    %v2590 = vld [vmem:[#allocation10 + $0xcc8] sm:$0xff]
    %v2591 = vld [vmem:[#allocation10 + $0xcd0] sm:$0xff]
    %v2592 = vld [vmem:[#allocation10 + $0xcd8] sm:$0xff]
    %v2593 = vld [vmem:[#allocation10 + $0xce0] sm:$0xff]
    %v2594 = vld [vmem:[#allocation10 + $0xce8] sm:$0xff]
    %v2595 = vld [vmem:[#allocation10 + $0xcf0] sm:$0xff]
    %v2596 = vld [vmem:[#allocation10 + $0xcf8] sm:$0xff]
    %v2597 = vld [vmem:[#allocation10 + $0xd00] sm:$0xff]
    %v2598 = vld [vmem:[#allocation10 + $0xd08] sm:$0xff]
    %v2599 = vld [vmem:[#allocation10 + $0xd10] sm:$0xff]
    %v2600 = vld [vmem:[#allocation10 + $0xd18] sm:$0xff]
    %v2601 = vld [vmem:[#allocation10 + $0xd20] sm:$0xff]
    %v2602 = vld [vmem:[#allocation10 + $0xd28] sm:$0xff]
    %v2603 = vld [vmem:[#allocation10 + $0xd30] sm:$0xff]
    %v2604 = vld [vmem:[#allocation10 + $0xd38] sm:$0xff]
    %v2605 = vld [vmem:[#allocation10 + $0xd40] sm:$0xff]
    %v2606 = vld [vmem:[#allocation10 + $0xd48] sm:$0xff]
    %v2607 = vld [vmem:[#allocation10 + $0xd50] sm:$0xff]
    %v2608 = vld [vmem:[#allocation10 + $0xd58] sm:$0xff]
    %v2609 = vld [vmem:[#allocation10 + $0xd60] sm:$0xff]
    %v2610 = vld [vmem:[#allocation10 + $0xd68] sm:$0xff]
    %v2611 = vld [vmem:[#allocation10 + $0xd70] sm:$0xff]
    %v2612 = vld [vmem:[#allocation10 + $0xd78] sm:$0xff]
    %v2613 = vld [vmem:[#allocation10 + $0xd80] sm:$0xff]
    %v2614 = vld [vmem:[#allocation10 + $0xd88] sm:$0xff]
    %v2615 = vld [vmem:[#allocation10 + $0xd90] sm:$0xff]
    %v2616 = vld [vmem:[#allocation10 + $0xd98] sm:$0xff]
    %v2617 = vld [vmem:[#allocation10 + $0xda0] sm:$0xff]
    %v2618 = vld [vmem:[#allocation10 + $0xda8] sm:$0xff]
    %v2619 = vld [vmem:[#allocation10 + $0xdb0] sm:$0xff]
    %v2620 = vld [vmem:[#allocation10 + $0xdb8] sm:$0xff]
    %v2621 = vld [vmem:[#allocation10 + $0xdc0] sm:$0xff]
    %v2622 = vld [vmem:[#allocation10 + $0xdc8] sm:$0xff]
    %v2623 = vld [vmem:[#allocation10 + $0xdd0] sm:$0xff]
    %v2624 = vld [vmem:[#allocation10 + $0xdd8] sm:$0xff]
    %v2625 = vld [vmem:[#allocation10 + $0xde0] sm:$0xff]
    %v2626 = vld [vmem:[#allocation10 + $0xde8] sm:$0xff]
    %v2627 = vld [vmem:[#allocation10 + $0xdf0] sm:$0xff]
    %v2628 = vld [vmem:[#allocation10 + $0xdf8] sm:$0xff]
    %v2629 = vld [vmem:[#allocation10 + $0xe00] sm:$0xff]
    %v2630 = vld [vmem:[#allocation10 + $0xe08] sm:$0xff]
    %v2631 = vld [vmem:[#allocation10 + $0xe10] sm:$0xff]
    %v2632 = vld [vmem:[#allocation10 + $0xe18] sm:$0xff]
    %v2633 = vld [vmem:[#allocation10 + $0xe20] sm:$0xff]
    %v2634 = vld [vmem:[#allocation10 + $0xe28] sm:$0xff]
    %v2635 = vld [vmem:[#allocation10 + $0xe30] sm:$0xff]
    %v2636 = vld [vmem:[#allocation10 + $0xe38] sm:$0xff]
    %v2637 = vld [vmem:[#allocation10 + $0xe40] sm:$0xff]
    %v2638 = vld [vmem:[#allocation10 + $0xe48] sm:$0xff]
    %v2639 = vld [vmem:[#allocation10 + $0xe50] sm:$0xff]
    %v2640 = vld [vmem:[#allocation10 + $0xe58] sm:$0xff]
    %v2641 = vld [vmem:[#allocation10 + $0xe60] sm:$0xff]
    %v2642 = vld [vmem:[#allocation10 + $0xe68] sm:$0xff]
    %v2643 = vld [vmem:[#allocation10 + $0xe70] sm:$0xff]
    %v2644 = vld [vmem:[#allocation10 + $0xe78] sm:$0xff]
    %v2645 = vld [vmem:[#allocation10 + $0xe80] sm:$0xff]
    %v2646 = vld [vmem:[#allocation10 + $0xe88] sm:$0xff]
    %v2647 = vld [vmem:[#allocation10 + $0xe90] sm:$0xff]
    %v2648 = vld [vmem:[#allocation10 + $0xe98] sm:$0xff]
    %v2649 = vld [vmem:[#allocation10 + $0xea0] sm:$0xff]
    %v2650 = vld [vmem:[#allocation10 + $0xea8] sm:$0xff]
    %v2651 = vld [vmem:[#allocation10 + $0xeb0] sm:$0xff]
    %v2652 = vld [vmem:[#allocation10 + $0xeb8] sm:$0xff]
    %v2653 = vld [vmem:[#allocation10 + $0xec0] sm:$0xff]
    %v2654 = vld [vmem:[#allocation10 + $0xec8] sm:$0xff]
    %v2655 = vld [vmem:[#allocation10 + $0xed0] sm:$0xff]
    %v2656 = vld [vmem:[#allocation10 + $0xed8] sm:$0xff]
    %v2657 = vld [vmem:[#allocation10 + $0xee0] sm:$0xff]
    %v2658 = vld [vmem:[#allocation10 + $0xee8] sm:$0xff]
    %v2659 = vld [vmem:[#allocation10 + $0xef0] sm:$0xff]
    %v2660 = vld [vmem:[#allocation10 + $0xef8] sm:$0xff]
    %v2661 = vld [vmem:[#allocation10 + $0xf00] sm:$0xff]
    %v2662 = vld [vmem:[#allocation10 + $0xf08] sm:$0xff]
    %v2663 = vld [vmem:[#allocation10 + $0xf10] sm:$0xff]
    %v2664 = vld [vmem:[#allocation10 + $0xf18] sm:$0xff]
    %v2665 = vld [vmem:[#allocation10 + $0xf20] sm:$0xff]
    %v2666 = vld [vmem:[#allocation10 + $0xf28] sm:$0xff]
    %v2667 = vld [vmem:[#allocation10 + $0xf30] sm:$0xff]
    %v2668 = vld [vmem:[#allocation10 + $0xf38] sm:$0xff]
    %v2669 = vld [vmem:[#allocation10 + $0xf40] sm:$0xff]
    %v2670 = vld [vmem:[#allocation10 + $0xf48] sm:$0xff]
    %v2671 = vld [vmem:[#allocation10 + $0xf50] sm:$0xff]
    %v2672 = vld [vmem:[#allocation10 + $0xf58] sm:$0xff]
    %v2673 = vld [vmem:[#allocation10 + $0xf60] sm:$0xff]
    %v2674 = vld [vmem:[#allocation10 + $0xf68] sm:$0xff]
    %v2675 = vld [vmem:[#allocation10 + $0xf70] sm:$0xff]
    %v2676 = vld [vmem:[#allocation10 + $0xf78] sm:$0xff]
    %v2677 = vld [vmem:[#allocation10 + $0xf80] sm:$0xff]
    %v2678 = vld [vmem:[#allocation10 + $0xf88] sm:$0xff]
    %v2679 = vld [vmem:[#allocation10 + $0xf90] sm:$0xff]
    %v2680 = vld [vmem:[#allocation10 + $0xf98] sm:$0xff]
    %v2681 = vld [vmem:[#allocation10 + $0xfa0] sm:$0xff]
    %v2682 = vld [vmem:[#allocation10 + $0xfa8] sm:$0xff]
    %v2683 = vld [vmem:[#allocation10 + $0xfb0] sm:$0xff]
    %v2684 = vld [vmem:[#allocation10 + $0xfb8] sm:$0xff]
    %v2685 = vld [vmem:[#allocation10 + $0xfc0] sm:$0xff]
    %v2686 = vld [vmem:[#allocation10 + $0xfc8] sm:$0xff]
    %v2687 = vld [vmem:[#allocation10 + $0xfd0] sm:$0xff]
    %v2688 = vld [vmem:[#allocation10 + $0xfd8] sm:$0xff]
    %v2689 = vld [vmem:[#allocation10 + $0xfe0] sm:$0xff]
    %v2690 = vld [vmem:[#allocation10 + $0xfe8] sm:$0xff]
    %v2691 = vld [vmem:[#allocation10 + $0xff0] sm:$0xff]
    %v2692 = vld [vmem:[#allocation10 + $0xff8] sm:$0xff]
    %2693 = vmatpush.msra.mxu0 %v2301
    %2694 = vmatpush.msra.mxu0 %v2293
    %2695 = vmatpush.msra.mxu0 %v2285
    %2696 = vmatpush.msra.mxu0 %v2277
    %2697 = vmatpush.msra.mxu0 %v2269
    %2698 = vmatpush.msra.mxu0 %v2261
    %2699 = vmatpush.msra.mxu0 %v2253
    %2700 = vmatpush.msra.mxu0 %v2245
    %2701 = vmatpush.msra.mxu0 %v2237
    %2702 = vmatpush.msra.mxu0 %v2229
    %2703 = vmatpush.msra.mxu0 %v2221
    %2704 = vmatpush.msra.mxu0 %v2213
    %2705 = vmatpush.msra.mxu0 %v2205
    %2706 = vmatpush.msra.mxu0 %v2197
    %2707 = vmatpush.msra.mxu0 %v2189
    %2708 = vmatpush.msra.mxu0 %v2181
    %2709 = vmatmul.f32.gmra.mxu0 %v2173
    %v2710 = vpop.f32.mrf.mxu0
    %v2711 = vadd.f32 0.0, %v2710
    %2712 = vmatmul.f32.gmra.mxu0 %v2177
    %v2713 = vpop.f32.mrf.mxu0
    %v2714 = vadd.f32 0.0, %v2713
    %2715 = vdwg.mxu0
    %2716 = vmatpush.msra.mxu0 %v2429
    %2717 = vmatpush.msra.mxu0 %v2421
    %2718 = vmatpush.msra.mxu0 %v2413
    %2719 = vmatpush.msra.mxu0 %v2405
    %2720 = vmatpush.msra.mxu0 %v2397
    %2721 = vmatpush.msra.mxu0 %v2389
    %2722 = vmatpush.msra.mxu0 %v2381
    %2723 = vmatpush.msra.mxu0 %v2373
    %2724 = vmatpush.msra.mxu0 %v2365
    %2725 = vmatpush.msra.mxu0 %v2357
    %2726 = vmatpush.msra.mxu0 %v2349
    %2727 = vmatpush.msra.mxu0 %v2341
    %2728 = vmatpush.msra.mxu0 %v2333
    %2729 = vmatpush.msra.mxu0 %v2325
    %2730 = vmatpush.msra.mxu0 %v2317
    %2731 = vmatpush.msra.mxu0 %v2309
    %2732 = vmatmul.f32.gmra.mxu0 %v2174
    %v2733 = vpop.f32.mrf.mxu0
    %v2734 = vadd.f32 %v2711, %v2733
    %2735 = vmatmul.f32.gmra.mxu0 %v2178
    %v2736 = vpop.f32.mrf.mxu0
    %v2737 = vadd.f32 %v2714, %v2736
    %2738 = vdwg.mxu0
    %2739 = vmatpush.msra.mxu0 %v2557
    %2740 = vmatpush.msra.mxu0 %v2549
    %2741 = vmatpush.msra.mxu0 %v2541
    %2742 = vmatpush.msra.mxu0 %v2533
    %2743 = vmatpush.msra.mxu0 %v2525
    %2744 = vmatpush.msra.mxu0 %v2517
    %2745 = vmatpush.msra.mxu0 %v2509
    %2746 = vmatpush.msra.mxu0 %v2501
    %2747 = vmatpush.msra.mxu0 %v2493
    %2748 = vmatpush.msra.mxu0 %v2485
    %2749 = vmatpush.msra.mxu0 %v2477
    %2750 = vmatpush.msra.mxu0 %v2469
    %2751 = vmatpush.msra.mxu0 %v2461
    %2752 = vmatpush.msra.mxu0 %v2453
    %2753 = vmatpush.msra.mxu0 %v2445
    %2754 = vmatpush.msra.mxu0 %v2437
    %2755 = vmatmul.f32.gmra.mxu0 %v2175
    %v2756 = vpop.f32.mrf.mxu0
    %v2757 = vadd.f32 %v2734, %v2756
    %2758 = vmatmul.f32.gmra.mxu0 %v2179
    %v2759 = vpop.f32.mrf.mxu0
    %v2760 = vadd.f32 %v2737, %v2759
    %2761 = vdwg.mxu0
    %2762 = vmatpush.msra.mxu0 %v2685
    %2763 = vmatpush.msra.mxu0 %v2677
    %2764 = vmatpush.msra.mxu0 %v2669
    %2765 = vmatpush.msra.mxu0 %v2661
    %2766 = vmatpush.msra.mxu0 %v2653
    %2767 = vmatpush.msra.mxu0 %v2645
    %2768 = vmatpush.msra.mxu0 %v2637
    %2769 = vmatpush.msra.mxu0 %v2629
    %2770 = vmatpush.msra.mxu0 %v2621
    %2771 = vmatpush.msra.mxu0 %v2613
    %2772 = vmatpush.msra.mxu0 %v2605
    %2773 = vmatpush.msra.mxu0 %v2597
    %2774 = vmatpush.msra.mxu0 %v2589
    %2775 = vmatpush.msra.mxu0 %v2581
    %2776 = vmatpush.msra.mxu0 %v2573
    %2777 = vmatpush.msra.mxu0 %v2565
    %2778 = vmatmul.f32.gmra.mxu0 %v2176
    %v2779 = vpop.f32.mrf.mxu0
    %v2780 = vadd.f32 %v2757, %v2779
    %2781 = vmatmul.f32.gmra.mxu0 %v2180
    %v2782 = vpop.f32.mrf.mxu0
    %v2783 = vadd.f32 %v2760, %v2782
    %2784 = vdwg.mxu0
    %2785 = vmatpush.msra.mxu0 %v2302
    %2786 = vmatpush.msra.mxu0 %v2294
    %2787 = vmatpush.msra.mxu0 %v2286
    %2788 = vmatpush.msra.mxu0 %v2278
    %2789 = vmatpush.msra.mxu0 %v2270
    %2790 = vmatpush.msra.mxu0 %v2262
    %2791 = vmatpush.msra.mxu0 %v2254
    %2792 = vmatpush.msra.mxu0 %v2246
    %2793 = vmatpush.msra.mxu0 %v2238
    %2794 = vmatpush.msra.mxu0 %v2230
    %2795 = vmatpush.msra.mxu0 %v2222
    %2796 = vmatpush.msra.mxu0 %v2214
    %2797 = vmatpush.msra.mxu0 %v2206
    %2798 = vmatpush.msra.mxu0 %v2198
    %2799 = vmatpush.msra.mxu0 %v2190
    %2800 = vmatpush.msra.mxu0 %v2182
    %2801 = vmatmul.f32.gmra.mxu0 %v2173
    %v2802 = vpop.f32.mrf.mxu0
    %v2803 = vadd.f32 0.0, %v2802
    %2804 = vmatmul.f32.gmra.mxu0 %v2177
    %v2805 = vpop.f32.mrf.mxu0
    %v2806 = vadd.f32 0.0, %v2805
    %2807 = vdwg.mxu0
    %2808 = vmatpush.msra.mxu0 %v2430
    %2809 = vmatpush.msra.mxu0 %v2422
    %2810 = vmatpush.msra.mxu0 %v2414
    %2811 = vmatpush.msra.mxu0 %v2406
    %2812 = vmatpush.msra.mxu0 %v2398
    %2813 = vmatpush.msra.mxu0 %v2390
    %2814 = vmatpush.msra.mxu0 %v2382
    %2815 = vmatpush.msra.mxu0 %v2374
    %2816 = vmatpush.msra.mxu0 %v2366
    %2817 = vmatpush.msra.mxu0 %v2358
    %2818 = vmatpush.msra.mxu0 %v2350
    %2819 = vmatpush.msra.mxu0 %v2342
    %2820 = vmatpush.msra.mxu0 %v2334
    %2821 = vmatpush.msra.mxu0 %v2326
    %2822 = vmatpush.msra.mxu0 %v2318
    %2823 = vmatpush.msra.mxu0 %v2310
    %2824 = vmatmul.f32.gmra.mxu0 %v2174
    %v2825 = vpop.f32.mrf.mxu0
    %v2826 = vadd.f32 %v2803, %v2825
    %2827 = vmatmul.f32.gmra.mxu0 %v2178
    %v2828 = vpop.f32.mrf.mxu0
    %v2829 = vadd.f32 %v2806, %v2828
    %2830 = vdwg.mxu0
    %2831 = vmatpush.msra.mxu0 %v2558
    %2832 = vmatpush.msra.mxu0 %v2550
    %2833 = vmatpush.msra.mxu0 %v2542
    %2834 = vmatpush.msra.mxu0 %v2534
    %2835 = vmatpush.msra.mxu0 %v2526
    %2836 = vmatpush.msra.mxu0 %v2518
    %2837 = vmatpush.msra.mxu0 %v2510
    %2838 = vmatpush.msra.mxu0 %v2502
    %2839 = vmatpush.msra.mxu0 %v2494
    %2840 = vmatpush.msra.mxu0 %v2486
    %2841 = vmatpush.msra.mxu0 %v2478
    %2842 = vmatpush.msra.mxu0 %v2470
    %2843 = vmatpush.msra.mxu0 %v2462
    %2844 = vmatpush.msra.mxu0 %v2454
    %2845 = vmatpush.msra.mxu0 %v2446
    %2846 = vmatpush.msra.mxu0 %v2438
    %2847 = vmatmul.f32.gmra.mxu0 %v2175
    %v2848 = vpop.f32.mrf.mxu0
    %v2849 = vadd.f32 %v2826, %v2848
    %2850 = vmatmul.f32.gmra.mxu0 %v2179
    %v2851 = vpop.f32.mrf.mxu0
    %v2852 = vadd.f32 %v2829, %v2851
    %2853 = vdwg.mxu0
    %2854 = vmatpush.msra.mxu0 %v2686
    %2855 = vmatpush.msra.mxu0 %v2678
    %2856 = vmatpush.msra.mxu0 %v2670
    %2857 = vmatpush.msra.mxu0 %v2662
    %2858 = vmatpush.msra.mxu0 %v2654
    %2859 = vmatpush.msra.mxu0 %v2646
    %2860 = vmatpush.msra.mxu0 %v2638
    %2861 = vmatpush.msra.mxu0 %v2630
    %2862 = vmatpush.msra.mxu0 %v2622
    %2863 = vmatpush.msra.mxu0 %v2614
    %2864 = vmatpush.msra.mxu0 %v2606
    %2865 = vmatpush.msra.mxu0 %v2598
    %2866 = vmatpush.msra.mxu0 %v2590
    %2867 = vmatpush.msra.mxu0 %v2582
    %2868 = vmatpush.msra.mxu0 %v2574
    %2869 = vmatpush.msra.mxu0 %v2566
    %2870 = vmatmul.f32.gmra.mxu0 %v2176
    %v2871 = vpop.f32.mrf.mxu0
    %v2872 = vadd.f32 %v2849, %v2871
    %2873 = vmatmul.f32.gmra.mxu0 %v2180
    %v2874 = vpop.f32.mrf.mxu0
    %v2875 = vadd.f32 %v2852, %v2874
    %2876 = vdwg.mxu0
    %2877 = vmatpush.msra.mxu0 %v2303
    %2878 = vmatpush.msra.mxu0 %v2295
    %2879 = vmatpush.msra.mxu0 %v2287
    %2880 = vmatpush.msra.mxu0 %v2279
    %2881 = vmatpush.msra.mxu0 %v2271
    %2882 = vmatpush.msra.mxu0 %v2263
    %2883 = vmatpush.msra.mxu0 %v2255
    %2884 = vmatpush.msra.mxu0 %v2247
    %2885 = vmatpush.msra.mxu0 %v2239
    %2886 = vmatpush.msra.mxu0 %v2231
    %2887 = vmatpush.msra.mxu0 %v2223
    %2888 = vmatpush.msra.mxu0 %v2215
    %2889 = vmatpush.msra.mxu0 %v2207
    %2890 = vmatpush.msra.mxu0 %v2199
    %2891 = vmatpush.msra.mxu0 %v2191
    %2892 = vmatpush.msra.mxu0 %v2183
    %2893 = vmatmul.f32.gmra.mxu0 %v2173
    %v2894 = vpop.f32.mrf.mxu0
    %v2895 = vadd.f32 0.0, %v2894
    %2896 = vmatmul.f32.gmra.mxu0 %v2177
    %v2897 = vpop.f32.mrf.mxu0
    %v2898 = vadd.f32 0.0, %v2897
    %2899 = vdwg.mxu0
    %2900 = vmatpush.msra.mxu0 %v2431
    %2901 = vmatpush.msra.mxu0 %v2423
    %2902 = vmatpush.msra.mxu0 %v2415
    %2903 = vmatpush.msra.mxu0 %v2407
    %2904 = vmatpush.msra.mxu0 %v2399
    %2905 = vmatpush.msra.mxu0 %v2391
    %2906 = vmatpush.msra.mxu0 %v2383
    %2907 = vmatpush.msra.mxu0 %v2375
    %2908 = vmatpush.msra.mxu0 %v2367
    %2909 = vmatpush.msra.mxu0 %v2359
    %2910 = vmatpush.msra.mxu0 %v2351
    %2911 = vmatpush.msra.mxu0 %v2343
    %2912 = vmatpush.msra.mxu0 %v2335
    %2913 = vmatpush.msra.mxu0 %v2327
    %2914 = vmatpush.msra.mxu0 %v2319
    %2915 = vmatpush.msra.mxu0 %v2311
    %2916 = vmatmul.f32.gmra.mxu0 %v2174
    %v2917 = vpop.f32.mrf.mxu0
    %v2918 = vadd.f32 %v2895, %v2917
    %2919 = vmatmul.f32.gmra.mxu0 %v2178
    %v2920 = vpop.f32.mrf.mxu0
    %v2921 = vadd.f32 %v2898, %v2920
    %2922 = vdwg.mxu0
    %2923 = vmatpush.msra.mxu0 %v2559
    %2924 = vmatpush.msra.mxu0 %v2551
    %2925 = vmatpush.msra.mxu0 %v2543
    %2926 = vmatpush.msra.mxu0 %v2535
    %2927 = vmatpush.msra.mxu0 %v2527
    %2928 = vmatpush.msra.mxu0 %v2519
    %2929 = vmatpush.msra.mxu0 %v2511
    %2930 = vmatpush.msra.mxu0 %v2503
    %2931 = vmatpush.msra.mxu0 %v2495
    %2932 = vmatpush.msra.mxu0 %v2487
    %2933 = vmatpush.msra.mxu0 %v2479
    %2934 = vmatpush.msra.mxu0 %v2471
    %2935 = vmatpush.msra.mxu0 %v2463
    %2936 = vmatpush.msra.mxu0 %v2455
    %2937 = vmatpush.msra.mxu0 %v2447
    %2938 = vmatpush.msra.mxu0 %v2439
    %2939 = vmatmul.f32.gmra.mxu0 %v2175
    %v2940 = vpop.f32.mrf.mxu0
    %v2941 = vadd.f32 %v2918, %v2940
    %2942 = vmatmul.f32.gmra.mxu0 %v2179
    %v2943 = vpop.f32.mrf.mxu0
    %v2944 = vadd.f32 %v2921, %v2943
    %2945 = vdwg.mxu0
    %2946 = vmatpush.msra.mxu0 %v2687
    %2947 = vmatpush.msra.mxu0 %v2679
    %2948 = vmatpush.msra.mxu0 %v2671
    %2949 = vmatpush.msra.mxu0 %v2663
    %2950 = vmatpush.msra.mxu0 %v2655
    %2951 = vmatpush.msra.mxu0 %v2647
    %2952 = vmatpush.msra.mxu0 %v2639
    %2953 = vmatpush.msra.mxu0 %v2631
    %2954 = vmatpush.msra.mxu0 %v2623
    %2955 = vmatpush.msra.mxu0 %v2615
    %2956 = vmatpush.msra.mxu0 %v2607
    %2957 = vmatpush.msra.mxu0 %v2599
    %2958 = vmatpush.msra.mxu0 %v2591
    %2959 = vmatpush.msra.mxu0 %v2583
    %2960 = vmatpush.msra.mxu0 %v2575
    %2961 = vmatpush.msra.mxu0 %v2567
    %2962 = vmatmul.f32.gmra.mxu0 %v2176
    %v2963 = vpop.f32.mrf.mxu0
    %v2964 = vadd.f32 %v2941, %v2963
    %2965 = vmatmul.f32.gmra.mxu0 %v2180
    %v2966 = vpop.f32.mrf.mxu0
    %v2967 = vadd.f32 %v2944, %v2966
    %2968 = vdwg.mxu0
    %2969 = vmatpush.msra.mxu0 %v2304
    %2970 = vmatpush.msra.mxu0 %v2296
    %2971 = vmatpush.msra.mxu0 %v2288
    %2972 = vmatpush.msra.mxu0 %v2280
    %2973 = vmatpush.msra.mxu0 %v2272
    %2974 = vmatpush.msra.mxu0 %v2264
    %2975 = vmatpush.msra.mxu0 %v2256
    %2976 = vmatpush.msra.mxu0 %v2248
    %2977 = vmatpush.msra.mxu0 %v2240
    %2978 = vmatpush.msra.mxu0 %v2232
    %2979 = vmatpush.msra.mxu0 %v2224
    %2980 = vmatpush.msra.mxu0 %v2216
    %2981 = vmatpush.msra.mxu0 %v2208
    %2982 = vmatpush.msra.mxu0 %v2200
    %2983 = vmatpush.msra.mxu0 %v2192
    %2984 = vmatpush.msra.mxu0 %v2184
    %2985 = vmatmul.f32.gmra.mxu0 %v2173
    %v2986 = vpop.f32.mrf.mxu0
    %v2987 = vadd.f32 0.0, %v2986
    %2988 = vmatmul.f32.gmra.mxu0 %v2177
    %v2989 = vpop.f32.mrf.mxu0
    %v2990 = vadd.f32 0.0, %v2989
    %2991 = vdwg.mxu0
    %2992 = vmatpush.msra.mxu0 %v2432
    %2993 = vmatpush.msra.mxu0 %v2424
    %2994 = vmatpush.msra.mxu0 %v2416
    %2995 = vmatpush.msra.mxu0 %v2408
    %2996 = vmatpush.msra.mxu0 %v2400
    %2997 = vmatpush.msra.mxu0 %v2392
    %2998 = vmatpush.msra.mxu0 %v2384
    %2999 = vmatpush.msra.mxu0 %v2376
    %3000 = vmatpush.msra.mxu0 %v2368
    %3001 = vmatpush.msra.mxu0 %v2360
    %3002 = vmatpush.msra.mxu0 %v2352
    %3003 = vmatpush.msra.mxu0 %v2344
    %3004 = vmatpush.msra.mxu0 %v2336
    %3005 = vmatpush.msra.mxu0 %v2328
    %3006 = vmatpush.msra.mxu0 %v2320
    %3007 = vmatpush.msra.mxu0 %v2312
    %3008 = vmatmul.f32.gmra.mxu0 %v2174
    %v3009 = vpop.f32.mrf.mxu0
    %v3010 = vadd.f32 %v2987, %v3009
    %3011 = vmatmul.f32.gmra.mxu0 %v2178
    %v3012 = vpop.f32.mrf.mxu0
    %v3013 = vadd.f32 %v2990, %v3012
    %3014 = vdwg.mxu0
    %3015 = vmatpush.msra.mxu0 %v2560
    %3016 = vmatpush.msra.mxu0 %v2552
    %3017 = vmatpush.msra.mxu0 %v2544
    %3018 = vmatpush.msra.mxu0 %v2536
    %3019 = vmatpush.msra.mxu0 %v2528
    %3020 = vmatpush.msra.mxu0 %v2520
    %3021 = vmatpush.msra.mxu0 %v2512
    %3022 = vmatpush.msra.mxu0 %v2504
    %3023 = vmatpush.msra.mxu0 %v2496
    %3024 = vmatpush.msra.mxu0 %v2488
    %3025 = vmatpush.msra.mxu0 %v2480
    %3026 = vmatpush.msra.mxu0 %v2472
    %3027 = vmatpush.msra.mxu0 %v2464
    %3028 = vmatpush.msra.mxu0 %v2456
    %3029 = vmatpush.msra.mxu0 %v2448
    %3030 = vmatpush.msra.mxu0 %v2440
    %3031 = vmatmul.f32.gmra.mxu0 %v2175
    %v3032 = vpop.f32.mrf.mxu0
    %v3033 = vadd.f32 %v3010, %v3032
    %3034 = vmatmul.f32.gmra.mxu0 %v2179
    %v3035 = vpop.f32.mrf.mxu0
    %v3036 = vadd.f32 %v3013, %v3035
    %3037 = vdwg.mxu0
    %3038 = vmatpush.msra.mxu0 %v2688
    %3039 = vmatpush.msra.mxu0 %v2680
    %3040 = vmatpush.msra.mxu0 %v2672
    %3041 = vmatpush.msra.mxu0 %v2664
    %3042 = vmatpush.msra.mxu0 %v2656
    %3043 = vmatpush.msra.mxu0 %v2648
    %3044 = vmatpush.msra.mxu0 %v2640
    %3045 = vmatpush.msra.mxu0 %v2632
    %3046 = vmatpush.msra.mxu0 %v2624
    %3047 = vmatpush.msra.mxu0 %v2616
    %3048 = vmatpush.msra.mxu0 %v2608
    %3049 = vmatpush.msra.mxu0 %v2600
    %3050 = vmatpush.msra.mxu0 %v2592
    %3051 = vmatpush.msra.mxu0 %v2584
    %3052 = vmatpush.msra.mxu0 %v2576
    %3053 = vmatpush.msra.mxu0 %v2568
    %3054 = vmatmul.f32.gmra.mxu0 %v2176
    %v3055 = vpop.f32.mrf.mxu0
    %v3056 = vadd.f32 %v3033, %v3055
    %3057 = vmatmul.f32.gmra.mxu0 %v2180
    %v3058 = vpop.f32.mrf.mxu0
    %v3059 = vadd.f32 %v3036, %v3058
    %3060 = vdwg.mxu0
    %3061 = vmatpush.msra.mxu0 %v2305
    %3062 = vmatpush.msra.mxu0 %v2297
    %3063 = vmatpush.msra.mxu0 %v2289
    %3064 = vmatpush.msra.mxu0 %v2281
    %3065 = vmatpush.msra.mxu0 %v2273
    %3066 = vmatpush.msra.mxu0 %v2265
    %3067 = vmatpush.msra.mxu0 %v2257
    %3068 = vmatpush.msra.mxu0 %v2249
    %3069 = vmatpush.msra.mxu0 %v2241
    %3070 = vmatpush.msra.mxu0 %v2233
    %3071 = vmatpush.msra.mxu0 %v2225
    %3072 = vmatpush.msra.mxu0 %v2217
    %3073 = vmatpush.msra.mxu0 %v2209
    %3074 = vmatpush.msra.mxu0 %v2201
    %3075 = vmatpush.msra.mxu0 %v2193
    %3076 = vmatpush.msra.mxu0 %v2185
    %3077 = vmatmul.f32.gmra.mxu0 %v2173
    %v3078 = vpop.f32.mrf.mxu0
    %v3079 = vadd.f32 0.0, %v3078
    %3080 = vmatmul.f32.gmra.mxu0 %v2177
    %v3081 = vpop.f32.mrf.mxu0
    %v3082 = vadd.f32 0.0, %v3081
    %3083 = vdwg.mxu0
    %3084 = vmatpush.msra.mxu0 %v2433
    %3085 = vmatpush.msra.mxu0 %v2425
    %3086 = vmatpush.msra.mxu0 %v2417
    %3087 = vmatpush.msra.mxu0 %v2409
    %3088 = vmatpush.msra.mxu0 %v2401
    %3089 = vmatpush.msra.mxu0 %v2393
    %3090 = vmatpush.msra.mxu0 %v2385
    %3091 = vmatpush.msra.mxu0 %v2377
    %3092 = vmatpush.msra.mxu0 %v2369
    %3093 = vmatpush.msra.mxu0 %v2361
    %3094 = vmatpush.msra.mxu0 %v2353
    %3095 = vmatpush.msra.mxu0 %v2345
    %3096 = vmatpush.msra.mxu0 %v2337
    %3097 = vmatpush.msra.mxu0 %v2329
    %3098 = vmatpush.msra.mxu0 %v2321
    %3099 = vmatpush.msra.mxu0 %v2313
    %3100 = vmatmul.f32.gmra.mxu0 %v2174
    %v3101 = vpop.f32.mrf.mxu0
    %v3102 = vadd.f32 %v3079, %v3101
    %3103 = vmatmul.f32.gmra.mxu0 %v2178
    %v3104 = vpop.f32.mrf.mxu0
    %v3105 = vadd.f32 %v3082, %v3104
    %3106 = vdwg.mxu0
    %3107 = vmatpush.msra.mxu0 %v2561
    %3108 = vmatpush.msra.mxu0 %v2553
    %3109 = vmatpush.msra.mxu0 %v2545
    %3110 = vmatpush.msra.mxu0 %v2537
    %3111 = vmatpush.msra.mxu0 %v2529
    %3112 = vmatpush.msra.mxu0 %v2521
    %3113 = vmatpush.msra.mxu0 %v2513
    %3114 = vmatpush.msra.mxu0 %v2505
    %3115 = vmatpush.msra.mxu0 %v2497
    %3116 = vmatpush.msra.mxu0 %v2489
    %3117 = vmatpush.msra.mxu0 %v2481
    %3118 = vmatpush.msra.mxu0 %v2473
    %3119 = vmatpush.msra.mxu0 %v2465
    %3120 = vmatpush.msra.mxu0 %v2457
    %3121 = vmatpush.msra.mxu0 %v2449
    %3122 = vmatpush.msra.mxu0 %v2441
    %3123 = vmatmul.f32.gmra.mxu0 %v2175
    %v3124 = vpop.f32.mrf.mxu0
    %v3125 = vadd.f32 %v3102, %v3124
    %3126 = vmatmul.f32.gmra.mxu0 %v2179
    %v3127 = vpop.f32.mrf.mxu0
    %v3128 = vadd.f32 %v3105, %v3127
    %3129 = vdwg.mxu0
    %3130 = vmatpush.msra.mxu0 %v2689
    %3131 = vmatpush.msra.mxu0 %v2681
    %3132 = vmatpush.msra.mxu0 %v2673
    %3133 = vmatpush.msra.mxu0 %v2665
    %3134 = vmatpush.msra.mxu0 %v2657
    %3135 = vmatpush.msra.mxu0 %v2649
    %3136 = vmatpush.msra.mxu0 %v2641
    %3137 = vmatpush.msra.mxu0 %v2633
    %3138 = vmatpush.msra.mxu0 %v2625
    %3139 = vmatpush.msra.mxu0 %v2617
    %3140 = vmatpush.msra.mxu0 %v2609
    %3141 = vmatpush.msra.mxu0 %v2601
    %3142 = vmatpush.msra.mxu0 %v2593
    %3143 = vmatpush.msra.mxu0 %v2585
    %3144 = vmatpush.msra.mxu0 %v2577
    %3145 = vmatpush.msra.mxu0 %v2569
    %3146 = vmatmul.f32.gmra.mxu0 %v2176
    %v3147 = vpop.f32.mrf.mxu0
    %v3148 = vadd.f32 %v3125, %v3147
    %3149 = vmatmul.f32.gmra.mxu0 %v2180
    %v3150 = vpop.f32.mrf.mxu0
    %v3151 = vadd.f32 %v3128, %v3150
    %3152 = vdwg.mxu0
    %3153 = vmatpush.msra.mxu0 %v2306
    %3154 = vmatpush.msra.mxu0 %v2298
    %3155 = vmatpush.msra.mxu0 %v2290
    %3156 = vmatpush.msra.mxu0 %v2282
    %3157 = vmatpush.msra.mxu0 %v2274
    %3158 = vmatpush.msra.mxu0 %v2266
    %3159 = vmatpush.msra.mxu0 %v2258
    %3160 = vmatpush.msra.mxu0 %v2250
    %3161 = vmatpush.msra.mxu0 %v2242
    %3162 = vmatpush.msra.mxu0 %v2234
    %3163 = vmatpush.msra.mxu0 %v2226
    %3164 = vmatpush.msra.mxu0 %v2218
    %3165 = vmatpush.msra.mxu0 %v2210
    %3166 = vmatpush.msra.mxu0 %v2202
    %3167 = vmatpush.msra.mxu0 %v2194
    %3168 = vmatpush.msra.mxu0 %v2186
    %3169 = vmatmul.f32.gmra.mxu0 %v2173
    %v3170 = vpop.f32.mrf.mxu0
    %v3171 = vadd.f32 0.0, %v3170
    %3172 = vmatmul.f32.gmra.mxu0 %v2177
    %v3173 = vpop.f32.mrf.mxu0
    %v3174 = vadd.f32 0.0, %v3173
    %3175 = vdwg.mxu0
    %3176 = vmatpush.msra.mxu0 %v2434
    %3177 = vmatpush.msra.mxu0 %v2426
    %3178 = vmatpush.msra.mxu0 %v2418
    %3179 = vmatpush.msra.mxu0 %v2410
    %3180 = vmatpush.msra.mxu0 %v2402
    %3181 = vmatpush.msra.mxu0 %v2394
    %3182 = vmatpush.msra.mxu0 %v2386
    %3183 = vmatpush.msra.mxu0 %v2378
    %3184 = vmatpush.msra.mxu0 %v2370
    %3185 = vmatpush.msra.mxu0 %v2362
    %3186 = vmatpush.msra.mxu0 %v2354
    %3187 = vmatpush.msra.mxu0 %v2346
    %3188 = vmatpush.msra.mxu0 %v2338
    %3189 = vmatpush.msra.mxu0 %v2330
    %3190 = vmatpush.msra.mxu0 %v2322
    %3191 = vmatpush.msra.mxu0 %v2314
    %3192 = vmatmul.f32.gmra.mxu0 %v2174
    %v3193 = vpop.f32.mrf.mxu0
    %v3194 = vadd.f32 %v3171, %v3193
    %3195 = vmatmul.f32.gmra.mxu0 %v2178
    %v3196 = vpop.f32.mrf.mxu0
    %v3197 = vadd.f32 %v3174, %v3196
    %3198 = vdwg.mxu0
    %3199 = vmatpush.msra.mxu0 %v2562
    %3200 = vmatpush.msra.mxu0 %v2554
    %3201 = vmatpush.msra.mxu0 %v2546
    %3202 = vmatpush.msra.mxu0 %v2538
    %3203 = vmatpush.msra.mxu0 %v2530
    %3204 = vmatpush.msra.mxu0 %v2522
    %3205 = vmatpush.msra.mxu0 %v2514
    %3206 = vmatpush.msra.mxu0 %v2506
    %3207 = vmatpush.msra.mxu0 %v2498
    %3208 = vmatpush.msra.mxu0 %v2490
    %3209 = vmatpush.msra.mxu0 %v2482
    %3210 = vmatpush.msra.mxu0 %v2474
    %3211 = vmatpush.msra.mxu0 %v2466
    %3212 = vmatpush.msra.mxu0 %v2458
    %3213 = vmatpush.msra.mxu0 %v2450
    %3214 = vmatpush.msra.mxu0 %v2442
    %3215 = vmatmul.f32.gmra.mxu0 %v2175
    %v3216 = vpop.f32.mrf.mxu0
    %v3217 = vadd.f32 %v3194, %v3216
    %3218 = vmatmul.f32.gmra.mxu0 %v2179
    %v3219 = vpop.f32.mrf.mxu0
    %v3220 = vadd.f32 %v3197, %v3219
    %3221 = vdwg.mxu0
    %3222 = vmatpush.msra.mxu0 %v2690
    %3223 = vmatpush.msra.mxu0 %v2682
    %3224 = vmatpush.msra.mxu0 %v2674
    %3225 = vmatpush.msra.mxu0 %v2666
    %3226 = vmatpush.msra.mxu0 %v2658
    %3227 = vmatpush.msra.mxu0 %v2650
    %3228 = vmatpush.msra.mxu0 %v2642
    %3229 = vmatpush.msra.mxu0 %v2634
    %3230 = vmatpush.msra.mxu0 %v2626
    %3231 = vmatpush.msra.mxu0 %v2618
    %3232 = vmatpush.msra.mxu0 %v2610
    %3233 = vmatpush.msra.mxu0 %v2602
    %3234 = vmatpush.msra.mxu0 %v2594
    %3235 = vmatpush.msra.mxu0 %v2586
    %3236 = vmatpush.msra.mxu0 %v2578
    %3237 = vmatpush.msra.mxu0 %v2570
    %3238 = vmatmul.f32.gmra.mxu0 %v2176
    %v3239 = vpop.f32.mrf.mxu0
    %v3240 = vadd.f32 %v3217, %v3239
    %3241 = vmatmul.f32.gmra.mxu0 %v2180
    %v3242 = vpop.f32.mrf.mxu0
    %v3243 = vadd.f32 %v3220, %v3242
    %3244 = vdwg.mxu0
    %3245 = vmatpush.msra.mxu0 %v2307
    %3246 = vmatpush.msra.mxu0 %v2299
    %3247 = vmatpush.msra.mxu0 %v2291
    %3248 = vmatpush.msra.mxu0 %v2283
    %3249 = vmatpush.msra.mxu0 %v2275
    %3250 = vmatpush.msra.mxu0 %v2267
    %3251 = vmatpush.msra.mxu0 %v2259
    %3252 = vmatpush.msra.mxu0 %v2251
    %3253 = vmatpush.msra.mxu0 %v2243
    %3254 = vmatpush.msra.mxu0 %v2235
    %3255 = vmatpush.msra.mxu0 %v2227
    %3256 = vmatpush.msra.mxu0 %v2219
    %3257 = vmatpush.msra.mxu0 %v2211
    %3258 = vmatpush.msra.mxu0 %v2203
    %3259 = vmatpush.msra.mxu0 %v2195
    %3260 = vmatpush.msra.mxu0 %v2187
    %3261 = vmatmul.f32.gmra.mxu0 %v2173
    %v3262 = vpop.f32.mrf.mxu0
    %v3263 = vadd.f32 0.0, %v3262
    %3264 = vmatmul.f32.gmra.mxu0 %v2177
    %v3265 = vpop.f32.mrf.mxu0
    %v3266 = vadd.f32 0.0, %v3265
    %3267 = vdwg.mxu0
    %3268 = vmatpush.msra.mxu0 %v2435
    %3269 = vmatpush.msra.mxu0 %v2427
    %3270 = vmatpush.msra.mxu0 %v2419
    %3271 = vmatpush.msra.mxu0 %v2411
    %3272 = vmatpush.msra.mxu0 %v2403
    %3273 = vmatpush.msra.mxu0 %v2395
    %3274 = vmatpush.msra.mxu0 %v2387
    %3275 = vmatpush.msra.mxu0 %v2379
    %3276 = vmatpush.msra.mxu0 %v2371
    %3277 = vmatpush.msra.mxu0 %v2363
    %3278 = vmatpush.msra.mxu0 %v2355
    %3279 = vmatpush.msra.mxu0 %v2347
    %3280 = vmatpush.msra.mxu0 %v2339
    %3281 = vmatpush.msra.mxu0 %v2331
    %3282 = vmatpush.msra.mxu0 %v2323
    %3283 = vmatpush.msra.mxu0 %v2315
    %3284 = vmatmul.f32.gmra.mxu0 %v2174
    %v3285 = vpop.f32.mrf.mxu0
    %v3286 = vadd.f32 %v3263, %v3285
    %3287 = vmatmul.f32.gmra.mxu0 %v2178
    %v3288 = vpop.f32.mrf.mxu0
    %v3289 = vadd.f32 %v3266, %v3288
    %3290 = vdwg.mxu0
    %3291 = vmatpush.msra.mxu0 %v2563
    %3292 = vmatpush.msra.mxu0 %v2555
    %3293 = vmatpush.msra.mxu0 %v2547
    %3294 = vmatpush.msra.mxu0 %v2539
    %3295 = vmatpush.msra.mxu0 %v2531
    %3296 = vmatpush.msra.mxu0 %v2523
    %3297 = vmatpush.msra.mxu0 %v2515
    %3298 = vmatpush.msra.mxu0 %v2507
    %3299 = vmatpush.msra.mxu0 %v2499
    %3300 = vmatpush.msra.mxu0 %v2491
    %3301 = vmatpush.msra.mxu0 %v2483
    %3302 = vmatpush.msra.mxu0 %v2475
    %3303 = vmatpush.msra.mxu0 %v2467
    %3304 = vmatpush.msra.mxu0 %v2459
    %3305 = vmatpush.msra.mxu0 %v2451
    %3306 = vmatpush.msra.mxu0 %v2443
    %3307 = vmatmul.f32.gmra.mxu0 %v2175
    %v3308 = vpop.f32.mrf.mxu0
    %v3309 = vadd.f32 %v3286, %v3308
    %3310 = vmatmul.f32.gmra.mxu0 %v2179
    %v3311 = vpop.f32.mrf.mxu0
    %v3312 = vadd.f32 %v3289, %v3311
    %3313 = vdwg.mxu0
    %3314 = vmatpush.msra.mxu0 %v2691
    %3315 = vmatpush.msra.mxu0 %v2683
    %3316 = vmatpush.msra.mxu0 %v2675
    %3317 = vmatpush.msra.mxu0 %v2667
    %3318 = vmatpush.msra.mxu0 %v2659
    %3319 = vmatpush.msra.mxu0 %v2651
    %3320 = vmatpush.msra.mxu0 %v2643
    %3321 = vmatpush.msra.mxu0 %v2635
    %3322 = vmatpush.msra.mxu0 %v2627
    %3323 = vmatpush.msra.mxu0 %v2619
    %3324 = vmatpush.msra.mxu0 %v2611
    %3325 = vmatpush.msra.mxu0 %v2603
    %3326 = vmatpush.msra.mxu0 %v2595
    %3327 = vmatpush.msra.mxu0 %v2587
    %3328 = vmatpush.msra.mxu0 %v2579
    %3329 = vmatpush.msra.mxu0 %v2571
    %3330 = vmatmul.f32.gmra.mxu0 %v2176
    %v3331 = vpop.f32.mrf.mxu0
    %v3332 = vadd.f32 %v3309, %v3331
    %3333 = vmatmul.f32.gmra.mxu0 %v2180
    %v3334 = vpop.f32.mrf.mxu0
    %v3335 = vadd.f32 %v3312, %v3334
    %3336 = vdwg.mxu0
    %3337 = vmatpush.msra.mxu0 %v2308
    %3338 = vmatpush.msra.mxu0 %v2300
    %3339 = vmatpush.msra.mxu0 %v2292
    %3340 = vmatpush.msra.mxu0 %v2284
    %3341 = vmatpush.msra.mxu0 %v2276
    %3342 = vmatpush.msra.mxu0 %v2268
    %3343 = vmatpush.msra.mxu0 %v2260
    %3344 = vmatpush.msra.mxu0 %v2252
    %3345 = vmatpush.msra.mxu0 %v2244
    %3346 = vmatpush.msra.mxu0 %v2236
    %3347 = vmatpush.msra.mxu0 %v2228
    %3348 = vmatpush.msra.mxu0 %v2220
    %3349 = vmatpush.msra.mxu0 %v2212
    %3350 = vmatpush.msra.mxu0 %v2204
    %3351 = vmatpush.msra.mxu0 %v2196
    %3352 = vmatpush.msra.mxu0 %v2188
    %3353 = vmatmul.f32.gmra.mxu0 %v2173
    %v3354 = vpop.f32.mrf.mxu0
    %v3355 = vadd.f32 0.0, %v3354
    %3356 = vmatmul.f32.gmra.mxu0 %v2177
    %v3357 = vpop.f32.mrf.mxu0
    %v3358 = vadd.f32 0.0, %v3357
    %3359 = vdwg.mxu0
    %3360 = vmatpush.msra.mxu0 %v2436
    %3361 = vmatpush.msra.mxu0 %v2428
    %3362 = vmatpush.msra.mxu0 %v2420
    %3363 = vmatpush.msra.mxu0 %v2412
    %3364 = vmatpush.msra.mxu0 %v2404
    %3365 = vmatpush.msra.mxu0 %v2396
    %3366 = vmatpush.msra.mxu0 %v2388
    %3367 = vmatpush.msra.mxu0 %v2380
    %3368 = vmatpush.msra.mxu0 %v2372
    %3369 = vmatpush.msra.mxu0 %v2364
    %3370 = vmatpush.msra.mxu0 %v2356
    %3371 = vmatpush.msra.mxu0 %v2348
    %3372 = vmatpush.msra.mxu0 %v2340
    %3373 = vmatpush.msra.mxu0 %v2332
    %3374 = vmatpush.msra.mxu0 %v2324
    %3375 = vmatpush.msra.mxu0 %v2316
    %3376 = vmatmul.f32.gmra.mxu0 %v2174
    %v3377 = vpop.f32.mrf.mxu0
    %v3378 = vadd.f32 %v3355, %v3377
    %3379 = vmatmul.f32.gmra.mxu0 %v2178
    %v3380 = vpop.f32.mrf.mxu0
    %v3381 = vadd.f32 %v3358, %v3380
    %3382 = vdwg.mxu0
    %3383 = vmatpush.msra.mxu0 %v2564
    %3384 = vmatpush.msra.mxu0 %v2556
    %3385 = vmatpush.msra.mxu0 %v2548
    %3386 = vmatpush.msra.mxu0 %v2540
    %3387 = vmatpush.msra.mxu0 %v2532
    %3388 = vmatpush.msra.mxu0 %v2524
    %3389 = vmatpush.msra.mxu0 %v2516
    %3390 = vmatpush.msra.mxu0 %v2508
    %3391 = vmatpush.msra.mxu0 %v2500
    %3392 = vmatpush.msra.mxu0 %v2492
    %3393 = vmatpush.msra.mxu0 %v2484
    %3394 = vmatpush.msra.mxu0 %v2476
    %3395 = vmatpush.msra.mxu0 %v2468
    %3396 = vmatpush.msra.mxu0 %v2460
    %3397 = vmatpush.msra.mxu0 %v2452
    %3398 = vmatpush.msra.mxu0 %v2444
    %3399 = vmatmul.f32.gmra.mxu0 %v2175
    %v3400 = vpop.f32.mrf.mxu0
    %v3401 = vadd.f32 %v3378, %v3400
    %3402 = vmatmul.f32.gmra.mxu0 %v2179
    %v3403 = vpop.f32.mrf.mxu0
    %v3404 = vadd.f32 %v3381, %v3403
    %3405 = vdwg.mxu0
    %3406 = vmatpush.msra.mxu0 %v2692
    %3407 = vmatpush.msra.mxu0 %v2684
    %3408 = vmatpush.msra.mxu0 %v2676
    %3409 = vmatpush.msra.mxu0 %v2668
    %3410 = vmatpush.msra.mxu0 %v2660
    %3411 = vmatpush.msra.mxu0 %v2652
    %3412 = vmatpush.msra.mxu0 %v2644
    %3413 = vmatpush.msra.mxu0 %v2636
    %3414 = vmatpush.msra.mxu0 %v2628
    %3415 = vmatpush.msra.mxu0 %v2620
    %3416 = vmatpush.msra.mxu0 %v2612
    %3417 = vmatpush.msra.mxu0 %v2604
    %3418 = vmatpush.msra.mxu0 %v2596
    %3419 = vmatpush.msra.mxu0 %v2588
    %3420 = vmatpush.msra.mxu0 %v2580
    %3421 = vmatpush.msra.mxu0 %v2572
    %3422 = vmatmul.f32.gmra.mxu0 %v2176
    %v3423 = vpop.f32.mrf.mxu0
    %v3424 = vadd.f32 %v3401, %v3423
    %3425 = vmatmul.f32.gmra.mxu0 %v2180
    %v3426 = vpop.f32.mrf.mxu0
    %v3427 = vadd.f32 %v3404, %v3426
    %3428 = vdwg.mxu0
    %3429 = vst [vmem:[%s12] sm:$0xff] %v2780
    %3430 = vst [vmem:[%s12 + $0x8] sm:$0xff] %v2872
    %3431 = vst [vmem:[%s12 + $0x10] sm:$0xff] %v2964
    %3432 = vst [vmem:[%s12 + $0x18] sm:$0xff] %v3056
    %3433 = vst [vmem:[%s12 + $0x20] sm:$0xff] %v3148
    %3434 = vst [vmem:[%s12 + $0x28] sm:$0xff] %v3240
    %3435 = vst [vmem:[%s12 + $0x30] sm:$0xff] %v3332
    %3436 = vst [vmem:[%s12 + $0x38] sm:$0xff] %v3424
    %3437 = vst [vmem:[%s12 + $0x40] sm:$0xff] %v2783
    %3438 = vst [vmem:[%s12 + $0x48] sm:$0xff] %v2875
    %3439 = vst [vmem:[%s12 + $0x50] sm:$0xff] %v2967
    %3440 = vst [vmem:[%s12 + $0x58] sm:$0xff] %v3059
    %3441 = vst [vmem:[%s12 + $0x60] sm:$0xff] %v3151
    %3442 = vst [vmem:[%s12 + $0x68] sm:$0xff] %v3243
    %3443 = vst [vmem:[%s12 + $0x70] sm:$0xff] %v3335
    %3444 = vst [vmem:[%s12 + $0x78] sm:$0xff] %v3427
    // Predicated region
    $region70: #{hyperpriori_decoder_forward.1} parent=1 // pred_check
      _
    $region71: #{hyperpriori_decoder_forward.1} parent=1 // pred_check_branch
      %3446 = sbr.rel (0) target = $region73
    $region72: #{hyperpriori_decoder_forward.1} parent=1 // pred_region
      _
    $region73: #{hyperpriori_decoder_forward.1} parent=1 // pred_fallthru
      _
    // Predicated region
    $region74: #{hyperpriori_decoder_forward.1} parent=1 // pred_check
      _
    $region75: #{hyperpriori_decoder_forward.1} parent=1 // pred_check_branch
      %3448 = sbr.rel (0) target = $region77
    $region76: #{hyperpriori_decoder_forward.1} parent=1 // pred_region
      _
    $region77: #{hyperpriori_decoder_forward.1} parent=1 // pred_fallthru
      _
    %3449 = vsyncpa [#allocation4], 1
    %3450 = vsyncpa [#allocation6], 1
    %3451 = vsyncpa [#allocation9], 1

</llo_original>
